<compile_context>
chip_gen: v7x
topology: tpu7x:2x2x1
jax: 0.10.0
libtpu: 0.0.40
codegen_flags: <defaults>
</compile_context>

<pallas_src>
import functools

import jax
import jax.numpy as jnp
from jax.experimental import pallas as pl
from jax.experimental.pallas import tpu as pltpu


def _dwconv_bn_kernel(x_ref, w_ref, g_ref, b_ref, o_ref, *, eps):
    """One channel block: fused depthwise 3x3 conv + training-mode batchnorm.

    x_ref: (N, H+2, W+2, Cb)  spatially pre-padded NHWC input block
    w_ref: (3, 3, Cb)         per-channel 3x3 depthwise weights
    g_ref: (1, Cb)            BN gamma
    b_ref: (1, Cb)            BN beta
    o_ref: (N, H, W, Cb)      output block (also used as the f32 conv accumulator)
    """
    n, ho, wo, cb = o_ref.shape
    f32 = jnp.float32

    # Hoist the 9 per-channel weight taps once (lane-aligned (1,1,Cb) vectors).
    wt = [[w_ref[kh, kw, :].astype(f32).reshape(1, 1, cb) for kw in range(3)]
          for kh in range(3)]

    # Per-(n, w, c) running sums for the BN statistics (reduced over sublanes once
    # at the end instead of per row).
    s1 = jnp.zeros((n, wo, cb), f32)
    s2 = jnp.zeros((n, wo, cb), f32)

    # Pass 1: depthwise 3x3 conv, full 9-tap sum per output row in registers,
    # exactly one store per row (no read-modify-write on o_ref, no scratch).
    for oh in range(ho):
        acc = None
        for kh in range(3):
            rowp = x_ref[:, oh + kh, :, :].astype(f32)      # (n, wo+2, cb)
            t = (rowp[:, 0:wo, :] * wt[kh][0]
                 + rowp[:, 1:wo + 1, :] * wt[kh][1]
                 + rowp[:, 2:wo + 2, :] * wt[kh][2])
            acc = t if acc is None else acc + t
        o_ref[:, oh, :, :] = acc.astype(o_ref.dtype)
        s1 = s1 + acc
        s2 = s2 + acc * acc

    # BatchNorm (training): biased batch stats over (N, H, W), folded into a single
    # per-channel scale/shift FMA.  One-pass E[x^2]-mean^2 variance (clamped at 0).
    inv_cnt = 1.0 / float(n * ho * wo)
    mean = jnp.sum(s1, axis=(0, 1), keepdims=True) * inv_cnt      # (1, 1, Cb)
    ex2 = jnp.sum(s2, axis=(0, 1), keepdims=True) * inv_cnt
    var = jnp.maximum(ex2 - mean * mean, 0.0)
    scale = g_ref[...].astype(f32).reshape(1, 1, cb) * jax.lax.rsqrt(var + eps)
    shift = b_ref[...].astype(f32).reshape(1, 1, cb) - mean * scale

    # Pass 2: normalize in place, one H-row at a time (bounds vreg live ranges).
    for oh in range(ho):
        row = o_ref[:, oh, :, :].astype(f32)
        o_ref[:, oh, :, :] = (row * scale + shift).astype(o_ref.dtype)


def dwconv3x3_bn(x_nchw, weight_oihw, gamma, beta, eps=1e-3, c_blk=384):
    """x_nchw: (N, C, H, W); weight_oihw: (C, 1, 3, 3) depthwise; gamma/beta: (C,)."""
    N, C, H, W = x_nchw.shape

    x = jnp.transpose(x_nchw, (0, 2, 3, 1))                  # NHWC
    wts = jnp.transpose(weight_oihw[:, 0, :, :], (1, 2, 0))  # (3, 3, C)

    # Channel block must be a multiple of 128 (lane-dense); pad C up as needed.
    c_blk = min(c_blk, ((C + 127) // 128) * 128)
    Cp = ((C + c_blk - 1) // c_blk) * c_blk
    pad_c = Cp - C

    # Single fused pad: the 3x3 spatial halo and the channel pad in one HBM pass.
    x = jnp.pad(x, ((0, 0), (1, 1), (1, 1), (0, pad_c)))     # (N, H+2, W+2, Cp)
    if pad_c:
        wts = jnp.pad(wts, ((0, 0), (0, 0), (0, pad_c)))
        gamma = jnp.pad(gamma, (0, pad_c), constant_values=1.0)
        beta = jnp.pad(beta, (0, pad_c))
    g = gamma.reshape(1, Cp).astype(jnp.float32)
    b = beta.reshape(1, Cp).astype(jnp.float32)

    kernel = functools.partial(_dwconv_bn_kernel, eps=float(eps))
    out_nhwc = pl.pallas_call(
        kernel,
        out_shape=jax.ShapeDtypeStruct((N, H, W, Cp), x.dtype),
        grid=(Cp // c_blk,),
        in_specs=[
            pl.BlockSpec((N, H + 2, W + 2, c_blk), lambda i: (0, 0, 0, i)),
            pl.BlockSpec((3, 3, c_blk), lambda i: (0, 0, i)),
            pl.BlockSpec((1, c_blk), lambda i: (0, i)),
            pl.BlockSpec((1, c_blk), lambda i: (0, i)),
        ],
        out_specs=pl.BlockSpec((N, H, W, c_blk), lambda i: (0, 0, 0, i)),
        compiler_params=pltpu.CompilerParams(
            dimension_semantics=("parallel",)),
    )(x, wts, g, b)

    out_nhwc = out_nhwc[..., :C]
    return jnp.transpose(out_nhwc, (0, 3, 1, 2))             # back to NCHW


def _reference(x_nchw, weight_oihw, gamma, beta, eps=1e-3):
    """Pure-jnp reference (same math, no Pallas)."""
    N, C, H, W = x_nchw.shape
    x = jnp.transpose(x_nchw, (0, 2, 3, 1)).astype(jnp.float32)
    xp = jnp.pad(x, ((0, 0), (1, 1), (1, 1), (0, 0)))
    wts = jnp.transpose(weight_oihw[:, 0, :, :], (1, 2, 0)).astype(jnp.float32)
    acc = jnp.zeros((N, H, W, C), jnp.float32)
    for kh in range(3):
        for kw in range(3):
            acc = acc + xp[:, kh:kh + H, kw:kw + W, :] * wts[kh, kw, :]
    mean = jnp.mean(acc, axis=(0, 1, 2), keepdims=True)
    var = jnp.mean((acc - mean) ** 2, axis=(0, 1, 2), keepdims=True)
    y = (acc - mean) * jax.lax.rsqrt(var + eps) * gamma + beta
    return jnp.transpose(y, (0, 3, 1, 2)).astype(x_nchw.dtype)


if __name__ == "__main__":
    # Exact shapes of the original module:
    # Conv2d(1056, 1056, 3x3, groups=1056, bias=False) + BatchNorm2d(1056, eps=1e-3).
    N, C, H, W = 1, 1056, 14, 14
    key = jax.random.PRNGKey(0)
    kx, kwt, kg, kb = jax.random.split(key, 4)

    x = jax.random.normal(kx, (N, C, H, W), dtype=jnp.float32)
    conv_weight = jax.random.normal(kwt, (C, 1, 3, 3), dtype=jnp.float32) * 0.1
    bn_gamma = 1.0 + 0.1 * jax.random.normal(kg, (C,), dtype=jnp.float32)
    bn_beta = 0.1 * jax.random.normal(kb, (C,), dtype=jnp.float32)

    out = dwconv3x3_bn(x, conv_weight, bn_gamma, bn_beta, eps=1e-3)
    out = jax.block_until_ready(out)

    ref = _reference(x, conv_weight, bn_gamma, bn_beta, eps=1e-3)
    assert out.shape == (N, C, H, W)
    max_err = float(jnp.max(jnp.abs(out - ref)))
    assert jnp.allclose(out, ref, rtol=2e-3, atol=2e-3), f"mismatch vs reference (max abs err {max_err})"

    print("KERNEL_OK")
</pallas_src>

<mosaic_0001>
module attributes {stable_mosaic.version = 11 : i64} {
  func.func @_dwconv_bn_kernel(%arg0: i32, %arg1: memref<1x16x16x384xf32, #tpu.memory_space<vmem>>, %arg2: memref<3x3x384xf32, #tpu.memory_space<vmem>>, %arg3: memref<1x384xf32, #tpu.memory_space<vmem>>, %arg4: memref<1x384xf32, #tpu.memory_space<vmem>>, %arg5: memref<1x14x14x384xf32, #tpu.memory_space<vmem>>) attributes {dimension_semantics = [#tpu.dimension_semantics<parallel>], iteration_bounds = array<i64: 3>, scalar_prefetch = 0 : i64, scratch_operands = 0 : i64, tpu.core_type = #tpu.core_type<tc>, window_params = [{transform_indices = @transform_0, window_bounds = array<i64: 1, 16, 16, 384>}, {transform_indices = @transform_1, window_bounds = array<i64: 3, 3, 384>}, {transform_indices = @transform_2, window_bounds = array<i64: 1, 384>}, {transform_indices = @transform_3, window_bounds = array<i64: 1, 384>}, {transform_indices = @transform_4, window_bounds = array<i64: 1, 14, 14, 384>}]} {
    %c0 = arith.constant 0 : index
    %c0_0 = arith.constant 0 : index
    %c0_1 = arith.constant 0 : index
    %0 = vector.load %arg2[%c0, %c0_0, %c0_1] : memref<3x3x384xf32, #tpu.memory_space<vmem>>, vector<1x1x384xf32>
    %1 = vector.shape_cast %0 : vector<1x1x384xf32> to vector<384xf32>
    %2 = vector.shape_cast %1 : vector<384xf32> to vector<1x1x384xf32>
    %c0_2 = arith.constant 0 : index
    %c1 = arith.constant 1 : index
    %c0_3 = arith.constant 0 : index
    %3 = vector.load %arg2[%c0_2, %c1, %c0_3] : memref<3x3x384xf32, #tpu.memory_space<vmem>>, vector<1x1x384xf32>
    %4 = vector.shape_cast %3 : vector<1x1x384xf32> to vector<384xf32>
    %5 = vector.shape_cast %4 : vector<384xf32> to vector<1x1x384xf32>
    %c0_4 = arith.constant 0 : index
    %c2 = arith.constant 2 : index
    %c0_5 = arith.constant 0 : index
    %6 = vector.load %arg2[%c0_4, %c2, %c0_5] : memref<3x3x384xf32, #tpu.memory_space<vmem>>, vector<1x1x384xf32>
    %7 = vector.shape_cast %6 : vector<1x1x384xf32> to vector<384xf32>
    %8 = vector.shape_cast %7 : vector<384xf32> to vector<1x1x384xf32>
    %c1_6 = arith.constant 1 : index
    %c0_7 = arith.constant 0 : index
    %c0_8 = arith.constant 0 : index
    %9 = vector.load %arg2[%c1_6, %c0_7, %c0_8] : memref<3x3x384xf32, #tpu.memory_space<vmem>>, vector<1x1x384xf32>
    %10 = vector.shape_cast %9 : vector<1x1x384xf32> to vector<384xf32>
    %11 = vector.shape_cast %10 : vector<384xf32> to vector<1x1x384xf32>
    %c1_9 = arith.constant 1 : index
    %c1_10 = arith.constant 1 : index
    %c0_11 = arith.constant 0 : index
    %12 = vector.load %arg2[%c1_9, %c1_10, %c0_11] : memref<3x3x384xf32, #tpu.memory_space<vmem>>, vector<1x1x384xf32>
    %13 = vector.shape_cast %12 : vector<1x1x384xf32> to vector<384xf32>
    %14 = vector.shape_cast %13 : vector<384xf32> to vector<1x1x384xf32>
    %c1_12 = arith.constant 1 : index
    %c2_13 = arith.constant 2 : index
    %c0_14 = arith.constant 0 : index
    %15 = vector.load %arg2[%c1_12, %c2_13, %c0_14] : memref<3x3x384xf32, #tpu.memory_space<vmem>>, vector<1x1x384xf32>
    %16 = vector.shape_cast %15 : vector<1x1x384xf32> to vector<384xf32>
    %17 = vector.shape_cast %16 : vector<384xf32> to vector<1x1x384xf32>
    %c2_15 = arith.constant 2 : index
    %c0_16 = arith.constant 0 : index
    %c0_17 = arith.constant 0 : index
    %18 = vector.load %arg2[%c2_15, %c0_16, %c0_17] : memref<3x3x384xf32, #tpu.memory_space<vmem>>, vector<1x1x384xf32>
    %19 = vector.shape_cast %18 : vector<1x1x384xf32> to vector<384xf32>
    %20 = vector.shape_cast %19 : vector<384xf32> to vector<1x1x384xf32>
    %c2_18 = arith.constant 2 : index
    %c1_19 = arith.constant 1 : index
    %c0_20 = arith.constant 0 : index
    %21 = vector.load %arg2[%c2_18, %c1_19, %c0_20] : memref<3x3x384xf32, #tpu.memory_space<vmem>>, vector<1x1x384xf32>
    %22 = vector.shape_cast %21 : vector<1x1x384xf32> to vector<384xf32>
    %23 = vector.shape_cast %22 : vector<384xf32> to vector<1x1x384xf32>
    %c2_21 = arith.constant 2 : index
    %c2_22 = arith.constant 2 : index
    %c0_23 = arith.constant 0 : index
    %24 = vector.load %arg2[%c2_21, %c2_22, %c0_23] : memref<3x3x384xf32, #tpu.memory_space<vmem>>, vector<1x1x384xf32>
    %25 = vector.shape_cast %24 : vector<1x1x384xf32> to vector<384xf32>
    %26 = vector.shape_cast %25 : vector<384xf32> to vector<1x1x384xf32>
    %cst = arith.constant 0.000000e+00 : f32
    %27 = vector.broadcast %cst : f32 to vector<1x14x384xf32>
    %cst_24 = arith.constant 0.000000e+00 : f32
    %28 = vector.broadcast %cst_24 : f32 to vector<1x14x384xf32>
    %c0_25 = arith.constant 0 : index
    %c0_26 = arith.constant 0 : index
    %c0_27 = arith.constant 0 : index
    %c0_28 = arith.constant 0 : index
    %29 = vector.load %arg1[%c0_25, %c0_26, %c0_27, %c0_28] : memref<1x16x16x384xf32, #tpu.memory_space<vmem>>, vector<1x1x16x384xf32>
    %30 = vector.shape_cast %29 : vector<1x1x16x384xf32> to vector<1x16x384xf32>
    %31 = vector.extract_strided_slice %30 {offsets = [0, 0, 0], sizes = [1, 14, 384], strides = [1, 1, 1]} : vector<1x16x384xf32> to vector<1x14x384xf32>
    %32 = vector.broadcast %2 : vector<1x1x384xf32> to vector<1x14x384xf32>
    %33 = arith.mulf %31, %32 : vector<1x14x384xf32>
    %34 = vector.extract_strided_slice %30 {offsets = [0, 1, 0], sizes = [1, 14, 384], strides = [1, 1, 1]} : vector<1x16x384xf32> to vector<1x14x384xf32>
    %35 = vector.broadcast %5 : vector<1x1x384xf32> to vector<1x14x384xf32>
    %36 = arith.mulf %34, %35 : vector<1x14x384xf32>
    %37 = arith.addf %33, %36 : vector<1x14x384xf32>
    %38 = vector.extract_strided_slice %30 {offsets = [0, 2, 0], sizes = [1, 14, 384], strides = [1, 1, 1]} : vector<1x16x384xf32> to vector<1x14x384xf32>
    %39 = vector.broadcast %8 : vector<1x1x384xf32> to vector<1x14x384xf32>
    %40 = arith.mulf %38, %39 : vector<1x14x384xf32>
    %41 = arith.addf %37, %40 : vector<1x14x384xf32>
    %c0_29 = arith.constant 0 : index
    %c1_30 = arith.constant 1 : index
    %c0_31 = arith.constant 0 : index
    %c0_32 = arith.constant 0 : index
    %42 = vector.load %arg1[%c0_29, %c1_30, %c0_31, %c0_32] : memref<1x16x16x384xf32, #tpu.memory_space<vmem>>, vector<1x1x16x384xf32>
    %43 = vector.shape_cast %42 : vector<1x1x16x384xf32> to vector<1x16x384xf32>
    %44 = vector.extract_strided_slice %43 {offsets = [0, 0, 0], sizes = [1, 14, 384], strides = [1, 1, 1]} : vector<1x16x384xf32> to vector<1x14x384xf32>
    %45 = vector.broadcast %11 : vector<1x1x384xf32> to vector<1x14x384xf32>
    %46 = arith.mulf %44, %45 : vector<1x14x384xf32>
    %47 = vector.extract_strided_slice %43 {offsets = [0, 1, 0], sizes = [1, 14, 384], strides = [1, 1, 1]} : vector<1x16x384xf32> to vector<1x14x384xf32>
    %48 = vector.broadcast %14 : vector<1x1x384xf32> to vector<1x14x384xf32>
    %49 = arith.mulf %47, %48 : vector<1x14x384xf32>
    %50 = arith.addf %46, %49 : vector<1x14x384xf32>
    %51 = vector.extract_strided_slice %43 {offsets = [0, 2, 0], sizes = [1, 14, 384], strides = [1, 1, 1]} : vector<1x16x384xf32> to vector<1x14x384xf32>
    %52 = vector.broadcast %17 : vector<1x1x384xf32> to vector<1x14x384xf32>
    %53 = arith.mulf %51, %52 : vector<1x14x384xf32>
    %54 = arith.addf %50, %53 : vector<1x14x384xf32>
    %55 = arith.addf %41, %54 : vector<1x14x384xf32>
    %c0_33 = arith.constant 0 : index
    %c2_34 = arith.constant 2 : index
    %c0_35 = arith.constant 0 : index
    %c0_36 = arith.constant 0 : index
    %56 = vector.load %arg1[%c0_33, %c2_34, %c0_35, %c0_36] : memref<1x16x16x384xf32, #tpu.memory_space<vmem>>, vector<1x1x16x384xf32>
    %57 = vector.shape_cast %56 : vector<1x1x16x384xf32> to vector<1x16x384xf32>
    %58 = vector.extract_strided_slice %57 {offsets = [0, 0, 0], sizes = [1, 14, 384], strides = [1, 1, 1]} : vector<1x16x384xf32> to vector<1x14x384xf32>
    %59 = vector.broadcast %20 : vector<1x1x384xf32> to vector<1x14x384xf32>
    %60 = arith.mulf %58, %59 : vector<1x14x384xf32>
    %61 = vector.extract_strided_slice %57 {offsets = [0, 1, 0], sizes = [1, 14, 384], strides = [1, 1, 1]} : vector<1x16x384xf32> to vector<1x14x384xf32>
    %62 = vector.broadcast %23 : vector<1x1x384xf32> to vector<1x14x384xf32>
    %63 = arith.mulf %61, %62 : vector<1x14x384xf32>
    %64 = arith.addf %60, %63 : vector<1x14x384xf32>
    %65 = vector.extract_strided_slice %57 {offsets = [0, 2, 0], sizes = [1, 14, 384], strides = [1, 1, 1]} : vector<1x16x384xf32> to vector<1x14x384xf32>
    %66 = vector.broadcast %26 : vector<1x1x384xf32> to vector<1x14x384xf32>
    %67 = arith.mulf %65, %66 : vector<1x14x384xf32>
    %68 = arith.addf %64, %67 : vector<1x14x384xf32>
    %69 = arith.addf %55, %68 : vector<1x14x384xf32>
    %c0_37 = arith.constant 0 : index
    %c0_38 = arith.constant 0 : index
    %c0_39 = arith.constant 0 : index
    %c0_40 = arith.constant 0 : index
    %70 = vector.load %arg5[%c0_37, %c0_38, %c0_39, %c0_40] : memref<1x14x14x384xf32, #tpu.memory_space<vmem>>, vector<1x1x14x384xf32>
    %71 = vector.shape_cast %70 : vector<1x1x14x384xf32> to vector<1x14x384xf32>
    %72 = vector.shape_cast %69 : vector<1x14x384xf32> to vector<1x1x14x384xf32>
    tpu.vector_store %arg5[%c0_37, %c0_38, %c0_39, %c0_40], %72 {strides = array<i32>} : memref<1x14x14x384xf32, #tpu.memory_space<vmem>>, vector<1x1x14x384xf32>,
    %73 = arith.addf %27, %69 : vector<1x14x384xf32>
    %74 = arith.mulf %69, %69 : vector<1x14x384xf32>
    %75 = arith.addf %28, %74 : vector<1x14x384xf32>
    %c0_41 = arith.constant 0 : index
    %c1_42 = arith.constant 1 : index
    %c0_43 = arith.constant 0 : index
    %c0_44 = arith.constant 0 : index
    %76 = vector.load %arg1[%c0_41, %c1_42, %c0_43, %c0_44] : memref<1x16x16x384xf32, #tpu.memory_space<vmem>>, vector<1x1x16x384xf32>
    %77 = vector.shape_cast %76 : vector<1x1x16x384xf32> to vector<1x16x384xf32>
    %78 = vector.extract_strided_slice %77 {offsets = [0, 0, 0], sizes = [1, 14, 384], strides = [1, 1, 1]} : vector<1x16x384xf32> to vector<1x14x384xf32>
    %79 = vector.broadcast %2 : vector<1x1x384xf32> to vector<1x14x384xf32>
    %80 = arith.mulf %78, %79 : vector<1x14x384xf32>
    %81 = vector.extract_strided_slice %77 {offsets = [0, 1, 0], sizes = [1, 14, 384], strides = [1, 1, 1]} : vector<1x16x384xf32> to vector<1x14x384xf32>
    %82 = vector.broadcast %5 : vector<1x1x384xf32> to vector<1x14x384xf32>
    %83 = arith.mulf %81, %82 : vector<1x14x384xf32>
    %84 = arith.addf %80, %83 : vector<1x14x384xf32>
    %85 = vector.extract_strided_slice %77 {offsets = [0, 2, 0], sizes = [1, 14, 384], strides = [1, 1, 1]} : vector<1x16x384xf32> to vector<1x14x384xf32>
    %86 = vector.broadcast %8 : vector<1x1x384xf32> to vector<1x14x384xf32>
    %87 = arith.mulf %85, %86 : vector<1x14x384xf32>
    %88 = arith.addf %84, %87 : vector<1x14x384xf32>
    %c0_45 = arith.constant 0 : index
    %c2_46 = arith.constant 2 : index
    %c0_47 = arith.constant 0 : index
    %c0_48 = arith.constant 0 : index
    %89 = vector.load %arg1[%c0_45, %c2_46, %c0_47, %c0_48] : memref<1x16x16x384xf32, #tpu.memory_space<vmem>>, vector<1x1x16x384xf32>
    %90 = vector.shape_cast %89 : vector<1x1x16x384xf32> to vector<1x16x384xf32>
    %91 = vector.extract_strided_slice %90 {offsets = [0, 0, 0], sizes = [1, 14, 384], strides = [1, 1, 1]} : vector<1x16x384xf32> to vector<1x14x384xf32>
    %92 = vector.broadcast %11 : vector<1x1x384xf32> to vector<1x14x384xf32>
    %93 = arith.mulf %91, %92 : vector<1x14x384xf32>
    %94 = vector.extract_strided_slice %90 {offsets = [0, 1, 0], sizes = [1, 14, 384], strides = [1, 1, 1]} : vector<1x16x384xf32> to vector<1x14x384xf32>
    %95 = vector.broadcast %14 : vector<1x1x384xf32> to vector<1x14x384xf32>
    %96 = arith.mulf %94, %95 : vector<1x14x384xf32>
    %97 = arith.addf %93, %96 : vector<1x14x384xf32>
    %98 = vector.extract_strided_slice %90 {offsets = [0, 2, 0], sizes = [1, 14, 384], strides = [1, 1, 1]} : vector<1x16x384xf32> to vector<1x14x384xf32>
    %99 = vector.broadcast %17 : vector<1x1x384xf32> to vector<1x14x384xf32>
    %100 = arith.mulf %98, %99 : vector<1x14x384xf32>
    %101 = arith.addf %97, %100 : vector<1x14x384xf32>
    %102 = arith.addf %88, %101 : vector<1x14x384xf32>
    %c0_49 = arith.constant 0 : index
    %c3 = arith.constant 3 : index
    %c0_50 = arith.constant 0 : index
    %c0_51 = arith.constant 0 : index
    %103 = vector.load %arg1[%c0_49, %c3, %c0_50, %c0_51] : memref<1x16x16x384xf32, #tpu.memory_space<vmem>>, vector<1x1x16x384xf32>
    %104 = vector.shape_cast %103 : vector<1x1x16x384xf32> to vector<1x16x384xf32>
    %105 = vector.extract_strided_slice %104 {offsets = [0, 0, 0], sizes = [1, 14, 384], strides = [1, 1, 1]} : vector<1x16x384xf32> to vector<1x14x384xf32>
    %106 = vector.broadcast %20 : vector<1x1x384xf32> to vector<1x14x384xf32>
    %107 = arith.mulf %105, %106 : vector<1x14x384xf32>
    %108 = vector.extract_strided_slice %104 {offsets = [0, 1, 0], sizes = [1, 14, 384], strides = [1, 1, 1]} : vector<1x16x384xf32> to vector<1x14x384xf32>
    %109 = vector.broadcast %23 : vector<1x1x384xf32> to vector<1x14x384xf32>
    %110 = arith.mulf %108, %109 : vector<1x14x384xf32>
    %111 = arith.addf %107, %110 : vector<1x14x384xf32>
    %112 = vector.extract_strided_slice %104 {offsets = [0, 2, 0], sizes = [1, 14, 384], strides = [1, 1, 1]} : vector<1x16x384xf32> to vector<1x14x384xf32>
    %113 = vector.broadcast %26 : vector<1x1x384xf32> to vector<1x14x384xf32>
    %114 = arith.mulf %112, %113 : vector<1x14x384xf32>
    %115 = arith.addf %111, %114 : vector<1x14x384xf32>
    %116 = arith.addf %102, %115 : vector<1x14x384xf32>
    %c0_52 = arith.constant 0 : index
    %c1_53 = arith.constant 1 : index
    %c0_54 = arith.constant 0 : index
    %c0_55 = arith.constant 0 : index
    %117 = vector.load %arg5[%c0_52, %c1_53, %c0_54, %c0_55] : memref<1x14x14x384xf32, #tpu.memory_space<vmem>>, vector<1x1x14x384xf32>
    %118 = vector.shape_cast %117 : vector<1x1x14x384xf32> to vector<1x14x384xf32>
    %119 = vector.shape_cast %116 : vector<1x14x384xf32> to vector<1x1x14x384xf32>
    tpu.vector_store %arg5[%c0_52, %c1_53, %c0_54, %c0_55], %119 {strides = array<i32>} : memref<1x14x14x384xf32, #tpu.memory_space<vmem>>, vector<1x1x14x384xf32>,
    %120 = arith.addf %73, %116 : vector<1x14x384xf32>
    %121 = arith.mulf %116, %116 : vector<1x14x384xf32>
    %122 = arith.addf %75, %121 : vector<1x14x384xf32>
    %c0_56 = arith.constant 0 : index
    %c2_57 = arith.constant 2 : index
    %c0_58 = arith.constant 0 : index
    %c0_59 = arith.constant 0 : index
    %123 = vector.load %arg1[%c0_56, %c2_57, %c0_58, %c0_59] : memref<1x16x16x384xf32, #tpu.memory_space<vmem>>, vector<1x1x16x384xf32>
    %124 = vector.shape_cast %123 : vector<1x1x16x384xf32> to vector<1x16x384xf32>
    %125 = vector.extract_strided_slice %124 {offsets = [0, 0, 0], sizes = [1, 14, 384], strides = [1, 1, 1]} : vector<1x16x384xf32> to vector<1x14x384xf32>
    %126 = vector.broadcast %2 : vector<1x1x384xf32> to vector<1x14x384xf32>
    %127 = arith.mulf %125, %126 : vector<1x14x384xf32>
    %128 = vector.extract_strided_slice %124 {offsets = [0, 1, 0], sizes = [1, 14, 384], strides = [1, 1, 1]} : vector<1x16x384xf32> to vector<1x14x384xf32>
    %129 = vector.broadcast %5 : vector<1x1x384xf32> to vector<1x14x384xf32>
    %130 = arith.mulf %128, %129 : vector<1x14x384xf32>
    %131 = arith.addf %127, %130 : vector<1x14x384xf32>
    %132 = vector.extract_strided_slice %124 {offsets = [0, 2, 0], sizes = [1, 14, 384], strides = [1, 1, 1]} : vector<1x16x384xf32> to vector<1x14x384xf32>
    %133 = vector.broadcast %8 : vector<1x1x384xf32> to vector<1x14x384xf32>
    %134 = arith.mulf %132, %133 : vector<1x14x384xf32>
    %135 = arith.addf %131, %134 : vector<1x14x384xf32>
    %c0_60 = arith.constant 0 : index
    %c3_61 = arith.constant 3 : index
    %c0_62 = arith.constant 0 : index
    %c0_63 = arith.constant 0 : index
    %136 = vector.load %arg1[%c0_60, %c3_61, %c0_62, %c0_63] : memref<1x16x16x384xf32, #tpu.memory_space<vmem>>, vector<1x1x16x384xf32>
    %137 = vector.shape_cast %136 : vector<1x1x16x384xf32> to vector<1x16x384xf32>
    %138 = vector.extract_strided_slice %137 {offsets = [0, 0, 0], sizes = [1, 14, 384], strides = [1, 1, 1]} : vector<1x16x384xf32> to vector<1x14x384xf32>
    %139 = vector.broadcast %11 : vector<1x1x384xf32> to vector<1x14x384xf32>
    %140 = arith.mulf %138, %139 : vector<1x14x384xf32>
    %141 = vector.extract_strided_slice %137 {offsets = [0, 1, 0], sizes = [1, 14, 384], strides = [1, 1, 1]} : vector<1x16x384xf32> to vector<1x14x384xf32>
    %142 = vector.broadcast %14 : vector<1x1x384xf32> to vector<1x14x384xf32>
    %143 = arith.mulf %141, %142 : vector<1x14x384xf32>
    %144 = arith.addf %140, %143 : vector<1x14x384xf32>
    %145 = vector.extract_strided_slice %137 {offsets = [0, 2, 0], sizes = [1, 14, 384], strides = [1, 1, 1]} : vector<1x16x384xf32> to vector<1x14x384xf32>
    %146 = vector.broadcast %17 : vector<1x1x384xf32> to vector<1x14x384xf32>
    %147 = arith.mulf %145, %146 : vector<1x14x384xf32>
    %148 = arith.addf %144, %147 : vector<1x14x384xf32>
    %149 = arith.addf %135, %148 : vector<1x14x384xf32>
    %c0_64 = arith.constant 0 : index
    %c4 = arith.constant 4 : index
    %c0_65 = arith.constant 0 : index
    %c0_66 = arith.constant 0 : index
    %150 = vector.load %arg1[%c0_64, %c4, %c0_65, %c0_66] : memref<1x16x16x384xf32, #tpu.memory_space<vmem>>, vector<1x1x16x384xf32>
    %151 = vector.shape_cast %150 : vector<1x1x16x384xf32> to vector<1x16x384xf32>
    %152 = vector.extract_strided_slice %151 {offsets = [0, 0, 0], sizes = [1, 14, 384], strides = [1, 1, 1]} : vector<1x16x384xf32> to vector<1x14x384xf32>
    %153 = vector.broadcast %20 : vector<1x1x384xf32> to vector<1x14x384xf32>
    %154 = arith.mulf %152, %153 : vector<1x14x384xf32>
    %155 = vector.extract_strided_slice %151 {offsets = [0, 1, 0], sizes = [1, 14, 384], strides = [1, 1, 1]} : vector<1x16x384xf32> to vector<1x14x384xf32>
    %156 = vector.broadcast %23 : vector<1x1x384xf32> to vector<1x14x384xf32>
    %157 = arith.mulf %155, %156 : vector<1x14x384xf32>
    %158 = arith.addf %154, %157 : vector<1x14x384xf32>
    %159 = vector.extract_strided_slice %151 {offsets = [0, 2, 0], sizes = [1, 14, 384], strides = [1, 1, 1]} : vector<1x16x384xf32> to vector<1x14x384xf32>
    %160 = vector.broadcast %26 : vector<1x1x384xf32> to vector<1x14x384xf32>
    %161 = arith.mulf %159, %160 : vector<1x14x384xf32>
    %162 = arith.addf %158, %161 : vector<1x14x384xf32>
    %163 = arith.addf %149, %162 : vector<1x14x384xf32>
    %c0_67 = arith.constant 0 : index
    %c2_68 = arith.constant 2 : index
    %c0_69 = arith.constant 0 : index
    %c0_70 = arith.constant 0 : index
    %164 = vector.load %arg5[%c0_67, %c2_68, %c0_69, %c0_70] : memref<1x14x14x384xf32, #tpu.memory_space<vmem>>, vector<1x1x14x384xf32>
    %165 = vector.shape_cast %164 : vector<1x1x14x384xf32> to vector<1x14x384xf32>
    %166 = vector.shape_cast %163 : vector<1x14x384xf32> to vector<1x1x14x384xf32>
    tpu.vector_store %arg5[%c0_67, %c2_68, %c0_69, %c0_70], %166 {strides = array<i32>} : memref<1x14x14x384xf32, #tpu.memory_space<vmem>>, vector<1x1x14x384xf32>,
    %167 = arith.addf %120, %163 : vector<1x14x384xf32>
    %168 = arith.mulf %163, %163 : vector<1x14x384xf32>
    %169 = arith.addf %122, %168 : vector<1x14x384xf32>
    %c0_71 = arith.constant 0 : index
    %c3_72 = arith.constant 3 : index
    %c0_73 = arith.constant 0 : index
    %c0_74 = arith.constant 0 : index
    %170 = vector.load %arg1[%c0_71, %c3_72, %c0_73, %c0_74] : memref<1x16x16x384xf32, #tpu.memory_space<vmem>>, vector<1x1x16x384xf32>
    %171 = vector.shape_cast %170 : vector<1x1x16x384xf32> to vector<1x16x384xf32>
    %172 = vector.extract_strided_slice %171 {offsets = [0, 0, 0], sizes = [1, 14, 384], strides = [1, 1, 1]} : vector<1x16x384xf32> to vector<1x14x384xf32>
    %173 = vector.broadcast %2 : vector<1x1x384xf32> to vector<1x14x384xf32>
    %174 = arith.mulf %172, %173 : vector<1x14x384xf32>
    %175 = vector.extract_strided_slice %171 {offsets = [0, 1, 0], sizes = [1, 14, 384], strides = [1, 1, 1]} : vector<1x16x384xf32> to vector<1x14x384xf32>
    %176 = vector.broadcast %5 : vector<1x1x384xf32> to vector<1x14x384xf32>
    %177 = arith.mulf %175, %176 : vector<1x14x384xf32>
    %178 = arith.addf %174, %177 : vector<1x14x384xf32>
    %179 = vector.extract_strided_slice %171 {offsets = [0, 2, 0], sizes = [1, 14, 384], strides = [1, 1, 1]} : vector<1x16x384xf32> to vector<1x14x384xf32>
    %180 = vector.broadcast %8 : vector<1x1x384xf32> to vector<1x14x384xf32>
    %181 = arith.mulf %179, %180 : vector<1x14x384xf32>
    %182 = arith.addf %178, %181 : vector<1x14x384xf32>
    %c0_75 = arith.constant 0 : index
    %c4_76 = arith.constant 4 : index
    %c0_77 = arith.constant 0 : index
    %c0_78 = arith.constant 0 : index
    %183 = vector.load %arg1[%c0_75, %c4_76, %c0_77, %c0_78] : memref<1x16x16x384xf32, #tpu.memory_space<vmem>>, vector<1x1x16x384xf32>
    %184 = vector.shape_cast %183 : vector<1x1x16x384xf32> to vector<1x16x384xf32>
    %185 = vector.extract_strided_slice %184 {offsets = [0, 0, 0], sizes = [1, 14, 384], strides = [1, 1, 1]} : vector<1x16x384xf32> to vector<1x14x384xf32>
    %186 = vector.broadcast %11 : vector<1x1x384xf32> to vector<1x14x384xf32>
    %187 = arith.mulf %185, %186 : vector<1x14x384xf32>
    %188 = vector.extract_strided_slice %184 {offsets = [0, 1, 0], sizes = [1, 14, 384], strides = [1, 1, 1]} : vector<1x16x384xf32> to vector<1x14x384xf32>
    %189 = vector.broadcast %14 : vector<1x1x384xf32> to vector<1x14x384xf32>
    %190 = arith.mulf %188, %189 : vector<1x14x384xf32>
    %191 = arith.addf %187, %190 : vector<1x14x384xf32>
    %192 = vector.extract_strided_slice %184 {offsets = [0, 2, 0], sizes = [1, 14, 384], strides = [1, 1, 1]} : vector<1x16x384xf32> to vector<1x14x384xf32>
    %193 = vector.broadcast %17 : vector<1x1x384xf32> to vector<1x14x384xf32>
    %194 = arith.mulf %192, %193 : vector<1x14x384xf32>
    %195 = arith.addf %191, %194 : vector<1x14x384xf32>
    %196 = arith.addf %182, %195 : vector<1x14x384xf32>
    %c0_79 = arith.constant 0 : index
    %c5 = arith.constant 5 : index
    %c0_80 = arith.constant 0 : index
    %c0_81 = arith.constant 0 : index
    %197 = vector.load %arg1[%c0_79, %c5, %c0_80, %c0_81] : memref<1x16x16x384xf32, #tpu.memory_space<vmem>>, vector<1x1x16x384xf32>
    %198 = vector.shape_cast %197 : vector<1x1x16x384xf32> to vector<1x16x384xf32>
    %199 = vector.extract_strided_slice %198 {offsets = [0, 0, 0], sizes = [1, 14, 384], strides = [1, 1, 1]} : vector<1x16x384xf32> to vector<1x14x384xf32>
    %200 = vector.broadcast %20 : vector<1x1x384xf32> to vector<1x14x384xf32>
    %201 = arith.mulf %199, %200 : vector<1x14x384xf32>
    %202 = vector.extract_strided_slice %198 {offsets = [0, 1, 0], sizes = [1, 14, 384], strides = [1, 1, 1]} : vector<1x16x384xf32> to vector<1x14x384xf32>
    %203 = vector.broadcast %23 : vector<1x1x384xf32> to vector<1x14x384xf32>
    %204 = arith.mulf %202, %203 : vector<1x14x384xf32>
    %205 = arith.addf %201, %204 : vector<1x14x384xf32>
    %206 = vector.extract_strided_slice %198 {offsets = [0, 2, 0], sizes = [1, 14, 384], strides = [1, 1, 1]} : vector<1x16x384xf32> to vector<1x14x384xf32>
    %207 = vector.broadcast %26 : vector<1x1x384xf32> to vector<1x14x384xf32>
    %208 = arith.mulf %206, %207 : vector<1x14x384xf32>
    %209 = arith.addf %205, %208 : vector<1x14x384xf32>
    %210 = arith.addf %196, %209 : vector<1x14x384xf32>
    %c0_82 = arith.constant 0 : index
    %c3_83 = arith.constant 3 : index
    %c0_84 = arith.constant 0 : index
    %c0_85 = arith.constant 0 : index
    %211 = vector.load %arg5[%c0_82, %c3_83, %c0_84, %c0_85] : memref<1x14x14x384xf32, #tpu.memory_space<vmem>>, vector<1x1x14x384xf32>
    %212 = vector.shape_cast %211 : vector<1x1x14x384xf32> to vector<1x14x384xf32>
    %213 = vector.shape_cast %210 : vector<1x14x384xf32> to vector<1x1x14x384xf32>
    tpu.vector_store %arg5[%c0_82, %c3_83, %c0_84, %c0_85], %213 {strides = array<i32>} : memref<1x14x14x384xf32, #tpu.memory_space<vmem>>, vector<1x1x14x384xf32>,
    %214 = arith.addf %167, %210 : vector<1x14x384xf32>
    %215 = arith.mulf %210, %210 : vector<1x14x384xf32>
    %216 = arith.addf %169, %215 : vector<1x14x384xf32>
    %c0_86 = arith.constant 0 : index
    %c4_87 = arith.constant 4 : index
    %c0_88 = arith.constant 0 : index
    %c0_89 = arith.constant 0 : index
    %217 = vector.load %arg1[%c0_86, %c4_87, %c0_88, %c0_89] : memref<1x16x16x384xf32, #tpu.memory_space<vmem>>, vector<1x1x16x384xf32>
    %218 = vector.shape_cast %217 : vector<1x1x16x384xf32> to vector<1x16x384xf32>
    %219 = vector.extract_strided_slice %218 {offsets = [0, 0, 0], sizes = [1, 14, 384], strides = [1, 1, 1]} : vector<1x16x384xf32> to vector<1x14x384xf32>
    %220 = vector.broadcast %2 : vector<1x1x384xf32> to vector<1x14x384xf32>
    %221 = arith.mulf %219, %220 : vector<1x14x384xf32>
    %222 = vector.extract_strided_slice %218 {offsets = [0, 1, 0], sizes = [1, 14, 384], strides = [1, 1, 1]} : vector<1x16x384xf32> to vector<1x14x384xf32>
    %223 = vector.broadcast %5 : vector<1x1x384xf32> to vector<1x14x384xf32>
    %224 = arith.mulf %222, %223 : vector<1x14x384xf32>
    %225 = arith.addf %221, %224 : vector<1x14x384xf32>
    %226 = vector.extract_strided_slice %218 {offsets = [0, 2, 0], sizes = [1, 14, 384], strides = [1, 1, 1]} : vector<1x16x384xf32> to vector<1x14x384xf32>
    %227 = vector.broadcast %8 : vector<1x1x384xf32> to vector<1x14x384xf32>
    %228 = arith.mulf %226, %227 : vector<1x14x384xf32>
    %229 = arith.addf %225, %228 : vector<1x14x384xf32>
    %c0_90 = arith.constant 0 : index
    %c5_91 = arith.constant 5 : index
    %c0_92 = arith.constant 0 : index
    %c0_93 = arith.constant 0 : index
    %230 = vector.load %arg1[%c0_90, %c5_91, %c0_92, %c0_93] : memref<1x16x16x384xf32, #tpu.memory_space<vmem>>, vector<1x1x16x384xf32>
    %231 = vector.shape_cast %230 : vector<1x1x16x384xf32> to vector<1x16x384xf32>
    %232 = vector.extract_strided_slice %231 {offsets = [0, 0, 0], sizes = [1, 14, 384], strides = [1, 1, 1]} : vector<1x16x384xf32> to vector<1x14x384xf32>
    %233 = vector.broadcast %11 : vector<1x1x384xf32> to vector<1x14x384xf32>
    %234 = arith.mulf %232, %233 : vector<1x14x384xf32>
    %235 = vector.extract_strided_slice %231 {offsets = [0, 1, 0], sizes = [1, 14, 384], strides = [1, 1, 1]} : vector<1x16x384xf32> to vector<1x14x384xf32>
    %236 = vector.broadcast %14 : vector<1x1x384xf32> to vector<1x14x384xf32>
    %237 = arith.mulf %235, %236 : vector<1x14x384xf32>
    %238 = arith.addf %234, %237 : vector<1x14x384xf32>
    %239 = vector.extract_strided_slice %231 {offsets = [0, 2, 0], sizes = [1, 14, 384], strides = [1, 1, 1]} : vector<1x16x384xf32> to vector<1x14x384xf32>
    %240 = vector.broadcast %17 : vector<1x1x384xf32> to vector<1x14x384xf32>
    %241 = arith.mulf %239, %240 : vector<1x14x384xf32>
    %242 = arith.addf %238, %241 : vector<1x14x384xf32>
    %243 = arith.addf %229, %242 : vector<1x14x384xf32>
    %c0_94 = arith.constant 0 : index
    %c6 = arith.constant 6 : index
    %c0_95 = arith.constant 0 : index
    %c0_96 = arith.constant 0 : index
    %244 = vector.load %arg1[%c0_94, %c6, %c0_95, %c0_96] : memref<1x16x16x384xf32, #tpu.memory_space<vmem>>, vector<1x1x16x384xf32>
    %245 = vector.shape_cast %244 : vector<1x1x16x384xf32> to vector<1x16x384xf32>
    %246 = vector.extract_strided_slice %245 {offsets = [0, 0, 0], sizes = [1, 14, 384], strides = [1, 1, 1]} : vector<1x16x384xf32> to vector<1x14x384xf32>
    %247 = vector.broadcast %20 : vector<1x1x384xf32> to vector<1x14x384xf32>
    %248 = arith.mulf %246, %247 : vector<1x14x384xf32>
    %249 = vector.extract_strided_slice %245 {offsets = [0, 1, 0], sizes = [1, 14, 384], strides = [1, 1, 1]} : vector<1x16x384xf32> to vector<1x14x384xf32>
    %250 = vector.broadcast %23 : vector<1x1x384xf32> to vector<1x14x384xf32>
    %251 = arith.mulf %249, %250 : vector<1x14x384xf32>
    %252 = arith.addf %248, %251 : vector<1x14x384xf32>
    %253 = vector.extract_strided_slice %245 {offsets = [0, 2, 0], sizes = [1, 14, 384], strides = [1, 1, 1]} : vector<1x16x384xf32> to vector<1x14x384xf32>
    %254 = vector.broadcast %26 : vector<1x1x384xf32> to vector<1x14x384xf32>
    %255 = arith.mulf %253, %254 : vector<1x14x384xf32>
    %256 = arith.addf %252, %255 : vector<1x14x384xf32>
    %257 = arith.addf %243, %256 : vector<1x14x384xf32>
    %c0_97 = arith.constant 0 : index
    %c4_98 = arith.constant 4 : index
    %c0_99 = arith.constant 0 : index
    %c0_100 = arith.constant 0 : index
    %258 = vector.load %arg5[%c0_97, %c4_98, %c0_99, %c0_100] : memref<1x14x14x384xf32, #tpu.memory_space<vmem>>, vector<1x1x14x384xf32>
    %259 = vector.shape_cast %258 : vector<1x1x14x384xf32> to vector<1x14x384xf32>
    %260 = vector.shape_cast %257 : vector<1x14x384xf32> to vector<1x1x14x384xf32>
    tpu.vector_store %arg5[%c0_97, %c4_98, %c0_99, %c0_100], %260 {strides = array<i32>} : memref<1x14x14x384xf32, #tpu.memory_space<vmem>>, vector<1x1x14x384xf32>,
    %261 = arith.addf %214, %257 : vector<1x14x384xf32>
    %262 = arith.mulf %257, %257 : vector<1x14x384xf32>
    %263 = arith.addf %216, %262 : vector<1x14x384xf32>
    %c0_101 = arith.constant 0 : index
    %c5_102 = arith.constant 5 : index
    %c0_103 = arith.constant 0 : index
    %c0_104 = arith.constant 0 : index
    %264 = vector.load %arg1[%c0_101, %c5_102, %c0_103, %c0_104] : memref<1x16x16x384xf32, #tpu.memory_space<vmem>>, vector<1x1x16x384xf32>
    %265 = vector.shape_cast %264 : vector<1x1x16x384xf32> to vector<1x16x384xf32>
    %266 = vector.extract_strided_slice %265 {offsets = [0, 0, 0], sizes = [1, 14, 384], strides = [1, 1, 1]} : vector<1x16x384xf32> to vector<1x14x384xf32>
    %267 = vector.broadcast %2 : vector<1x1x384xf32> to vector<1x14x384xf32>
    %268 = arith.mulf %266, %267 : vector<1x14x384xf32>
    %269 = vector.extract_strided_slice %265 {offsets = [0, 1, 0], sizes = [1, 14, 384], strides = [1, 1, 1]} : vector<1x16x384xf32> to vector<1x14x384xf32>
    %270 = vector.broadcast %5 : vector<1x1x384xf32> to vector<1x14x384xf32>
    %271 = arith.mulf %269, %270 : vector<1x14x384xf32>
    %272 = arith.addf %268, %271 : vector<1x14x384xf32>
    %273 = vector.extract_strided_slice %265 {offsets = [0, 2, 0], sizes = [1, 14, 384], strides = [1, 1, 1]} : vector<1x16x384xf32> to vector<1x14x384xf32>
    %274 = vector.broadcast %8 : vector<1x1x384xf32> to vector<1x14x384xf32>
    %275 = arith.mulf %273, %274 : vector<1x14x384xf32>
    %276 = arith.addf %272, %275 : vector<1x14x384xf32>
    %c0_105 = arith.constant 0 : index
    %c6_106 = arith.constant 6 : index
    %c0_107 = arith.constant 0 : index
    %c0_108 = arith.constant 0 : index
    %277 = vector.load %arg1[%c0_105, %c6_106, %c0_107, %c0_108] : memref<1x16x16x384xf32, #tpu.memory_space<vmem>>, vector<1x1x16x384xf32>
    %278 = vector.shape_cast %277 : vector<1x1x16x384xf32> to vector<1x16x384xf32>
    %279 = vector.extract_strided_slice %278 {offsets = [0, 0, 0], sizes = [1, 14, 384], strides = [1, 1, 1]} : vector<1x16x384xf32> to vector<1x14x384xf32>
    %280 = vector.broadcast %11 : vector<1x1x384xf32> to vector<1x14x384xf32>
    %281 = arith.mulf %279, %280 : vector<1x14x384xf32>
    %282 = vector.extract_strided_slice %278 {offsets = [0, 1, 0], sizes = [1, 14, 384], strides = [1, 1, 1]} : vector<1x16x384xf32> to vector<1x14x384xf32>
    %283 = vector.broadcast %14 : vector<1x1x384xf32> to vector<1x14x384xf32>
    %284 = arith.mulf %282, %283 : vector<1x14x384xf32>
    %285 = arith.addf %281, %284 : vector<1x14x384xf32>
    %286 = vector.extract_strided_slice %278 {offsets = [0, 2, 0], sizes = [1, 14, 384], strides = [1, 1, 1]} : vector<1x16x384xf32> to vector<1x14x384xf32>
    %287 = vector.broadcast %17 : vector<1x1x384xf32> to vector<1x14x384xf32>
    %288 = arith.mulf %286, %287 : vector<1x14x384xf32>
    %289 = arith.addf %285, %288 : vector<1x14x384xf32>
    %290 = arith.addf %276, %289 : vector<1x14x384xf32>
    %c0_109 = arith.constant 0 : index
    %c7 = arith.constant 7 : index
    %c0_110 = arith.constant 0 : index
    %c0_111 = arith.constant 0 : index
    %291 = vector.load %arg1[%c0_109, %c7, %c0_110, %c0_111] : memref<1x16x16x384xf32, #tpu.memory_space<vmem>>, vector<1x1x16x384xf32>
    %292 = vector.shape_cast %291 : vector<1x1x16x384xf32> to vector<1x16x384xf32>
    %293 = vector.extract_strided_slice %292 {offsets = [0, 0, 0], sizes = [1, 14, 384], strides = [1, 1, 1]} : vector<1x16x384xf32> to vector<1x14x384xf32>
    %294 = vector.broadcast %20 : vector<1x1x384xf32> to vector<1x14x384xf32>
    %295 = arith.mulf %293, %294 : vector<1x14x384xf32>
    %296 = vector.extract_strided_slice %292 {offsets = [0, 1, 0], sizes = [1, 14, 384], strides = [1, 1, 1]} : vector<1x16x384xf32> to vector<1x14x384xf32>
    %297 = vector.broadcast %23 : vector<1x1x384xf32> to vector<1x14x384xf32>
    %298 = arith.mulf %296, %297 : vector<1x14x384xf32>
    %299 = arith.addf %295, %298 : vector<1x14x384xf32>
    %300 = vector.extract_strided_slice %292 {offsets = [0, 2, 0], sizes = [1, 14, 384], strides = [1, 1, 1]} : vector<1x16x384xf32> to vector<1x14x384xf32>
    %301 = vector.broadcast %26 : vector<1x1x384xf32> to vector<1x14x384xf32>
    %302 = arith.mulf %300, %301 : vector<1x14x384xf32>
    %303 = arith.addf %299, %302 : vector<1x14x384xf32>
    %304 = arith.addf %290, %303 : vector<1x14x384xf32>
    %c0_112 = arith.constant 0 : index
    %c5_113 = arith.constant 5 : index
    %c0_114 = arith.constant 0 : index
    %c0_115 = arith.constant 0 : index
    %305 = vector.load %arg5[%c0_112, %c5_113, %c0_114, %c0_115] : memref<1x14x14x384xf32, #tpu.memory_space<vmem>>, vector<1x1x14x384xf32>
    %306 = vector.shape_cast %305 : vector<1x1x14x384xf32> to vector<1x14x384xf32>
    %307 = vector.shape_cast %304 : vector<1x14x384xf32> to vector<1x1x14x384xf32>
    tpu.vector_store %arg5[%c0_112, %c5_113, %c0_114, %c0_115], %307 {strides = array<i32>} : memref<1x14x14x384xf32, #tpu.memory_space<vmem>>, vector<1x1x14x384xf32>,
    %308 = arith.addf %261, %304 : vector<1x14x384xf32>
    %309 = arith.mulf %304, %304 : vector<1x14x384xf32>
    %310 = arith.addf %263, %309 : vector<1x14x384xf32>
    %c0_116 = arith.constant 0 : index
    %c6_117 = arith.constant 6 : index
    %c0_118 = arith.constant 0 : index
    %c0_119 = arith.constant 0 : index
    %311 = vector.load %arg1[%c0_116, %c6_117, %c0_118, %c0_119] : memref<1x16x16x384xf32, #tpu.memory_space<vmem>>, vector<1x1x16x384xf32>
    %312 = vector.shape_cast %311 : vector<1x1x16x384xf32> to vector<1x16x384xf32>
    %313 = vector.extract_strided_slice %312 {offsets = [0, 0, 0], sizes = [1, 14, 384], strides = [1, 1, 1]} : vector<1x16x384xf32> to vector<1x14x384xf32>
    %314 = vector.broadcast %2 : vector<1x1x384xf32> to vector<1x14x384xf32>
    %315 = arith.mulf %313, %314 : vector<1x14x384xf32>
    %316 = vector.extract_strided_slice %312 {offsets = [0, 1, 0], sizes = [1, 14, 384], strides = [1, 1, 1]} : vector<1x16x384xf32> to vector<1x14x384xf32>
    %317 = vector.broadcast %5 : vector<1x1x384xf32> to vector<1x14x384xf32>
    %318 = arith.mulf %316, %317 : vector<1x14x384xf32>
    %319 = arith.addf %315, %318 : vector<1x14x384xf32>
    %320 = vector.extract_strided_slice %312 {offsets = [0, 2, 0], sizes = [1, 14, 384], strides = [1, 1, 1]} : vector<1x16x384xf32> to vector<1x14x384xf32>
    %321 = vector.broadcast %8 : vector<1x1x384xf32> to vector<1x14x384xf32>
    %322 = arith.mulf %320, %321 : vector<1x14x384xf32>
    %323 = arith.addf %319, %322 : vector<1x14x384xf32>
    %c0_120 = arith.constant 0 : index
    %c7_121 = arith.constant 7 : index
    %c0_122 = arith.constant 0 : index
    %c0_123 = arith.constant 0 : index
    %324 = vector.load %arg1[%c0_120, %c7_121, %c0_122, %c0_123] : memref<1x16x16x384xf32, #tpu.memory_space<vmem>>, vector<1x1x16x384xf32>
    %325 = vector.shape_cast %324 : vector<1x1x16x384xf32> to vector<1x16x384xf32>
    %326 = vector.extract_strided_slice %325 {offsets = [0, 0, 0], sizes = [1, 14, 384], strides = [1, 1, 1]} : vector<1x16x384xf32> to vector<1x14x384xf32>
    %327 = vector.broadcast %11 : vector<1x1x384xf32> to vector<1x14x384xf32>
    %328 = arith.mulf %326, %327 : vector<1x14x384xf32>
    %329 = vector.extract_strided_slice %325 {offsets = [0, 1, 0], sizes = [1, 14, 384], strides = [1, 1, 1]} : vector<1x16x384xf32> to vector<1x14x384xf32>
    %330 = vector.broadcast %14 : vector<1x1x384xf32> to vector<1x14x384xf32>
    %331 = arith.mulf %329, %330 : vector<1x14x384xf32>
    %332 = arith.addf %328, %331 : vector<1x14x384xf32>
    %333 = vector.extract_strided_slice %325 {offsets = [0, 2, 0], sizes = [1, 14, 384], strides = [1, 1, 1]} : vector<1x16x384xf32> to vector<1x14x384xf32>
    %334 = vector.broadcast %17 : vector<1x1x384xf32> to vector<1x14x384xf32>
    %335 = arith.mulf %333, %334 : vector<1x14x384xf32>
    %336 = arith.addf %332, %335 : vector<1x14x384xf32>
    %337 = arith.addf %323, %336 : vector<1x14x384xf32>
    %c0_124 = arith.constant 0 : index
    %c8 = arith.constant 8 : index
    %c0_125 = arith.constant 0 : index
    %c0_126 = arith.constant 0 : index
    %338 = vector.load %arg1[%c0_124, %c8, %c0_125, %c0_126] : memref<1x16x16x384xf32, #tpu.memory_space<vmem>>, vector<1x1x16x384xf32>
    %339 = vector.shape_cast %338 : vector<1x1x16x384xf32> to vector<1x16x384xf32>
    %340 = vector.extract_strided_slice %339 {offsets = [0, 0, 0], sizes = [1, 14, 384], strides = [1, 1, 1]} : vector<1x16x384xf32> to vector<1x14x384xf32>
    %341 = vector.broadcast %20 : vector<1x1x384xf32> to vector<1x14x384xf32>
    %342 = arith.mulf %340, %341 : vector<1x14x384xf32>
    %343 = vector.extract_strided_slice %339 {offsets = [0, 1, 0], sizes = [1, 14, 384], strides = [1, 1, 1]} : vector<1x16x384xf32> to vector<1x14x384xf32>
    %344 = vector.broadcast %23 : vector<1x1x384xf32> to vector<1x14x384xf32>
    %345 = arith.mulf %343, %344 : vector<1x14x384xf32>
    %346 = arith.addf %342, %345 : vector<1x14x384xf32>
    %347 = vector.extract_strided_slice %339 {offsets = [0, 2, 0], sizes = [1, 14, 384], strides = [1, 1, 1]} : vector<1x16x384xf32> to vector<1x14x384xf32>
    %348 = vector.broadcast %26 : vector<1x1x384xf32> to vector<1x14x384xf32>
    %349 = arith.mulf %347, %348 : vector<1x14x384xf32>
    %350 = arith.addf %346, %349 : vector<1x14x384xf32>
    %351 = arith.addf %337, %350 : vector<1x14x384xf32>
    %c0_127 = arith.constant 0 : index
    %c6_128 = arith.constant 6 : index
    %c0_129 = arith.constant 0 : index
    %c0_130 = arith.constant 0 : index
    %352 = vector.load %arg5[%c0_127, %c6_128, %c0_129, %c0_130] : memref<1x14x14x384xf32, #tpu.memory_space<vmem>>, vector<1x1x14x384xf32>
    %353 = vector.shape_cast %352 : vector<1x1x14x384xf32> to vector<1x14x384xf32>
    %354 = vector.shape_cast %351 : vector<1x14x384xf32> to vector<1x1x14x384xf32>
    tpu.vector_store %arg5[%c0_127, %c6_128, %c0_129, %c0_130], %354 {strides = array<i32>} : memref<1x14x14x384xf32, #tpu.memory_space<vmem>>, vector<1x1x14x384xf32>,
    %355 = arith.addf %308, %351 : vector<1x14x384xf32>
    %356 = arith.mulf %351, %351 : vector<1x14x384xf32>
    %357 = arith.addf %310, %356 : vector<1x14x384xf32>
    %c0_131 = arith.constant 0 : index
    %c7_132 = arith.constant 7 : index
    %c0_133 = arith.constant 0 : index
    %c0_134 = arith.constant 0 : index
    %358 = vector.load %arg1[%c0_131, %c7_132, %c0_133, %c0_134] : memref<1x16x16x384xf32, #tpu.memory_space<vmem>>, vector<1x1x16x384xf32>
    %359 = vector.shape_cast %358 : vector<1x1x16x384xf32> to vector<1x16x384xf32>
    %360 = vector.extract_strided_slice %359 {offsets = [0, 0, 0], sizes = [1, 14, 384], strides = [1, 1, 1]} : vector<1x16x384xf32> to vector<1x14x384xf32>
    %361 = vector.broadcast %2 : vector<1x1x384xf32> to vector<1x14x384xf32>
    %362 = arith.mulf %360, %361 : vector<1x14x384xf32>
    %363 = vector.extract_strided_slice %359 {offsets = [0, 1, 0], sizes = [1, 14, 384], strides = [1, 1, 1]} : vector<1x16x384xf32> to vector<1x14x384xf32>
    %364 = vector.broadcast %5 : vector<1x1x384xf32> to vector<1x14x384xf32>
    %365 = arith.mulf %363, %364 : vector<1x14x384xf32>
    %366 = arith.addf %362, %365 : vector<1x14x384xf32>
    %367 = vector.extract_strided_slice %359 {offsets = [0, 2, 0], sizes = [1, 14, 384], strides = [1, 1, 1]} : vector<1x16x384xf32> to vector<1x14x384xf32>
    %368 = vector.broadcast %8 : vector<1x1x384xf32> to vector<1x14x384xf32>
    %369 = arith.mulf %367, %368 : vector<1x14x384xf32>
    %370 = arith.addf %366, %369 : vector<1x14x384xf32>
    %c0_135 = arith.constant 0 : index
    %c8_136 = arith.constant 8 : index
    %c0_137 = arith.constant 0 : index
    %c0_138 = arith.constant 0 : index
    %371 = vector.load %arg1[%c0_135, %c8_136, %c0_137, %c0_138] : memref<1x16x16x384xf32, #tpu.memory_space<vmem>>, vector<1x1x16x384xf32>
    %372 = vector.shape_cast %371 : vector<1x1x16x384xf32> to vector<1x16x384xf32>
    %373 = vector.extract_strided_slice %372 {offsets = [0, 0, 0], sizes = [1, 14, 384], strides = [1, 1, 1]} : vector<1x16x384xf32> to vector<1x14x384xf32>
    %374 = vector.broadcast %11 : vector<1x1x384xf32> to vector<1x14x384xf32>
    %375 = arith.mulf %373, %374 : vector<1x14x384xf32>
    %376 = vector.extract_strided_slice %372 {offsets = [0, 1, 0], sizes = [1, 14, 384], strides = [1, 1, 1]} : vector<1x16x384xf32> to vector<1x14x384xf32>
    %377 = vector.broadcast %14 : vector<1x1x384xf32> to vector<1x14x384xf32>
    %378 = arith.mulf %376, %377 : vector<1x14x384xf32>
    %379 = arith.addf %375, %378 : vector<1x14x384xf32>
    %380 = vector.extract_strided_slice %372 {offsets = [0, 2, 0], sizes = [1, 14, 384], strides = [1, 1, 1]} : vector<1x16x384xf32> to vector<1x14x384xf32>
    %381 = vector.broadcast %17 : vector<1x1x384xf32> to vector<1x14x384xf32>
    %382 = arith.mulf %380, %381 : vector<1x14x384xf32>
    %383 = arith.addf %379, %382 : vector<1x14x384xf32>
    %384 = arith.addf %370, %383 : vector<1x14x384xf32>
    %c0_139 = arith.constant 0 : index
    %c9 = arith.constant 9 : index
    %c0_140 = arith.constant 0 : index
    %c0_141 = arith.constant 0 : index
    %385 = vector.load %arg1[%c0_139, %c9, %c0_140, %c0_141] : memref<1x16x16x384xf32, #tpu.memory_space<vmem>>, vector<1x1x16x384xf32>
    %386 = vector.shape_cast %385 : vector<1x1x16x384xf32> to vector<1x16x384xf32>
    %387 = vector.extract_strided_slice %386 {offsets = [0, 0, 0], sizes = [1, 14, 384], strides = [1, 1, 1]} : vector<1x16x384xf32> to vector<1x14x384xf32>
    %388 = vector.broadcast %20 : vector<1x1x384xf32> to vector<1x14x384xf32>
    %389 = arith.mulf %387, %388 : vector<1x14x384xf32>
    %390 = vector.extract_strided_slice %386 {offsets = [0, 1, 0], sizes = [1, 14, 384], strides = [1, 1, 1]} : vector<1x16x384xf32> to vector<1x14x384xf32>
    %391 = vector.broadcast %23 : vector<1x1x384xf32> to vector<1x14x384xf32>
    %392 = arith.mulf %390, %391 : vector<1x14x384xf32>
    %393 = arith.addf %389, %392 : vector<1x14x384xf32>
    %394 = vector.extract_strided_slice %386 {offsets = [0, 2, 0], sizes = [1, 14, 384], strides = [1, 1, 1]} : vector<1x16x384xf32> to vector<1x14x384xf32>
    %395 = vector.broadcast %26 : vector<1x1x384xf32> to vector<1x14x384xf32>
    %396 = arith.mulf %394, %395 : vector<1x14x384xf32>
    %397 = arith.addf %393, %396 : vector<1x14x384xf32>
    %398 = arith.addf %384, %397 : vector<1x14x384xf32>
    %c0_142 = arith.constant 0 : index
    %c7_143 = arith.constant 7 : index
    %c0_144 = arith.constant 0 : index
    %c0_145 = arith.constant 0 : index
    %399 = vector.load %arg5[%c0_142, %c7_143, %c0_144, %c0_145] : memref<1x14x14x384xf32, #tpu.memory_space<vmem>>, vector<1x1x14x384xf32>
    %400 = vector.shape_cast %399 : vector<1x1x14x384xf32> to vector<1x14x384xf32>
    %401 = vector.shape_cast %398 : vector<1x14x384xf32> to vector<1x1x14x384xf32>
    tpu.vector_store %arg5[%c0_142, %c7_143, %c0_144, %c0_145], %401 {strides = array<i32>} : memref<1x14x14x384xf32, #tpu.memory_space<vmem>>, vector<1x1x14x384xf32>,
    %402 = arith.addf %355, %398 : vector<1x14x384xf32>
    %403 = arith.mulf %398, %398 : vector<1x14x384xf32>
    %404 = arith.addf %357, %403 : vector<1x14x384xf32>
    %c0_146 = arith.constant 0 : index
    %c8_147 = arith.constant 8 : index
    %c0_148 = arith.constant 0 : index
    %c0_149 = arith.constant 0 : index
    %405 = vector.load %arg1[%c0_146, %c8_147, %c0_148, %c0_149] : memref<1x16x16x384xf32, #tpu.memory_space<vmem>>, vector<1x1x16x384xf32>
    %406 = vector.shape_cast %405 : vector<1x1x16x384xf32> to vector<1x16x384xf32>
    %407 = vector.extract_strided_slice %406 {offsets = [0, 0, 0], sizes = [1, 14, 384], strides = [1, 1, 1]} : vector<1x16x384xf32> to vector<1x14x384xf32>
    %408 = vector.broadcast %2 : vector<1x1x384xf32> to vector<1x14x384xf32>
    %409 = arith.mulf %407, %408 : vector<1x14x384xf32>
    %410 = vector.extract_strided_slice %406 {offsets = [0, 1, 0], sizes = [1, 14, 384], strides = [1, 1, 1]} : vector<1x16x384xf32> to vector<1x14x384xf32>
    %411 = vector.broadcast %5 : vector<1x1x384xf32> to vector<1x14x384xf32>
    %412 = arith.mulf %410, %411 : vector<1x14x384xf32>
    %413 = arith.addf %409, %412 : vector<1x14x384xf32>
    %414 = vector.extract_strided_slice %406 {offsets = [0, 2, 0], sizes = [1, 14, 384], strides = [1, 1, 1]} : vector<1x16x384xf32> to vector<1x14x384xf32>
    %415 = vector.broadcast %8 : vector<1x1x384xf32> to vector<1x14x384xf32>
    %416 = arith.mulf %414, %415 : vector<1x14x384xf32>
    %417 = arith.addf %413, %416 : vector<1x14x384xf32>
    %c0_150 = arith.constant 0 : index
    %c9_151 = arith.constant 9 : index
    %c0_152 = arith.constant 0 : index
    %c0_153 = arith.constant 0 : index
    %418 = vector.load %arg1[%c0_150, %c9_151, %c0_152, %c0_153] : memref<1x16x16x384xf32, #tpu.memory_space<vmem>>, vector<1x1x16x384xf32>
    %419 = vector.shape_cast %418 : vector<1x1x16x384xf32> to vector<1x16x384xf32>
    %420 = vector.extract_strided_slice %419 {offsets = [0, 0, 0], sizes = [1, 14, 384], strides = [1, 1, 1]} : vector<1x16x384xf32> to vector<1x14x384xf32>
    %421 = vector.broadcast %11 : vector<1x1x384xf32> to vector<1x14x384xf32>
    %422 = arith.mulf %420, %421 : vector<1x14x384xf32>
    %423 = vector.extract_strided_slice %419 {offsets = [0, 1, 0], sizes = [1, 14, 384], strides = [1, 1, 1]} : vector<1x16x384xf32> to vector<1x14x384xf32>
    %424 = vector.broadcast %14 : vector<1x1x384xf32> to vector<1x14x384xf32>
    %425 = arith.mulf %423, %424 : vector<1x14x384xf32>
    %426 = arith.addf %422, %425 : vector<1x14x384xf32>
    %427 = vector.extract_strided_slice %419 {offsets = [0, 2, 0], sizes = [1, 14, 384], strides = [1, 1, 1]} : vector<1x16x384xf32> to vector<1x14x384xf32>
    %428 = vector.broadcast %17 : vector<1x1x384xf32> to vector<1x14x384xf32>
    %429 = arith.mulf %427, %428 : vector<1x14x384xf32>
    %430 = arith.addf %426, %429 : vector<1x14x384xf32>
    %431 = arith.addf %417, %430 : vector<1x14x384xf32>
    %c0_154 = arith.constant 0 : index
    %c10 = arith.constant 10 : index
    %c0_155 = arith.constant 0 : index
    %c0_156 = arith.constant 0 : index
    %432 = vector.load %arg1[%c0_154, %c10, %c0_155, %c0_156] : memref<1x16x16x384xf32, #tpu.memory_space<vmem>>, vector<1x1x16x384xf32>
    %433 = vector.shape_cast %432 : vector<1x1x16x384xf32> to vector<1x16x384xf32>
    %434 = vector.extract_strided_slice %433 {offsets = [0, 0, 0], sizes = [1, 14, 384], strides = [1, 1, 1]} : vector<1x16x384xf32> to vector<1x14x384xf32>
    %435 = vector.broadcast %20 : vector<1x1x384xf32> to vector<1x14x384xf32>
    %436 = arith.mulf %434, %435 : vector<1x14x384xf32>
    %437 = vector.extract_strided_slice %433 {offsets = [0, 1, 0], sizes = [1, 14, 384], strides = [1, 1, 1]} : vector<1x16x384xf32> to vector<1x14x384xf32>
    %438 = vector.broadcast %23 : vector<1x1x384xf32> to vector<1x14x384xf32>
    %439 = arith.mulf %437, %438 : vector<1x14x384xf32>
    %440 = arith.addf %436, %439 : vector<1x14x384xf32>
    %441 = vector.extract_strided_slice %433 {offsets = [0, 2, 0], sizes = [1, 14, 384], strides = [1, 1, 1]} : vector<1x16x384xf32> to vector<1x14x384xf32>
    %442 = vector.broadcast %26 : vector<1x1x384xf32> to vector<1x14x384xf32>
    %443 = arith.mulf %441, %442 : vector<1x14x384xf32>
    %444 = arith.addf %440, %443 : vector<1x14x384xf32>
    %445 = arith.addf %431, %444 : vector<1x14x384xf32>
    %c0_157 = arith.constant 0 : index
    %c8_158 = arith.constant 8 : index
    %c0_159 = arith.constant 0 : index
    %c0_160 = arith.constant 0 : index
    %446 = vector.load %arg5[%c0_157, %c8_158, %c0_159, %c0_160] : memref<1x14x14x384xf32, #tpu.memory_space<vmem>>, vector<1x1x14x384xf32>
    %447 = vector.shape_cast %446 : vector<1x1x14x384xf32> to vector<1x14x384xf32>
    %448 = vector.shape_cast %445 : vector<1x14x384xf32> to vector<1x1x14x384xf32>
    tpu.vector_store %arg5[%c0_157, %c8_158, %c0_159, %c0_160], %448 {strides = array<i32>} : memref<1x14x14x384xf32, #tpu.memory_space<vmem>>, vector<1x1x14x384xf32>,
    %449 = arith.addf %402, %445 : vector<1x14x384xf32>
    %450 = arith.mulf %445, %445 : vector<1x14x384xf32>
    %451 = arith.addf %404, %450 : vector<1x14x384xf32>
    %c0_161 = arith.constant 0 : index
    %c9_162 = arith.constant 9 : index
    %c0_163 = arith.constant 0 : index
    %c0_164 = arith.constant 0 : index
    %452 = vector.load %arg1[%c0_161, %c9_162, %c0_163, %c0_164] : memref<1x16x16x384xf32, #tpu.memory_space<vmem>>, vector<1x1x16x384xf32>
    %453 = vector.shape_cast %452 : vector<1x1x16x384xf32> to vector<1x16x384xf32>
    %454 = vector.extract_strided_slice %453 {offsets = [0, 0, 0], sizes = [1, 14, 384], strides = [1, 1, 1]} : vector<1x16x384xf32> to vector<1x14x384xf32>
    %455 = vector.broadcast %2 : vector<1x1x384xf32> to vector<1x14x384xf32>
    %456 = arith.mulf %454, %455 : vector<1x14x384xf32>
    %457 = vector.extract_strided_slice %453 {offsets = [0, 1, 0], sizes = [1, 14, 384], strides = [1, 1, 1]} : vector<1x16x384xf32> to vector<1x14x384xf32>
    %458 = vector.broadcast %5 : vector<1x1x384xf32> to vector<1x14x384xf32>
    %459 = arith.mulf %457, %458 : vector<1x14x384xf32>
    %460 = arith.addf %456, %459 : vector<1x14x384xf32>
    %461 = vector.extract_strided_slice %453 {offsets = [0, 2, 0], sizes = [1, 14, 384], strides = [1, 1, 1]} : vector<1x16x384xf32> to vector<1x14x384xf32>
    %462 = vector.broadcast %8 : vector<1x1x384xf32> to vector<1x14x384xf32>
    %463 = arith.mulf %461, %462 : vector<1x14x384xf32>
    %464 = arith.addf %460, %463 : vector<1x14x384xf32>
    %c0_165 = arith.constant 0 : index
    %c10_166 = arith.constant 10 : index
    %c0_167 = arith.constant 0 : index
    %c0_168 = arith.constant 0 : index
    %465 = vector.load %arg1[%c0_165, %c10_166, %c0_167, %c0_168] : memref<1x16x16x384xf32, #tpu.memory_space<vmem>>, vector<1x1x16x384xf32>
    %466 = vector.shape_cast %465 : vector<1x1x16x384xf32> to vector<1x16x384xf32>
    %467 = vector.extract_strided_slice %466 {offsets = [0, 0, 0], sizes = [1, 14, 384], strides = [1, 1, 1]} : vector<1x16x384xf32> to vector<1x14x384xf32>
    %468 = vector.broadcast %11 : vector<1x1x384xf32> to vector<1x14x384xf32>
    %469 = arith.mulf %467, %468 : vector<1x14x384xf32>
    %470 = vector.extract_strided_slice %466 {offsets = [0, 1, 0], sizes = [1, 14, 384], strides = [1, 1, 1]} : vector<1x16x384xf32> to vector<1x14x384xf32>
    %471 = vector.broadcast %14 : vector<1x1x384xf32> to vector<1x14x384xf32>
    %472 = arith.mulf %470, %471 : vector<1x14x384xf32>
    %473 = arith.addf %469, %472 : vector<1x14x384xf32>
    %474 = vector.extract_strided_slice %466 {offsets = [0, 2, 0], sizes = [1, 14, 384], strides = [1, 1, 1]} : vector<1x16x384xf32> to vector<1x14x384xf32>
    %475 = vector.broadcast %17 : vector<1x1x384xf32> to vector<1x14x384xf32>
    %476 = arith.mulf %474, %475 : vector<1x14x384xf32>
    %477 = arith.addf %473, %476 : vector<1x14x384xf32>
    %478 = arith.addf %464, %477 : vector<1x14x384xf32>
    %c0_169 = arith.constant 0 : index
    %c11 = arith.constant 11 : index
    %c0_170 = arith.constant 0 : index
    %c0_171 = arith.constant 0 : index
    %479 = vector.load %arg1[%c0_169, %c11, %c0_170, %c0_171] : memref<1x16x16x384xf32, #tpu.memory_space<vmem>>, vector<1x1x16x384xf32>
    %480 = vector.shape_cast %479 : vector<1x1x16x384xf32> to vector<1x16x384xf32>
    %481 = vector.extract_strided_slice %480 {offsets = [0, 0, 0], sizes = [1, 14, 384], strides = [1, 1, 1]} : vector<1x16x384xf32> to vector<1x14x384xf32>
    %482 = vector.broadcast %20 : vector<1x1x384xf32> to vector<1x14x384xf32>
    %483 = arith.mulf %481, %482 : vector<1x14x384xf32>
    %484 = vector.extract_strided_slice %480 {offsets = [0, 1, 0], sizes = [1, 14, 384], strides = [1, 1, 1]} : vector<1x16x384xf32> to vector<1x14x384xf32>
    %485 = vector.broadcast %23 : vector<1x1x384xf32> to vector<1x14x384xf32>
    %486 = arith.mulf %484, %485 : vector<1x14x384xf32>
    %487 = arith.addf %483, %486 : vector<1x14x384xf32>
    %488 = vector.extract_strided_slice %480 {offsets = [0, 2, 0], sizes = [1, 14, 384], strides = [1, 1, 1]} : vector<1x16x384xf32> to vector<1x14x384xf32>
    %489 = vector.broadcast %26 : vector<1x1x384xf32> to vector<1x14x384xf32>
    %490 = arith.mulf %488, %489 : vector<1x14x384xf32>
    %491 = arith.addf %487, %490 : vector<1x14x384xf32>
    %492 = arith.addf %478, %491 : vector<1x14x384xf32>
    %c0_172 = arith.constant 0 : index
    %c9_173 = arith.constant 9 : index
    %c0_174 = arith.constant 0 : index
    %c0_175 = arith.constant 0 : index
    %493 = vector.load %arg5[%c0_172, %c9_173, %c0_174, %c0_175] : memref<1x14x14x384xf32, #tpu.memory_space<vmem>>, vector<1x1x14x384xf32>
    %494 = vector.shape_cast %493 : vector<1x1x14x384xf32> to vector<1x14x384xf32>
    %495 = vector.shape_cast %492 : vector<1x14x384xf32> to vector<1x1x14x384xf32>
    tpu.vector_store %arg5[%c0_172, %c9_173, %c0_174, %c0_175], %495 {strides = array<i32>} : memref<1x14x14x384xf32, #tpu.memory_space<vmem>>, vector<1x1x14x384xf32>,
    %496 = arith.addf %449, %492 : vector<1x14x384xf32>
    %497 = arith.mulf %492, %492 : vector<1x14x384xf32>
    %498 = arith.addf %451, %497 : vector<1x14x384xf32>
    %c0_176 = arith.constant 0 : index
    %c10_177 = arith.constant 10 : index
    %c0_178 = arith.constant 0 : index
    %c0_179 = arith.constant 0 : index
    %499 = vector.load %arg1[%c0_176, %c10_177, %c0_178, %c0_179] : memref<1x16x16x384xf32, #tpu.memory_space<vmem>>, vector<1x1x16x384xf32>
    %500 = vector.shape_cast %499 : vector<1x1x16x384xf32> to vector<1x16x384xf32>
    %501 = vector.extract_strided_slice %500 {offsets = [0, 0, 0], sizes = [1, 14, 384], strides = [1, 1, 1]} : vector<1x16x384xf32> to vector<1x14x384xf32>
    %502 = vector.broadcast %2 : vector<1x1x384xf32> to vector<1x14x384xf32>
    %503 = arith.mulf %501, %502 : vector<1x14x384xf32>
    %504 = vector.extract_strided_slice %500 {offsets = [0, 1, 0], sizes = [1, 14, 384], strides = [1, 1, 1]} : vector<1x16x384xf32> to vector<1x14x384xf32>
    %505 = vector.broadcast %5 : vector<1x1x384xf32> to vector<1x14x384xf32>
    %506 = arith.mulf %504, %505 : vector<1x14x384xf32>
    %507 = arith.addf %503, %506 : vector<1x14x384xf32>
    %508 = vector.extract_strided_slice %500 {offsets = [0, 2, 0], sizes = [1, 14, 384], strides = [1, 1, 1]} : vector<1x16x384xf32> to vector<1x14x384xf32>
    %509 = vector.broadcast %8 : vector<1x1x384xf32> to vector<1x14x384xf32>
    %510 = arith.mulf %508, %509 : vector<1x14x384xf32>
    %511 = arith.addf %507, %510 : vector<1x14x384xf32>
    %c0_180 = arith.constant 0 : index
    %c11_181 = arith.constant 11 : index
    %c0_182 = arith.constant 0 : index
    %c0_183 = arith.constant 0 : index
    %512 = vector.load %arg1[%c0_180, %c11_181, %c0_182, %c0_183] : memref<1x16x16x384xf32, #tpu.memory_space<vmem>>, vector<1x1x16x384xf32>
    %513 = vector.shape_cast %512 : vector<1x1x16x384xf32> to vector<1x16x384xf32>
    %514 = vector.extract_strided_slice %513 {offsets = [0, 0, 0], sizes = [1, 14, 384], strides = [1, 1, 1]} : vector<1x16x384xf32> to vector<1x14x384xf32>
    %515 = vector.broadcast %11 : vector<1x1x384xf32> to vector<1x14x384xf32>
    %516 = arith.mulf %514, %515 : vector<1x14x384xf32>
    %517 = vector.extract_strided_slice %513 {offsets = [0, 1, 0], sizes = [1, 14, 384], strides = [1, 1, 1]} : vector<1x16x384xf32> to vector<1x14x384xf32>
    %518 = vector.broadcast %14 : vector<1x1x384xf32> to vector<1x14x384xf32>
    %519 = arith.mulf %517, %518 : vector<1x14x384xf32>
    %520 = arith.addf %516, %519 : vector<1x14x384xf32>
    %521 = vector.extract_strided_slice %513 {offsets = [0, 2, 0], sizes = [1, 14, 384], strides = [1, 1, 1]} : vector<1x16x384xf32> to vector<1x14x384xf32>
    %522 = vector.broadcast %17 : vector<1x1x384xf32> to vector<1x14x384xf32>
    %523 = arith.mulf %521, %522 : vector<1x14x384xf32>
    %524 = arith.addf %520, %523 : vector<1x14x384xf32>
    %525 = arith.addf %511, %524 : vector<1x14x384xf32>
    %c0_184 = arith.constant 0 : index
    %c12 = arith.constant 12 : index
    %c0_185 = arith.constant 0 : index
    %c0_186 = arith.constant 0 : index
    %526 = vector.load %arg1[%c0_184, %c12, %c0_185, %c0_186] : memref<1x16x16x384xf32, #tpu.memory_space<vmem>>, vector<1x1x16x384xf32>
    %527 = vector.shape_cast %526 : vector<1x1x16x384xf32> to vector<1x16x384xf32>
    %528 = vector.extract_strided_slice %527 {offsets = [0, 0, 0], sizes = [1, 14, 384], strides = [1, 1, 1]} : vector<1x16x384xf32> to vector<1x14x384xf32>
    %529 = vector.broadcast %20 : vector<1x1x384xf32> to vector<1x14x384xf32>
    %530 = arith.mulf %528, %529 : vector<1x14x384xf32>
    %531 = vector.extract_strided_slice %527 {offsets = [0, 1, 0], sizes = [1, 14, 384], strides = [1, 1, 1]} : vector<1x16x384xf32> to vector<1x14x384xf32>
    %532 = vector.broadcast %23 : vector<1x1x384xf32> to vector<1x14x384xf32>
    %533 = arith.mulf %531, %532 : vector<1x14x384xf32>
    %534 = arith.addf %530, %533 : vector<1x14x384xf32>
    %535 = vector.extract_strided_slice %527 {offsets = [0, 2, 0], sizes = [1, 14, 384], strides = [1, 1, 1]} : vector<1x16x384xf32> to vector<1x14x384xf32>
    %536 = vector.broadcast %26 : vector<1x1x384xf32> to vector<1x14x384xf32>
    %537 = arith.mulf %535, %536 : vector<1x14x384xf32>
    %538 = arith.addf %534, %537 : vector<1x14x384xf32>
    %539 = arith.addf %525, %538 : vector<1x14x384xf32>
    %c0_187 = arith.constant 0 : index
    %c10_188 = arith.constant 10 : index
    %c0_189 = arith.constant 0 : index
    %c0_190 = arith.constant 0 : index
    %540 = vector.load %arg5[%c0_187, %c10_188, %c0_189, %c0_190] : memref<1x14x14x384xf32, #tpu.memory_space<vmem>>, vector<1x1x14x384xf32>
    %541 = vector.shape_cast %540 : vector<1x1x14x384xf32> to vector<1x14x384xf32>
    %542 = vector.shape_cast %539 : vector<1x14x384xf32> to vector<1x1x14x384xf32>
    tpu.vector_store %arg5[%c0_187, %c10_188, %c0_189, %c0_190], %542 {strides = array<i32>} : memref<1x14x14x384xf32, #tpu.memory_space<vmem>>, vector<1x1x14x384xf32>,
    %543 = arith.addf %496, %539 : vector<1x14x384xf32>
    %544 = arith.mulf %539, %539 : vector<1x14x384xf32>
    %545 = arith.addf %498, %544 : vector<1x14x384xf32>
    %c0_191 = arith.constant 0 : index
    %c11_192 = arith.constant 11 : index
    %c0_193 = arith.constant 0 : index
    %c0_194 = arith.constant 0 : index
    %546 = vector.load %arg1[%c0_191, %c11_192, %c0_193, %c0_194] : memref<1x16x16x384xf32, #tpu.memory_space<vmem>>, vector<1x1x16x384xf32>
    %547 = vector.shape_cast %546 : vector<1x1x16x384xf32> to vector<1x16x384xf32>
    %548 = vector.extract_strided_slice %547 {offsets = [0, 0, 0], sizes = [1, 14, 384], strides = [1, 1, 1]} : vector<1x16x384xf32> to vector<1x14x384xf32>
    %549 = vector.broadcast %2 : vector<1x1x384xf32> to vector<1x14x384xf32>
    %550 = arith.mulf %548, %549 : vector<1x14x384xf32>
    %551 = vector.extract_strided_slice %547 {offsets = [0, 1, 0], sizes = [1, 14, 384], strides = [1, 1, 1]} : vector<1x16x384xf32> to vector<1x14x384xf32>
    %552 = vector.broadcast %5 : vector<1x1x384xf32> to vector<1x14x384xf32>
    %553 = arith.mulf %551, %552 : vector<1x14x384xf32>
    %554 = arith.addf %550, %553 : vector<1x14x384xf32>
    %555 = vector.extract_strided_slice %547 {offsets = [0, 2, 0], sizes = [1, 14, 384], strides = [1, 1, 1]} : vector<1x16x384xf32> to vector<1x14x384xf32>
    %556 = vector.broadcast %8 : vector<1x1x384xf32> to vector<1x14x384xf32>
    %557 = arith.mulf %555, %556 : vector<1x14x384xf32>
    %558 = arith.addf %554, %557 : vector<1x14x384xf32>
    %c0_195 = arith.constant 0 : index
    %c12_196 = arith.constant 12 : index
    %c0_197 = arith.constant 0 : index
    %c0_198 = arith.constant 0 : index
    %559 = vector.load %arg1[%c0_195, %c12_196, %c0_197, %c0_198] : memref<1x16x16x384xf32, #tpu.memory_space<vmem>>, vector<1x1x16x384xf32>
    %560 = vector.shape_cast %559 : vector<1x1x16x384xf32> to vector<1x16x384xf32>
    %561 = vector.extract_strided_slice %560 {offsets = [0, 0, 0], sizes = [1, 14, 384], strides = [1, 1, 1]} : vector<1x16x384xf32> to vector<1x14x384xf32>
    %562 = vector.broadcast %11 : vector<1x1x384xf32> to vector<1x14x384xf32>
    %563 = arith.mulf %561, %562 : vector<1x14x384xf32>
    %564 = vector.extract_strided_slice %560 {offsets = [0, 1, 0], sizes = [1, 14, 384], strides = [1, 1, 1]} : vector<1x16x384xf32> to vector<1x14x384xf32>
    %565 = vector.broadcast %14 : vector<1x1x384xf32> to vector<1x14x384xf32>
    %566 = arith.mulf %564, %565 : vector<1x14x384xf32>
    %567 = arith.addf %563, %566 : vector<1x14x384xf32>
    %568 = vector.extract_strided_slice %560 {offsets = [0, 2, 0], sizes = [1, 14, 384], strides = [1, 1, 1]} : vector<1x16x384xf32> to vector<1x14x384xf32>
    %569 = vector.broadcast %17 : vector<1x1x384xf32> to vector<1x14x384xf32>
    %570 = arith.mulf %568, %569 : vector<1x14x384xf32>
    %571 = arith.addf %567, %570 : vector<1x14x384xf32>
    %572 = arith.addf %558, %571 : vector<1x14x384xf32>
    %c0_199 = arith.constant 0 : index
    %c13 = arith.constant 13 : index
    %c0_200 = arith.constant 0 : index
    %c0_201 = arith.constant 0 : index
    %573 = vector.load %arg1[%c0_199, %c13, %c0_200, %c0_201] : memref<1x16x16x384xf32, #tpu.memory_space<vmem>>, vector<1x1x16x384xf32>
    %574 = vector.shape_cast %573 : vector<1x1x16x384xf32> to vector<1x16x384xf32>
    %575 = vector.extract_strided_slice %574 {offsets = [0, 0, 0], sizes = [1, 14, 384], strides = [1, 1, 1]} : vector<1x16x384xf32> to vector<1x14x384xf32>
    %576 = vector.broadcast %20 : vector<1x1x384xf32> to vector<1x14x384xf32>
    %577 = arith.mulf %575, %576 : vector<1x14x384xf32>
    %578 = vector.extract_strided_slice %574 {offsets = [0, 1, 0], sizes = [1, 14, 384], strides = [1, 1, 1]} : vector<1x16x384xf32> to vector<1x14x384xf32>
    %579 = vector.broadcast %23 : vector<1x1x384xf32> to vector<1x14x384xf32>
    %580 = arith.mulf %578, %579 : vector<1x14x384xf32>
    %581 = arith.addf %577, %580 : vector<1x14x384xf32>
    %582 = vector.extract_strided_slice %574 {offsets = [0, 2, 0], sizes = [1, 14, 384], strides = [1, 1, 1]} : vector<1x16x384xf32> to vector<1x14x384xf32>
    %583 = vector.broadcast %26 : vector<1x1x384xf32> to vector<1x14x384xf32>
    %584 = arith.mulf %582, %583 : vector<1x14x384xf32>
    %585 = arith.addf %581, %584 : vector<1x14x384xf32>
    %586 = arith.addf %572, %585 : vector<1x14x384xf32>
    %c0_202 = arith.constant 0 : index
    %c11_203 = arith.constant 11 : index
    %c0_204 = arith.constant 0 : index
    %c0_205 = arith.constant 0 : index
    %587 = vector.load %arg5[%c0_202, %c11_203, %c0_204, %c0_205] : memref<1x14x14x384xf32, #tpu.memory_space<vmem>>, vector<1x1x14x384xf32>
    %588 = vector.shape_cast %587 : vector<1x1x14x384xf32> to vector<1x14x384xf32>
    %589 = vector.shape_cast %586 : vector<1x14x384xf32> to vector<1x1x14x384xf32>
    tpu.vector_store %arg5[%c0_202, %c11_203, %c0_204, %c0_205], %589 {strides = array<i32>} : memref<1x14x14x384xf32, #tpu.memory_space<vmem>>, vector<1x1x14x384xf32>,
    %590 = arith.addf %543, %586 : vector<1x14x384xf32>
    %591 = arith.mulf %586, %586 : vector<1x14x384xf32>
    %592 = arith.addf %545, %591 : vector<1x14x384xf32>
    %c0_206 = arith.constant 0 : index
    %c12_207 = arith.constant 12 : index
    %c0_208 = arith.constant 0 : index
    %c0_209 = arith.constant 0 : index
    %593 = vector.load %arg1[%c0_206, %c12_207, %c0_208, %c0_209] : memref<1x16x16x384xf32, #tpu.memory_space<vmem>>, vector<1x1x16x384xf32>
    %594 = vector.shape_cast %593 : vector<1x1x16x384xf32> to vector<1x16x384xf32>
    %595 = vector.extract_strided_slice %594 {offsets = [0, 0, 0], sizes = [1, 14, 384], strides = [1, 1, 1]} : vector<1x16x384xf32> to vector<1x14x384xf32>
    %596 = vector.broadcast %2 : vector<1x1x384xf32> to vector<1x14x384xf32>
    %597 = arith.mulf %595, %596 : vector<1x14x384xf32>
    %598 = vector.extract_strided_slice %594 {offsets = [0, 1, 0], sizes = [1, 14, 384], strides = [1, 1, 1]} : vector<1x16x384xf32> to vector<1x14x384xf32>
    %599 = vector.broadcast %5 : vector<1x1x384xf32> to vector<1x14x384xf32>
    %600 = arith.mulf %598, %599 : vector<1x14x384xf32>
    %601 = arith.addf %597, %600 : vector<1x14x384xf32>
    %602 = vector.extract_strided_slice %594 {offsets = [0, 2, 0], sizes = [1, 14, 384], strides = [1, 1, 1]} : vector<1x16x384xf32> to vector<1x14x384xf32>
    %603 = vector.broadcast %8 : vector<1x1x384xf32> to vector<1x14x384xf32>
    %604 = arith.mulf %602, %603 : vector<1x14x384xf32>
    %605 = arith.addf %601, %604 : vector<1x14x384xf32>
    %c0_210 = arith.constant 0 : index
    %c13_211 = arith.constant 13 : index
    %c0_212 = arith.constant 0 : index
    %c0_213 = arith.constant 0 : index
    %606 = vector.load %arg1[%c0_210, %c13_211, %c0_212, %c0_213] : memref<1x16x16x384xf32, #tpu.memory_space<vmem>>, vector<1x1x16x384xf32>
    %607 = vector.shape_cast %606 : vector<1x1x16x384xf32> to vector<1x16x384xf32>
    %608 = vector.extract_strided_slice %607 {offsets = [0, 0, 0], sizes = [1, 14, 384], strides = [1, 1, 1]} : vector<1x16x384xf32> to vector<1x14x384xf32>
    %609 = vector.broadcast %11 : vector<1x1x384xf32> to vector<1x14x384xf32>
    %610 = arith.mulf %608, %609 : vector<1x14x384xf32>
    %611 = vector.extract_strided_slice %607 {offsets = [0, 1, 0], sizes = [1, 14, 384], strides = [1, 1, 1]} : vector<1x16x384xf32> to vector<1x14x384xf32>
    %612 = vector.broadcast %14 : vector<1x1x384xf32> to vector<1x14x384xf32>
    %613 = arith.mulf %611, %612 : vector<1x14x384xf32>
    %614 = arith.addf %610, %613 : vector<1x14x384xf32>
    %615 = vector.extract_strided_slice %607 {offsets = [0, 2, 0], sizes = [1, 14, 384], strides = [1, 1, 1]} : vector<1x16x384xf32> to vector<1x14x384xf32>
    %616 = vector.broadcast %17 : vector<1x1x384xf32> to vector<1x14x384xf32>
    %617 = arith.mulf %615, %616 : vector<1x14x384xf32>
    %618 = arith.addf %614, %617 : vector<1x14x384xf32>
    %619 = arith.addf %605, %618 : vector<1x14x384xf32>
    %c0_214 = arith.constant 0 : index
    %c14 = arith.constant 14 : index
    %c0_215 = arith.constant 0 : index
    %c0_216 = arith.constant 0 : index
    %620 = vector.load %arg1[%c0_214, %c14, %c0_215, %c0_216] : memref<1x16x16x384xf32, #tpu.memory_space<vmem>>, vector<1x1x16x384xf32>
    %621 = vector.shape_cast %620 : vector<1x1x16x384xf32> to vector<1x16x384xf32>
    %622 = vector.extract_strided_slice %621 {offsets = [0, 0, 0], sizes = [1, 14, 384], strides = [1, 1, 1]} : vector<1x16x384xf32> to vector<1x14x384xf32>
    %623 = vector.broadcast %20 : vector<1x1x384xf32> to vector<1x14x384xf32>
    %624 = arith.mulf %622, %623 : vector<1x14x384xf32>
    %625 = vector.extract_strided_slice %621 {offsets = [0, 1, 0], sizes = [1, 14, 384], strides = [1, 1, 1]} : vector<1x16x384xf32> to vector<1x14x384xf32>
    %626 = vector.broadcast %23 : vector<1x1x384xf32> to vector<1x14x384xf32>
    %627 = arith.mulf %625, %626 : vector<1x14x384xf32>
    %628 = arith.addf %624, %627 : vector<1x14x384xf32>
    %629 = vector.extract_strided_slice %621 {offsets = [0, 2, 0], sizes = [1, 14, 384], strides = [1, 1, 1]} : vector<1x16x384xf32> to vector<1x14x384xf32>
    %630 = vector.broadcast %26 : vector<1x1x384xf32> to vector<1x14x384xf32>
    %631 = arith.mulf %629, %630 : vector<1x14x384xf32>
    %632 = arith.addf %628, %631 : vector<1x14x384xf32>
    %633 = arith.addf %619, %632 : vector<1x14x384xf32>
    %c0_217 = arith.constant 0 : index
    %c12_218 = arith.constant 12 : index
    %c0_219 = arith.constant 0 : index
    %c0_220 = arith.constant 0 : index
    %634 = vector.load %arg5[%c0_217, %c12_218, %c0_219, %c0_220] : memref<1x14x14x384xf32, #tpu.memory_space<vmem>>, vector<1x1x14x384xf32>
    %635 = vector.shape_cast %634 : vector<1x1x14x384xf32> to vector<1x14x384xf32>
    %636 = vector.shape_cast %633 : vector<1x14x384xf32> to vector<1x1x14x384xf32>
    tpu.vector_store %arg5[%c0_217, %c12_218, %c0_219, %c0_220], %636 {strides = array<i32>} : memref<1x14x14x384xf32, #tpu.memory_space<vmem>>, vector<1x1x14x384xf32>,
    %637 = arith.addf %590, %633 : vector<1x14x384xf32>
    %638 = arith.mulf %633, %633 : vector<1x14x384xf32>
    %639 = arith.addf %592, %638 : vector<1x14x384xf32>
    %c0_221 = arith.constant 0 : index
    %c13_222 = arith.constant 13 : index
    %c0_223 = arith.constant 0 : index
    %c0_224 = arith.constant 0 : index
    %640 = vector.load %arg1[%c0_221, %c13_222, %c0_223, %c0_224] : memref<1x16x16x384xf32, #tpu.memory_space<vmem>>, vector<1x1x16x384xf32>
    %641 = vector.shape_cast %640 : vector<1x1x16x384xf32> to vector<1x16x384xf32>
    %642 = vector.extract_strided_slice %641 {offsets = [0, 0, 0], sizes = [1, 14, 384], strides = [1, 1, 1]} : vector<1x16x384xf32> to vector<1x14x384xf32>
    %643 = vector.broadcast %2 : vector<1x1x384xf32> to vector<1x14x384xf32>
    %644 = arith.mulf %642, %643 : vector<1x14x384xf32>
    %645 = vector.extract_strided_slice %641 {offsets = [0, 1, 0], sizes = [1, 14, 384], strides = [1, 1, 1]} : vector<1x16x384xf32> to vector<1x14x384xf32>
    %646 = vector.broadcast %5 : vector<1x1x384xf32> to vector<1x14x384xf32>
    %647 = arith.mulf %645, %646 : vector<1x14x384xf32>
    %648 = arith.addf %644, %647 : vector<1x14x384xf32>
    %649 = vector.extract_strided_slice %641 {offsets = [0, 2, 0], sizes = [1, 14, 384], strides = [1, 1, 1]} : vector<1x16x384xf32> to vector<1x14x384xf32>
    %650 = vector.broadcast %8 : vector<1x1x384xf32> to vector<1x14x384xf32>
    %651 = arith.mulf %649, %650 : vector<1x14x384xf32>
    %652 = arith.addf %648, %651 : vector<1x14x384xf32>
    %c0_225 = arith.constant 0 : index
    %c14_226 = arith.constant 14 : index
    %c0_227 = arith.constant 0 : index
    %c0_228 = arith.constant 0 : index
    %653 = vector.load %arg1[%c0_225, %c14_226, %c0_227, %c0_228] : memref<1x16x16x384xf32, #tpu.memory_space<vmem>>, vector<1x1x16x384xf32>
    %654 = vector.shape_cast %653 : vector<1x1x16x384xf32> to vector<1x16x384xf32>
    %655 = vector.extract_strided_slice %654 {offsets = [0, 0, 0], sizes = [1, 14, 384], strides = [1, 1, 1]} : vector<1x16x384xf32> to vector<1x14x384xf32>
    %656 = vector.broadcast %11 : vector<1x1x384xf32> to vector<1x14x384xf32>
    %657 = arith.mulf %655, %656 : vector<1x14x384xf32>
    %658 = vector.extract_strided_slice %654 {offsets = [0, 1, 0], sizes = [1, 14, 384], strides = [1, 1, 1]} : vector<1x16x384xf32> to vector<1x14x384xf32>
    %659 = vector.broadcast %14 : vector<1x1x384xf32> to vector<1x14x384xf32>
    %660 = arith.mulf %658, %659 : vector<1x14x384xf32>
    %661 = arith.addf %657, %660 : vector<1x14x384xf32>
    %662 = vector.extract_strided_slice %654 {offsets = [0, 2, 0], sizes = [1, 14, 384], strides = [1, 1, 1]} : vector<1x16x384xf32> to vector<1x14x384xf32>
    %663 = vector.broadcast %17 : vector<1x1x384xf32> to vector<1x14x384xf32>
    %664 = arith.mulf %662, %663 : vector<1x14x384xf32>
    %665 = arith.addf %661, %664 : vector<1x14x384xf32>
    %666 = arith.addf %652, %665 : vector<1x14x384xf32>
    %c0_229 = arith.constant 0 : index
    %c15 = arith.constant 15 : index
    %c0_230 = arith.constant 0 : index
    %c0_231 = arith.constant 0 : index
    %667 = vector.load %arg1[%c0_229, %c15, %c0_230, %c0_231] : memref<1x16x16x384xf32, #tpu.memory_space<vmem>>, vector<1x1x16x384xf32>
    %668 = vector.shape_cast %667 : vector<1x1x16x384xf32> to vector<1x16x384xf32>
    %669 = vector.extract_strided_slice %668 {offsets = [0, 0, 0], sizes = [1, 14, 384], strides = [1, 1, 1]} : vector<1x16x384xf32> to vector<1x14x384xf32>
    %670 = vector.broadcast %20 : vector<1x1x384xf32> to vector<1x14x384xf32>
    %671 = arith.mulf %669, %670 : vector<1x14x384xf32>
    %672 = vector.extract_strided_slice %668 {offsets = [0, 1, 0], sizes = [1, 14, 384], strides = [1, 1, 1]} : vector<1x16x384xf32> to vector<1x14x384xf32>
    %673 = vector.broadcast %23 : vector<1x1x384xf32> to vector<1x14x384xf32>
    %674 = arith.mulf %672, %673 : vector<1x14x384xf32>
    %675 = arith.addf %671, %674 : vector<1x14x384xf32>
    %676 = vector.extract_strided_slice %668 {offsets = [0, 2, 0], sizes = [1, 14, 384], strides = [1, 1, 1]} : vector<1x16x384xf32> to vector<1x14x384xf32>
    %677 = vector.broadcast %26 : vector<1x1x384xf32> to vector<1x14x384xf32>
    %678 = arith.mulf %676, %677 : vector<1x14x384xf32>
    %679 = arith.addf %675, %678 : vector<1x14x384xf32>
    %680 = arith.addf %666, %679 : vector<1x14x384xf32>
    %c0_232 = arith.constant 0 : index
    %c13_233 = arith.constant 13 : index
    %c0_234 = arith.constant 0 : index
    %c0_235 = arith.constant 0 : index
    %681 = vector.load %arg5[%c0_232, %c13_233, %c0_234, %c0_235] : memref<1x14x14x384xf32, #tpu.memory_space<vmem>>, vector<1x1x14x384xf32>
    %682 = vector.shape_cast %681 : vector<1x1x14x384xf32> to vector<1x14x384xf32>
    %683 = vector.shape_cast %680 : vector<1x14x384xf32> to vector<1x1x14x384xf32>
    tpu.vector_store %arg5[%c0_232, %c13_233, %c0_234, %c0_235], %683 {strides = array<i32>} : memref<1x14x14x384xf32, #tpu.memory_space<vmem>>, vector<1x1x14x384xf32>,
    %684 = arith.addf %637, %680 : vector<1x14x384xf32>
    %685 = arith.mulf %680, %680 : vector<1x14x384xf32>
    %686 = arith.addf %639, %685 : vector<1x14x384xf32>
    %cst_236 = arith.constant dense<0.000000e+00> : vector<384xf32>
    %687 = vector.multi_reduction <add>, %684, %cst_236 [0, 1] : vector<1x14x384xf32> to vector<384xf32>
    %688 = vector.shape_cast %687 : vector<384xf32> to vector<1x1x384xf32>
    %cst_237 = arith.constant 0.00510204071 : f32
    %689 = vector.broadcast %cst_237 : f32 to vector<1x1x384xf32>
    %690 = arith.mulf %688, %689 : vector<1x1x384xf32>
    %cst_238 = arith.constant dense<0.000000e+00> : vector<384xf32>
    %691 = vector.multi_reduction <add>, %686, %cst_238 [0, 1] : vector<1x14x384xf32> to vector<384xf32>
    %692 = vector.shape_cast %691 : vector<384xf32> to vector<1x1x384xf32>
    %cst_239 = arith.constant 0.00510204071 : f32
    %693 = vector.broadcast %cst_239 : f32 to vector<1x1x384xf32>
    %694 = arith.mulf %692, %693 : vector<1x1x384xf32>
    %695 = arith.mulf %690, %690 : vector<1x1x384xf32>
    %696 = arith.subf %694, %695 : vector<1x1x384xf32>
    %cst_240 = arith.constant 0.000000e+00 : f32
    %697 = vector.broadcast %cst_240 : f32 to vector<1x1x384xf32>
    %698 = arith.maximumf %696, %697 : vector<1x1x384xf32>
    %c0_241 = arith.constant 0 : index
    %c0_242 = arith.constant 0 : index
    %699 = vector.load %arg3[%c0_241, %c0_242] : memref<1x384xf32, #tpu.memory_space<vmem>>, vector<1x384xf32>
    %700 = vector.shape_cast %699 : vector<1x384xf32> to vector<1x1x384xf32>
    %cst_243 = arith.constant 1.000000e-03 : f32
    %701 = vector.broadcast %cst_243 : f32 to vector<1x1x384xf32>
    %702 = arith.addf %698, %701 : vector<1x1x384xf32>
    %703 = math.rsqrt %702 : vector<1x1x384xf32>
    %704 = arith.mulf %700, %703 : vector<1x1x384xf32>
    %c0_244 = arith.constant 0 : index
    %c0_245 = arith.constant 0 : index
    %705 = vector.load %arg4[%c0_244, %c0_245] : memref<1x384xf32, #tpu.memory_space<vmem>>, vector<1x384xf32>
    %706 = vector.shape_cast %705 : vector<1x384xf32> to vector<1x1x384xf32>
    %707 = arith.mulf %690, %704 : vector<1x1x384xf32>
    %708 = arith.subf %706, %707 : vector<1x1x384xf32>
    %c0_246 = arith.constant 0 : index
    %c0_247 = arith.constant 0 : index
    %c0_248 = arith.constant 0 : index
    %c0_249 = arith.constant 0 : index
    %709 = vector.load %arg5[%c0_246, %c0_247, %c0_248, %c0_249] : memref<1x14x14x384xf32, #tpu.memory_space<vmem>>, vector<1x1x14x384xf32>
    %710 = vector.shape_cast %709 : vector<1x1x14x384xf32> to vector<1x14x384xf32>
    %711 = vector.broadcast %704 : vector<1x1x384xf32> to vector<1x14x384xf32>
    %712 = arith.mulf %710, %711 : vector<1x14x384xf32>
    %713 = vector.broadcast %708 : vector<1x1x384xf32> to vector<1x14x384xf32>
    %714 = arith.addf %712, %713 : vector<1x14x384xf32>
    %c0_250 = arith.constant 0 : index
    %c0_251 = arith.constant 0 : index
    %c0_252 = arith.constant 0 : index
    %c0_253 = arith.constant 0 : index
    %715 = vector.load %arg5[%c0_250, %c0_251, %c0_252, %c0_253] : memref<1x14x14x384xf32, #tpu.memory_space<vmem>>, vector<1x1x14x384xf32>
    %716 = vector.shape_cast %715 : vector<1x1x14x384xf32> to vector<1x14x384xf32>
    %717 = vector.shape_cast %714 : vector<1x14x384xf32> to vector<1x1x14x384xf32>
    tpu.vector_store %arg5[%c0_250, %c0_251, %c0_252, %c0_253], %717 {strides = array<i32>} : memref<1x14x14x384xf32, #tpu.memory_space<vmem>>, vector<1x1x14x384xf32>,
    %c0_254 = arith.constant 0 : index
    %c1_255 = arith.constant 1 : index
    %c0_256 = arith.constant 0 : index
    %c0_257 = arith.constant 0 : index
    %718 = vector.load %arg5[%c0_254, %c1_255, %c0_256, %c0_257] : memref<1x14x14x384xf32, #tpu.memory_space<vmem>>, vector<1x1x14x384xf32>
    %719 = vector.shape_cast %718 : vector<1x1x14x384xf32> to vector<1x14x384xf32>
    %720 = vector.broadcast %704 : vector<1x1x384xf32> to vector<1x14x384xf32>
    %721 = arith.mulf %719, %720 : vector<1x14x384xf32>
    %722 = vector.broadcast %708 : vector<1x1x384xf32> to vector<1x14x384xf32>
    %723 = arith.addf %721, %722 : vector<1x14x384xf32>
    %c0_258 = arith.constant 0 : index
    %c1_259 = arith.constant 1 : index
    %c0_260 = arith.constant 0 : index
    %c0_261 = arith.constant 0 : index
    %724 = vector.load %arg5[%c0_258, %c1_259, %c0_260, %c0_261] : memref<1x14x14x384xf32, #tpu.memory_space<vmem>>, vector<1x1x14x384xf32>
    %725 = vector.shape_cast %724 : vector<1x1x14x384xf32> to vector<1x14x384xf32>
    %726 = vector.shape_cast %723 : vector<1x14x384xf32> to vector<1x1x14x384xf32>
    tpu.vector_store %arg5[%c0_258, %c1_259, %c0_260, %c0_261], %726 {strides = array<i32>} : memref<1x14x14x384xf32, #tpu.memory_space<vmem>>, vector<1x1x14x384xf32>,
    %c0_262 = arith.constant 0 : index
    %c2_263 = arith.constant 2 : index
    %c0_264 = arith.constant 0 : index
    %c0_265 = arith.constant 0 : index
    %727 = vector.load %arg5[%c0_262, %c2_263, %c0_264, %c0_265] : memref<1x14x14x384xf32, #tpu.memory_space<vmem>>, vector<1x1x14x384xf32>
    %728 = vector.shape_cast %727 : vector<1x1x14x384xf32> to vector<1x14x384xf32>
    %729 = vector.broadcast %704 : vector<1x1x384xf32> to vector<1x14x384xf32>
    %730 = arith.mulf %728, %729 : vector<1x14x384xf32>
    %731 = vector.broadcast %708 : vector<1x1x384xf32> to vector<1x14x384xf32>
    %732 = arith.addf %730, %731 : vector<1x14x384xf32>
    %c0_266 = arith.constant 0 : index
    %c2_267 = arith.constant 2 : index
    %c0_268 = arith.constant 0 : index
    %c0_269 = arith.constant 0 : index
    %733 = vector.load %arg5[%c0_266, %c2_267, %c0_268, %c0_269] : memref<1x14x14x384xf32, #tpu.memory_space<vmem>>, vector<1x1x14x384xf32>
    %734 = vector.shape_cast %733 : vector<1x1x14x384xf32> to vector<1x14x384xf32>
    %735 = vector.shape_cast %732 : vector<1x14x384xf32> to vector<1x1x14x384xf32>
    tpu.vector_store %arg5[%c0_266, %c2_267, %c0_268, %c0_269], %735 {strides = array<i32>} : memref<1x14x14x384xf32, #tpu.memory_space<vmem>>, vector<1x1x14x384xf32>,
    %c0_270 = arith.constant 0 : index
    %c3_271 = arith.constant 3 : index
    %c0_272 = arith.constant 0 : index
    %c0_273 = arith.constant 0 : index
    %736 = vector.load %arg5[%c0_270, %c3_271, %c0_272, %c0_273] : memref<1x14x14x384xf32, #tpu.memory_space<vmem>>, vector<1x1x14x384xf32>
    %737 = vector.shape_cast %736 : vector<1x1x14x384xf32> to vector<1x14x384xf32>
    %738 = vector.broadcast %704 : vector<1x1x384xf32> to vector<1x14x384xf32>
    %739 = arith.mulf %737, %738 : vector<1x14x384xf32>
    %740 = vector.broadcast %708 : vector<1x1x384xf32> to vector<1x14x384xf32>
    %741 = arith.addf %739, %740 : vector<1x14x384xf32>
    %c0_274 = arith.constant 0 : index
    %c3_275 = arith.constant 3 : index
    %c0_276 = arith.constant 0 : index
    %c0_277 = arith.constant 0 : index
    %742 = vector.load %arg5[%c0_274, %c3_275, %c0_276, %c0_277] : memref<1x14x14x384xf32, #tpu.memory_space<vmem>>, vector<1x1x14x384xf32>
    %743 = vector.shape_cast %742 : vector<1x1x14x384xf32> to vector<1x14x384xf32>
    %744 = vector.shape_cast %741 : vector<1x14x384xf32> to vector<1x1x14x384xf32>
    tpu.vector_store %arg5[%c0_274, %c3_275, %c0_276, %c0_277], %744 {strides = array<i32>} : memref<1x14x14x384xf32, #tpu.memory_space<vmem>>, vector<1x1x14x384xf32>,
    %c0_278 = arith.constant 0 : index
    %c4_279 = arith.constant 4 : index
    %c0_280 = arith.constant 0 : index
    %c0_281 = arith.constant 0 : index
    %745 = vector.load %arg5[%c0_278, %c4_279, %c0_280, %c0_281] : memref<1x14x14x384xf32, #tpu.memory_space<vmem>>, vector<1x1x14x384xf32>
    %746 = vector.shape_cast %745 : vector<1x1x14x384xf32> to vector<1x14x384xf32>
    %747 = vector.broadcast %704 : vector<1x1x384xf32> to vector<1x14x384xf32>
    %748 = arith.mulf %746, %747 : vector<1x14x384xf32>
    %749 = vector.broadcast %708 : vector<1x1x384xf32> to vector<1x14x384xf32>
    %750 = arith.addf %748, %749 : vector<1x14x384xf32>
    %c0_282 = arith.constant 0 : index
    %c4_283 = arith.constant 4 : index
    %c0_284 = arith.constant 0 : index
    %c0_285 = arith.constant 0 : index
    %751 = vector.load %arg5[%c0_282, %c4_283, %c0_284, %c0_285] : memref<1x14x14x384xf32, #tpu.memory_space<vmem>>, vector<1x1x14x384xf32>
    %752 = vector.shape_cast %751 : vector<1x1x14x384xf32> to vector<1x14x384xf32>
    %753 = vector.shape_cast %750 : vector<1x14x384xf32> to vector<1x1x14x384xf32>
    tpu.vector_store %arg5[%c0_282, %c4_283, %c0_284, %c0_285], %753 {strides = array<i32>} : memref<1x14x14x384xf32, #tpu.memory_space<vmem>>, vector<1x1x14x384xf32>,
    %c0_286 = arith.constant 0 : index
    %c5_287 = arith.constant 5 : index
    %c0_288 = arith.constant 0 : index
    %c0_289 = arith.constant 0 : index
    %754 = vector.load %arg5[%c0_286, %c5_287, %c0_288, %c0_289] : memref<1x14x14x384xf32, #tpu.memory_space<vmem>>, vector<1x1x14x384xf32>
    %755 = vector.shape_cast %754 : vector<1x1x14x384xf32> to vector<1x14x384xf32>
    %756 = vector.broadcast %704 : vector<1x1x384xf32> to vector<1x14x384xf32>
    %757 = arith.mulf %755, %756 : vector<1x14x384xf32>
    %758 = vector.broadcast %708 : vector<1x1x384xf32> to vector<1x14x384xf32>
    %759 = arith.addf %757, %758 : vector<1x14x384xf32>
    %c0_290 = arith.constant 0 : index
    %c5_291 = arith.constant 5 : index
    %c0_292 = arith.constant 0 : index
    %c0_293 = arith.constant 0 : index
    %760 = vector.load %arg5[%c0_290, %c5_291, %c0_292, %c0_293] : memref<1x14x14x384xf32, #tpu.memory_space<vmem>>, vector<1x1x14x384xf32>
    %761 = vector.shape_cast %760 : vector<1x1x14x384xf32> to vector<1x14x384xf32>
    %762 = vector.shape_cast %759 : vector<1x14x384xf32> to vector<1x1x14x384xf32>
    tpu.vector_store %arg5[%c0_290, %c5_291, %c0_292, %c0_293], %762 {strides = array<i32>} : memref<1x14x14x384xf32, #tpu.memory_space<vmem>>, vector<1x1x14x384xf32>,
    %c0_294 = arith.constant 0 : index
    %c6_295 = arith.constant 6 : index
    %c0_296 = arith.constant 0 : index
    %c0_297 = arith.constant 0 : index
    %763 = vector.load %arg5[%c0_294, %c6_295, %c0_296, %c0_297] : memref<1x14x14x384xf32, #tpu.memory_space<vmem>>, vector<1x1x14x384xf32>
    %764 = vector.shape_cast %763 : vector<1x1x14x384xf32> to vector<1x14x384xf32>
    %765 = vector.broadcast %704 : vector<1x1x384xf32> to vector<1x14x384xf32>
    %766 = arith.mulf %764, %765 : vector<1x14x384xf32>
    %767 = vector.broadcast %708 : vector<1x1x384xf32> to vector<1x14x384xf32>
    %768 = arith.addf %766, %767 : vector<1x14x384xf32>
    %c0_298 = arith.constant 0 : index
    %c6_299 = arith.constant 6 : index
    %c0_300 = arith.constant 0 : index
    %c0_301 = arith.constant 0 : index
    %769 = vector.load %arg5[%c0_298, %c6_299, %c0_300, %c0_301] : memref<1x14x14x384xf32, #tpu.memory_space<vmem>>, vector<1x1x14x384xf32>
    %770 = vector.shape_cast %769 : vector<1x1x14x384xf32> to vector<1x14x384xf32>
    %771 = vector.shape_cast %768 : vector<1x14x384xf32> to vector<1x1x14x384xf32>
    tpu.vector_store %arg5[%c0_298, %c6_299, %c0_300, %c0_301], %771 {strides = array<i32>} : memref<1x14x14x384xf32, #tpu.memory_space<vmem>>, vector<1x1x14x384xf32>,
    %c0_302 = arith.constant 0 : index
    %c7_303 = arith.constant 7 : index
    %c0_304 = arith.constant 0 : index
    %c0_305 = arith.constant 0 : index
    %772 = vector.load %arg5[%c0_302, %c7_303, %c0_304, %c0_305] : memref<1x14x14x384xf32, #tpu.memory_space<vmem>>, vector<1x1x14x384xf32>
    %773 = vector.shape_cast %772 : vector<1x1x14x384xf32> to vector<1x14x384xf32>
    %774 = vector.broadcast %704 : vector<1x1x384xf32> to vector<1x14x384xf32>
    %775 = arith.mulf %773, %774 : vector<1x14x384xf32>
    %776 = vector.broadcast %708 : vector<1x1x384xf32> to vector<1x14x384xf32>
    %777 = arith.addf %775, %776 : vector<1x14x384xf32>
    %c0_306 = arith.constant 0 : index
    %c7_307 = arith.constant 7 : index
    %c0_308 = arith.constant 0 : index
    %c0_309 = arith.constant 0 : index
    %778 = vector.load %arg5[%c0_306, %c7_307, %c0_308, %c0_309] : memref<1x14x14x384xf32, #tpu.memory_space<vmem>>, vector<1x1x14x384xf32>
    %779 = vector.shape_cast %778 : vector<1x1x14x384xf32> to vector<1x14x384xf32>
    %780 = vector.shape_cast %777 : vector<1x14x384xf32> to vector<1x1x14x384xf32>
    tpu.vector_store %arg5[%c0_306, %c7_307, %c0_308, %c0_309], %780 {strides = array<i32>} : memref<1x14x14x384xf32, #tpu.memory_space<vmem>>, vector<1x1x14x384xf32>,
    %c0_310 = arith.constant 0 : index
    %c8_311 = arith.constant 8 : index
    %c0_312 = arith.constant 0 : index
    %c0_313 = arith.constant 0 : index
    %781 = vector.load %arg5[%c0_310, %c8_311, %c0_312, %c0_313] : memref<1x14x14x384xf32, #tpu.memory_space<vmem>>, vector<1x1x14x384xf32>
    %782 = vector.shape_cast %781 : vector<1x1x14x384xf32> to vector<1x14x384xf32>
    %783 = vector.broadcast %704 : vector<1x1x384xf32> to vector<1x14x384xf32>
    %784 = arith.mulf %782, %783 : vector<1x14x384xf32>
    %785 = vector.broadcast %708 : vector<1x1x384xf32> to vector<1x14x384xf32>
    %786 = arith.addf %784, %785 : vector<1x14x384xf32>
    %c0_314 = arith.constant 0 : index
    %c8_315 = arith.constant 8 : index
    %c0_316 = arith.constant 0 : index
    %c0_317 = arith.constant 0 : index
    %787 = vector.load %arg5[%c0_314, %c8_315, %c0_316, %c0_317] : memref<1x14x14x384xf32, #tpu.memory_space<vmem>>, vector<1x1x14x384xf32>
    %788 = vector.shape_cast %787 : vector<1x1x14x384xf32> to vector<1x14x384xf32>
    %789 = vector.shape_cast %786 : vector<1x14x384xf32> to vector<1x1x14x384xf32>
    tpu.vector_store %arg5[%c0_314, %c8_315, %c0_316, %c0_317], %789 {strides = array<i32>} : memref<1x14x14x384xf32, #tpu.memory_space<vmem>>, vector<1x1x14x384xf32>,
    %c0_318 = arith.constant 0 : index
    %c9_319 = arith.constant 9 : index
    %c0_320 = arith.constant 0 : index
    %c0_321 = arith.constant 0 : index
    %790 = vector.load %arg5[%c0_318, %c9_319, %c0_320, %c0_321] : memref<1x14x14x384xf32, #tpu.memory_space<vmem>>, vector<1x1x14x384xf32>
    %791 = vector.shape_cast %790 : vector<1x1x14x384xf32> to vector<1x14x384xf32>
    %792 = vector.broadcast %704 : vector<1x1x384xf32> to vector<1x14x384xf32>
    %793 = arith.mulf %791, %792 : vector<1x14x384xf32>
    %794 = vector.broadcast %708 : vector<1x1x384xf32> to vector<1x14x384xf32>
    %795 = arith.addf %793, %794 : vector<1x14x384xf32>
    %c0_322 = arith.constant 0 : index
    %c9_323 = arith.constant 9 : index
    %c0_324 = arith.constant 0 : index
    %c0_325 = arith.constant 0 : index
    %796 = vector.load %arg5[%c0_322, %c9_323, %c0_324, %c0_325] : memref<1x14x14x384xf32, #tpu.memory_space<vmem>>, vector<1x1x14x384xf32>
    %797 = vector.shape_cast %796 : vector<1x1x14x384xf32> to vector<1x14x384xf32>
    %798 = vector.shape_cast %795 : vector<1x14x384xf32> to vector<1x1x14x384xf32>
    tpu.vector_store %arg5[%c0_322, %c9_323, %c0_324, %c0_325], %798 {strides = array<i32>} : memref<1x14x14x384xf32, #tpu.memory_space<vmem>>, vector<1x1x14x384xf32>,
    %c0_326 = arith.constant 0 : index
    %c10_327 = arith.constant 10 : index
    %c0_328 = arith.constant 0 : index
    %c0_329 = arith.constant 0 : index
    %799 = vector.load %arg5[%c0_326, %c10_327, %c0_328, %c0_329] : memref<1x14x14x384xf32, #tpu.memory_space<vmem>>, vector<1x1x14x384xf32>
    %800 = vector.shape_cast %799 : vector<1x1x14x384xf32> to vector<1x14x384xf32>
    %801 = vector.broadcast %704 : vector<1x1x384xf32> to vector<1x14x384xf32>
    %802 = arith.mulf %800, %801 : vector<1x14x384xf32>
    %803 = vector.broadcast %708 : vector<1x1x384xf32> to vector<1x14x384xf32>
    %804 = arith.addf %802, %803 : vector<1x14x384xf32>
    %c0_330 = arith.constant 0 : index
    %c10_331 = arith.constant 10 : index
    %c0_332 = arith.constant 0 : index
    %c0_333 = arith.constant 0 : index
    %805 = vector.load %arg5[%c0_330, %c10_331, %c0_332, %c0_333] : memref<1x14x14x384xf32, #tpu.memory_space<vmem>>, vector<1x1x14x384xf32>
    %806 = vector.shape_cast %805 : vector<1x1x14x384xf32> to vector<1x14x384xf32>
    %807 = vector.shape_cast %804 : vector<1x14x384xf32> to vector<1x1x14x384xf32>
    tpu.vector_store %arg5[%c0_330, %c10_331, %c0_332, %c0_333], %807 {strides = array<i32>} : memref<1x14x14x384xf32, #tpu.memory_space<vmem>>, vector<1x1x14x384xf32>,
    %c0_334 = arith.constant 0 : index
    %c11_335 = arith.constant 11 : index
    %c0_336 = arith.constant 0 : index
    %c0_337 = arith.constant 0 : index
    %808 = vector.load %arg5[%c0_334, %c11_335, %c0_336, %c0_337] : memref<1x14x14x384xf32, #tpu.memory_space<vmem>>, vector<1x1x14x384xf32>
    %809 = vector.shape_cast %808 : vector<1x1x14x384xf32> to vector<1x14x384xf32>
    %810 = vector.broadcast %704 : vector<1x1x384xf32> to vector<1x14x384xf32>
    %811 = arith.mulf %809, %810 : vector<1x14x384xf32>
    %812 = vector.broadcast %708 : vector<1x1x384xf32> to vector<1x14x384xf32>
    %813 = arith.addf %811, %812 : vector<1x14x384xf32>
    %c0_338 = arith.constant 0 : index
    %c11_339 = arith.constant 11 : index
    %c0_340 = arith.constant 0 : index
    %c0_341 = arith.constant 0 : index
    %814 = vector.load %arg5[%c0_338, %c11_339, %c0_340, %c0_341] : memref<1x14x14x384xf32, #tpu.memory_space<vmem>>, vector<1x1x14x384xf32>
    %815 = vector.shape_cast %814 : vector<1x1x14x384xf32> to vector<1x14x384xf32>
    %816 = vector.shape_cast %813 : vector<1x14x384xf32> to vector<1x1x14x384xf32>
    tpu.vector_store %arg5[%c0_338, %c11_339, %c0_340, %c0_341], %816 {strides = array<i32>} : memref<1x14x14x384xf32, #tpu.memory_space<vmem>>, vector<1x1x14x384xf32>,
    %c0_342 = arith.constant 0 : index
    %c12_343 = arith.constant 12 : index
    %c0_344 = arith.constant 0 : index
    %c0_345 = arith.constant 0 : index
    %817 = vector.load %arg5[%c0_342, %c12_343, %c0_344, %c0_345] : memref<1x14x14x384xf32, #tpu.memory_space<vmem>>, vector<1x1x14x384xf32>
    %818 = vector.shape_cast %817 : vector<1x1x14x384xf32> to vector<1x14x384xf32>
    %819 = vector.broadcast %704 : vector<1x1x384xf32> to vector<1x14x384xf32>
    %820 = arith.mulf %818, %819 : vector<1x14x384xf32>
    %821 = vector.broadcast %708 : vector<1x1x384xf32> to vector<1x14x384xf32>
    %822 = arith.addf %820, %821 : vector<1x14x384xf32>
    %c0_346 = arith.constant 0 : index
    %c12_347 = arith.constant 12 : index
    %c0_348 = arith.constant 0 : index
    %c0_349 = arith.constant 0 : index
    %823 = vector.load %arg5[%c0_346, %c12_347, %c0_348, %c0_349] : memref<1x14x14x384xf32, #tpu.memory_space<vmem>>, vector<1x1x14x384xf32>
    %824 = vector.shape_cast %823 : vector<1x1x14x384xf32> to vector<1x14x384xf32>
    %825 = vector.shape_cast %822 : vector<1x14x384xf32> to vector<1x1x14x384xf32>
    tpu.vector_store %arg5[%c0_346, %c12_347, %c0_348, %c0_349], %825 {strides = array<i32>} : memref<1x14x14x384xf32, #tpu.memory_space<vmem>>, vector<1x1x14x384xf32>,
    %c0_350 = arith.constant 0 : index
    %c13_351 = arith.constant 13 : index
    %c0_352 = arith.constant 0 : index
    %c0_353 = arith.constant 0 : index
    %826 = vector.load %arg5[%c0_350, %c13_351, %c0_352, %c0_353] : memref<1x14x14x384xf32, #tpu.memory_space<vmem>>, vector<1x1x14x384xf32>
    %827 = vector.shape_cast %826 : vector<1x1x14x384xf32> to vector<1x14x384xf32>
    %828 = vector.broadcast %704 : vector<1x1x384xf32> to vector<1x14x384xf32>
    %829 = arith.mulf %827, %828 : vector<1x14x384xf32>
    %830 = vector.broadcast %708 : vector<1x1x384xf32> to vector<1x14x384xf32>
    %831 = arith.addf %829, %830 : vector<1x14x384xf32>
    %c0_354 = arith.constant 0 : index
    %c13_355 = arith.constant 13 : index
    %c0_356 = arith.constant 0 : index
    %c0_357 = arith.constant 0 : index
    %832 = vector.load %arg5[%c0_354, %c13_355, %c0_356, %c0_357] : memref<1x14x14x384xf32, #tpu.memory_space<vmem>>, vector<1x1x14x384xf32>
    %833 = vector.shape_cast %832 : vector<1x1x14x384xf32> to vector<1x14x384xf32>
    %834 = vector.shape_cast %831 : vector<1x14x384xf32> to vector<1x1x14x384xf32>
    tpu.vector_store %arg5[%c0_354, %c13_355, %c0_356, %c0_357], %834 {strides = array<i32>} : memref<1x14x14x384xf32, #tpu.memory_space<vmem>>, vector<1x1x14x384xf32>,
    return
  }
  func.func @transform_0(%arg0: i32) -> (i32, i32, i32, i32) {
    %c0_i32 = arith.constant 0 : i32
    %c0_i32_0 = arith.constant 0 : i32
    %c0_i32_1 = arith.constant 0 : i32
    %c0_i32_2 = arith.constant 0 : i32
    return %c0_i32, %c0_i32_0, %c0_i32_1, %arg0 : i32, i32, i32, i32
  }
  func.func @transform_1(%arg0: i32) -> (i32, i32, i32) {
    %c0_i32 = arith.constant 0 : i32
    %c0_i32_0 = arith.constant 0 : i32
    %c0_i32_1 = arith.constant 0 : i32
    return %c0_i32, %c0_i32_0, %arg0 : i32, i32, i32
  }
  func.func @transform_2(%arg0: i32) -> (i32, i32) {
    %c0_i32 = arith.constant 0 : i32
    %c0_i32_0 = arith.constant 0 : i32
    return %c0_i32, %arg0 : i32, i32
  }
  func.func @transform_3(%arg0: i32) -> (i32, i32) {
    %c0_i32 = arith.constant 0 : i32
    %c0_i32_0 = arith.constant 0 : i32
    return %c0_i32, %arg0 : i32, i32
  }
  func.func @transform_4(%arg0: i32) -> (i32, i32, i32, i32) {
    %c0_i32 = arith.constant 0 : i32
    %c0_i32_0 = arith.constant 0 : i32
    %c0_i32_1 = arith.constant 0 : i32
    %c0_i32_2 = arith.constant 0 : i32
    return %c0_i32, %c0_i32_0, %c0_i32_1, %arg0 : i32, i32, i32, i32
  }
}

</mosaic_0001>

<llo_original>
// kernel: tpu_custom_call.1
$region0: #{tpu_custom_call.1}
  #allocation0 [shape = 'u32[]', space=smem, size = 0x4, offset = 0x4, fixed_abs, tag = 'smem constant byte address 0x4 - core index']
  #allocation1 [shape = 'u32[144,128]{1,0:T(1,128)}', space=vmem, size = 0x12000, scoped, tag = 'internal scratch']
  %s0 = inlined_call_operand.hbm [shape: f32[1,16,16,1152], index: 0, kind: input, shape index: {}]
  %s1 = inlined_call_operand.hbm [shape: f32[3,3,1152], index: 1, kind: input, shape index: {}]
  %s2 = inlined_call_operand.hbm [shape: f32[1,1152], index: 2, kind: input, shape index: {}]
  %s3 = inlined_call_operand.hbm [shape: f32[1,1152], index: 3, kind: input, shape index: {}]
  %s4 = inlined_call_operand.vmem [shape: f32[1,14,14,1152], index: 4, kind: output, shape index: {}]
  %s5 = sld [smem:[#allocation0]]
  $region84: #{tpu_custom_call.1} parent=0
    _
  %s7 = ssub.s32 1, %s5
  %s8 = scalar_select 0, %s7, %s5
  $region1: #{tpu_custom_call.1} parent=0
    #allocation2 [shape = 'u8[786432]{0}', space=vmem, size = 0xc0000, scoped, tag = 'input window, operand 0']
    #allocation3 [shape = 's32[2]{0}', space=sflag, size = 0x8, scoped, tag = 'scoped memory for tpu_custom_call.1']
    #allocation4 [shape = 'u8[36864]{0}', space=vmem, size = 0x9000, scoped, tag = 'input window, operand 1']
    #allocation5 [shape = 's32[2]{0}', space=sflag, size = 0x8, scoped, tag = 'scoped memory for tpu_custom_call.1']
    #allocation6 [shape = 'u8[3072]{0}', space=vmem, size = 0xc00, scoped, tag = 'input window, operand 2']
    #allocation7 [shape = 'u8[3072]{0}', space=vmem, size = 0xc00, scoped, tag = 'input window, operand 3']
    #allocation8 [shape = 's32[2]{0}', space=sflag, size = 0x8, scoped, tag = 'scoped memory for tpu_custom_call.1']
    #allocation9 [shape = 'u8[688128]{0}', space=vmem, size = 0xa8000, scoped, tag = 'output window, operand 0']
    %9 = vsyncpa [#allocation3], 0
    %s10 = scalar_lea.sflag [#allocation3], 1
    %11 = vsyncpa %s10, 0
    %12 = vsyncpa [#allocation5], 0
    %s13 = scalar_lea.sflag [#allocation5], 1
    %14 = vsyncpa %s13, 0
    %15 = vsyncpa [#allocation8], 0
    %s16 = scalar_lea.sflag [#allocation8], 1
    %17 = vsyncpa %s16, 0
    loop: start=0, step=1, limit=5
    $region2: #{tpu_custom_call.1} parent=1 // loop_pre_header
      _
    $region3: #{tpu_custom_call.1} parent=1 // loop_header
      %s19 = sphi 0, %s23
      %p20 = scmp.ge.s32.totalorder %s19, 5
      %s29 = sphi 0, %s31
      %s32 = sphi 0, %s29
      %s33 = sphi 0, %s32
      %s49 = sphi 0, %s33
      %s55 = sphi 0, %s57
      %s58 = sphi 0, %s55
      %s59 = sphi 0, %s58
      %s75 = sphi 0, %s59
      %s81 = sphi 0, %s83
      %s84 = sphi 0, %s81
      %s85 = sphi 0, %s84
      %s101 = sphi 0, %s85
      %s107 = sphi 0, %s109
      %s110 = sphi 0, %s107
      %s111 = sphi 0, %s110
      %s127 = sphi 0, %s111
      %s133 = sphi 0, %s135
      %s136 = sphi 0, %s133
      %s137 = sphi 0, %s136
      %s153 = sphi 0, %s137
    $region4: #{tpu_custom_call.1} parent=1 // loop_header_branch
      %22 = sbr.rel (%p20) target = $region8
    $region5: #{tpu_custom_call.1} parent=1 // loop_body
      %s24 = ssub.s32 %s19, 1
      %s25 = ssub.s32 %s19, 2
      %s26 = sadd.s32 %s19, 1
      %s27 = ssub.s32 %s19, %s26
      %p28 = scmp.eq.s32.totalorder %s27, 0
      %s30 = sadd.s32 %s29, 1
      %s31 = scalar_select %p28, %s29, %s30
      %p34 = pneg %p28
      %p35 = scmp.eq.s32.totalorder %s19, 2
      %p36 = por %p34, %p35
      %p37 = scmp.ne.s32.totalorder %s29, %s32
      %p38 = scmp.eq.s32.totalorder %s19, 0
      %p39 = por %p37, %p38
      %p40 = scmp.ne.s32.totalorder %s29, %s32
      %p41 = scmp.eq.s32.totalorder %s24, 2
      %p42 = por %p40, %p41
      %p43 = scmp.ne.s32.totalorder %s32, %s33
      %p44 = scmp.eq.s32.totalorder %s24, 0
      %p45 = por %p43, %p44
      %p46 = scmp.ne.s32.totalorder %s32, %s33
      %p47 = scmp.eq.s32.totalorder %s25, 2
      %p48 = por %p46, %p47
      %p50 = scmp.ne.s32.totalorder %s33, %s49
      %p51 = scmp.eq.s32.totalorder %s25, 0
      %p52 = por %p50, %p51
      %s53 = ssub.s32 %s19, %s26
      %p54 = scmp.eq.s32.totalorder %s53, 0
      %s56 = sadd.s32 %s55, 1
      %s57 = scalar_select %p54, %s55, %s56
      %p60 = pneg %p54
      %p61 = scmp.eq.s32.totalorder %s19, 2
      %p62 = por %p60, %p61
      %p63 = scmp.ne.s32.totalorder %s55, %s58
      %p64 = scmp.eq.s32.totalorder %s19, 0
      %p65 = por %p63, %p64
      %p66 = scmp.ne.s32.totalorder %s55, %s58
      %p67 = scmp.eq.s32.totalorder %s24, 2
      %p68 = por %p66, %p67
      %p69 = scmp.ne.s32.totalorder %s58, %s59
      %p70 = scmp.eq.s32.totalorder %s24, 0
      %p71 = por %p69, %p70
      %p72 = scmp.ne.s32.totalorder %s58, %s59
      %p73 = scmp.eq.s32.totalorder %s25, 2
      %p74 = por %p72, %p73
      %p76 = scmp.ne.s32.totalorder %s59, %s75
      %p77 = scmp.eq.s32.totalorder %s25, 0
      %p78 = por %p76, %p77
      %s79 = ssub.s32 %s19, %s26
      %p80 = scmp.eq.s32.totalorder %s79, 0
      %s82 = sadd.s32 %s81, 1
      %s83 = scalar_select %p80, %s81, %s82
      %p86 = pneg %p80
      %p87 = scmp.eq.s32.totalorder %s19, 2
      %p88 = por %p86, %p87
      %p89 = scmp.ne.s32.totalorder %s81, %s84
      %p90 = scmp.eq.s32.totalorder %s19, 0
      %p91 = por %p89, %p90
      %p92 = scmp.ne.s32.totalorder %s81, %s84
      %p93 = scmp.eq.s32.totalorder %s24, 2
      %p94 = por %p92, %p93
      %p95 = scmp.ne.s32.totalorder %s84, %s85
      %p96 = scmp.eq.s32.totalorder %s24, 0
      %p97 = por %p95, %p96
      %p98 = scmp.ne.s32.totalorder %s84, %s85
      %p99 = scmp.eq.s32.totalorder %s25, 2
      %p100 = por %p98, %p99
      %p102 = scmp.ne.s32.totalorder %s85, %s101
      %p103 = scmp.eq.s32.totalorder %s25, 0
      %p104 = por %p102, %p103
      %s105 = ssub.s32 %s19, %s26
      %p106 = scmp.eq.s32.totalorder %s105, 0
      %s108 = sadd.s32 %s107, 1
      %s109 = scalar_select %p106, %s107, %s108
      %p112 = pneg %p106
      %p113 = scmp.eq.s32.totalorder %s19, 2
      %p114 = por %p112, %p113
      %p115 = scmp.ne.s32.totalorder %s107, %s110
      %p116 = scmp.eq.s32.totalorder %s19, 0
      %p117 = por %p115, %p116
      %p118 = scmp.ne.s32.totalorder %s107, %s110
      %p119 = scmp.eq.s32.totalorder %s24, 2
      %p120 = por %p118, %p119
      %p121 = scmp.ne.s32.totalorder %s110, %s111
      %p122 = scmp.eq.s32.totalorder %s24, 0
      %p123 = por %p121, %p122
      %p124 = scmp.ne.s32.totalorder %s110, %s111
      %p125 = scmp.eq.s32.totalorder %s25, 2
      %p126 = por %p124, %p125
      %p128 = scmp.ne.s32.totalorder %s111, %s127
      %p129 = scmp.eq.s32.totalorder %s25, 0
      %p130 = por %p128, %p129
      %s131 = ssub.s32 %s19, %s26
      %p132 = scmp.eq.s32.totalorder %s131, 0
      %s134 = sadd.s32 %s133, 1
      %s135 = scalar_select %p132, %s133, %s134
      %p138 = pneg %p132
      %p139 = scmp.eq.s32.totalorder %s19, 2
      %p140 = por %p138, %p139
      %p141 = scmp.ne.s32.totalorder %s133, %s136
      %p142 = scmp.eq.s32.totalorder %s19, 0
      %p143 = por %p141, %p142
      %p144 = scmp.ne.s32.totalorder %s133, %s136
      %p145 = scmp.eq.s32.totalorder %s24, 2
      %p146 = por %p144, %p145
      %p147 = scmp.ne.s32.totalorder %s136, %s137
      %p148 = scmp.eq.s32.totalorder %s24, 0
      %p149 = por %p147, %p148
      %p150 = scmp.ne.s32.totalorder %s136, %s137
      %p151 = scmp.eq.s32.totalorder %s25, 2
      %p152 = por %p150, %p151
      %p154 = scmp.ne.s32.totalorder %s137, %s153
      %p155 = scmp.eq.s32.totalorder %s25, 0
      %p156 = por %p154, %p155
      %p157 = scmp.le.s32.totalorder 1, %s19
      %p158 = scmp.lt.s32.totalorder %s19, 4
      %p159 = pnand %p157, %p158
      %p160 = pneg %p159
      // Predicated region
      $region9: #{tpu_custom_call.1} parent=5 // pred_check
        _
      $region10: #{tpu_custom_call.1} parent=5 // pred_check_branch
        %162 = sbr.rel (%p159) target = $region12
      $region11: #{tpu_custom_call.1} parent=5 // pred_region
        %s163 = ssub.s32 %s19, 1
      $region12: #{tpu_custom_call.1} parent=5 // pred_fallthru
        _
      %p164 = scmp.lt.s32.totalorder %s19, 3
      // Predicated region
      $region13: #{tpu_custom_call.1} parent=5 // pred_check
        %p165 = pneg %p164
      $region14: #{tpu_custom_call.1} parent=5 // pred_check_branch
        %167 = sbr.rel (%p165) target = $region16
      $region15: #{tpu_custom_call.1} parent=5 // pred_region
        // Predicated region
        $region17: #{tpu_custom_call.1} parent=15 // pred_check
          %p168 = pneg %p39
        $region18: #{tpu_custom_call.1} parent=15 // pred_check_branch
          %170 = sbr.rel (%p168) target = $region20
        $region19: #{tpu_custom_call.1} parent=15 // pred_region
          %s171 = sand.u32 %s29, 1
          %s172 = scalar_lea.sflag [#allocation3], %s171
          %s173 = sand.u32 %s29, 1
          %s174 = smul.addr %s173, 768
          %s175 = scalar_lea.vmem [#allocation2], %s174
          %s176 = smul.u32 3, %s19
          %s178 = ssub.s32 12288, 12288
          %179 = vsyncadd %s172, %s178
          %s180 = smul.addr %s176, 128
          %s181 = scalar_lea.hbm %s0, %s180
          %s182 = sshll.u32 %s175, 4
          %s183 = int_to_ptr.vmem [resolvable:$true] %s182
          %188 = dma.hbm_to_vmem [thread:$0]  %s181, 12288, %s183, %s172, 1152, 384, 24
        $region20: #{tpu_custom_call.1} parent=15 // pred_fallthru
          _
        // Predicated region
        $region21: #{tpu_custom_call.1} parent=15 // pred_check
          %p189 = pneg %p65
        $region22: #{tpu_custom_call.1} parent=15 // pred_check_branch
          %191 = sbr.rel (%p189) target = $region24
        $region23: #{tpu_custom_call.1} parent=15 // pred_region
          %s192 = sand.u32 %s19, 1
          %s193 = scalar_lea.sflag [#allocation5], %s192
          %s194 = sand.u32 %s55, 1
          %s195 = smul.addr %s194, 36
          %s196 = scalar_lea.vmem [#allocation4], %s195
          %s197 = smul.u32 3, %s19
          %s199 = ssub.s32 576, 576
          %200 = vsyncadd %s193, %s199
          %s201 = smul.addr %s197, 64
          %s202 = scalar_lea.hbm %s1, %s201
          %s203 = sshll.u32 %s196, 4
          %s204 = int_to_ptr.vmem [resolvable:$true] %s203
          %209 = dma.hbm_to_vmem [thread:$0]  %s202, 576, %s204, %s193, 576, 192, 12
        $region24: #{tpu_custom_call.1} parent=15 // pred_fallthru
          _
        // Predicated region
        $region25: #{tpu_custom_call.1} parent=15 // pred_check
          %p210 = pneg %p91
        $region26: #{tpu_custom_call.1} parent=15 // pred_check_branch
          %212 = sbr.rel (%p210) target = $region28
        $region27: #{tpu_custom_call.1} parent=15 // pred_region
          %s213 = sand.u32 %s19, 1
          %s214 = scalar_lea.sflag [#allocation5], %s213
          %s215 = sand.u32 %s81, 1
          %s216 = smul.addr %s215, 3
          %s217 = scalar_lea.vmem [#allocation6], %s216
          %s218 = smul.u32 3, %s19
          %s220 = ssub.s32 48, 48
          %221 = vsyncadd %s214, %s220
          %s222 = smul.addr %s218, 16
          %s223 = scalar_lea.hbm %s2, %s222
          %s225 = sshll.u32 %s217, 4
          %s226 = int_to_ptr.vmem [resolvable:$true] %s225
          %228 = dma.hbm_to_vmem [thread:$0]  %s223, 48, %s226, %s214
        $region28: #{tpu_custom_call.1} parent=15 // pred_fallthru
          _
        // Predicated region
        $region29: #{tpu_custom_call.1} parent=15 // pred_check
          %p229 = pneg %p117
        $region30: #{tpu_custom_call.1} parent=15 // pred_check_branch
          %231 = sbr.rel (%p229) target = $region32
        $region31: #{tpu_custom_call.1} parent=15 // pred_region
          %s232 = sand.u32 %s107, 1
          %s233 = scalar_lea.sflag [#allocation8], %s232
          %s234 = sand.u32 %s107, 1
          %s235 = smul.addr %s234, 3
          %s236 = scalar_lea.vmem [#allocation7], %s235
          %s237 = smul.u32 3, %s19
          %s239 = ssub.s32 48, 48
          %240 = vsyncadd %s233, %s239
          %s241 = smul.addr %s237, 16
          %s242 = scalar_lea.hbm %s3, %s241
          %s244 = sshll.u32 %s236, 4
          %s245 = int_to_ptr.vmem [resolvable:$true] %s244
          %247 = dma.hbm_to_vmem [thread:$0]  %s242, 48, %s245, %s233
        $region32: #{tpu_custom_call.1} parent=15 // pred_fallthru
          _
      $region16: #{tpu_custom_call.1} parent=5 // pred_fallthru
        _
      %p248 = scmp.le.s32.totalorder 1, %s19
      %p249 = scmp.lt.s32.totalorder %s19, 4
      %p250 = pnand %p248, %p249
      %p251 = pneg %p250
      // Predicated region
      $region33: #{tpu_custom_call.1} parent=5 // pred_check
        _
      $region34: #{tpu_custom_call.1} parent=5 // pred_check_branch
        %253 = sbr.rel (%p250) target = $region36
      $region35: #{tpu_custom_call.1} parent=5 // pred_region
        %s254 = ssub.s32 %s19, 1
        %s255 = sand.u32 %s32, 1
        %s256 = scalar_lea.sflag [#allocation3], %s255
        %s257 = sand.u32 %s32, 1
        %s258 = smul.addr %s257, 768
        %s259 = scalar_lea.vmem [#allocation2], %s258
        // Predicated region
        $region37: #{tpu_custom_call.1} parent=35 // pred_check
          %p260 = pneg %p45
        $region38: #{tpu_custom_call.1} parent=35 // pred_check_branch
          %262 = sbr.rel (%p260) target = $region40
        $region39: #{tpu_custom_call.1} parent=35 // pred_region
          %263 = dma.done %s256, 12288
        $region40: #{tpu_custom_call.1} parent=35 // pred_fallthru
          _
        %s264 = sand.u32 %s24, 1
        %s265 = scalar_lea.sflag [#allocation5], %s264
        %s266 = sand.u32 %s58, 1
        %s267 = smul.addr %s266, 36
        %s268 = scalar_lea.vmem [#allocation4], %s267
        // Predicated region
        $region41: #{tpu_custom_call.1} parent=35 // pred_check
          %p269 = pneg %p71
        $region42: #{tpu_custom_call.1} parent=35 // pred_check_branch
          %271 = sbr.rel (%p269) target = $region44
        $region43: #{tpu_custom_call.1} parent=35 // pred_region
          %272 = dma.done %s265, 576
        $region44: #{tpu_custom_call.1} parent=35 // pred_fallthru
          _
        %s273 = sand.u32 %s24, 1
        %s274 = scalar_lea.sflag [#allocation5], %s273
        %s275 = sand.u32 %s84, 1
        %s276 = smul.addr %s275, 3
        %s277 = scalar_lea.vmem [#allocation6], %s276
        // Predicated region
        $region45: #{tpu_custom_call.1} parent=35 // pred_check
          %p278 = pneg %p97
        $region46: #{tpu_custom_call.1} parent=35 // pred_check_branch
          %280 = sbr.rel (%p278) target = $region48
        $region47: #{tpu_custom_call.1} parent=35 // pred_region
          %281 = dma.done %s274, 48
        $region48: #{tpu_custom_call.1} parent=35 // pred_fallthru
          _
        %s282 = sand.u32 %s110, 1
        %s283 = scalar_lea.sflag [#allocation8], %s282
        %s284 = sand.u32 %s110, 1
        %s285 = smul.addr %s284, 3
        %s286 = scalar_lea.vmem [#allocation7], %s285
        // Predicated region
        $region49: #{tpu_custom_call.1} parent=35 // pred_check
          %p287 = pneg %p123
        $region50: #{tpu_custom_call.1} parent=35 // pred_check_branch
          %289 = sbr.rel (%p287) target = $region52
        $region51: #{tpu_custom_call.1} parent=35 // pred_region
          %290 = dma.done %s283, 48
        $region52: #{tpu_custom_call.1} parent=35 // pred_fallthru
          _
        %s291 = sand.u32 %s32, 1
        %s292 = scalar_lea.sflag [#allocation3], %s291
        %s293 = sand.u32 %s32, 1
        %s294 = smul.addr %s293, 768
        %s295 = scalar_lea.vmem [#allocation2], %s294
        %p296 = pneg %p45
        %p297 = pneg %p42
        %s298 = sand.u32 %s24, 1
        %s299 = scalar_lea.sflag [#allocation5], %s298
        %s300 = sand.u32 %s58, 1
        %s301 = smul.addr %s300, 36
        %s302 = scalar_lea.vmem [#allocation4], %s301
        %p303 = pneg %p71
        %p304 = pneg %p68
        %s305 = sand.u32 %s24, 1
        %s306 = scalar_lea.sflag [#allocation5], %s305
        %s307 = sand.u32 %s84, 1
        %s308 = smul.addr %s307, 3
        %s309 = scalar_lea.vmem [#allocation6], %s308
        %p310 = pneg %p97
        %p311 = pneg %p94
        %s312 = sand.u32 %s110, 1
        %s313 = scalar_lea.sflag [#allocation8], %s312
        %s314 = sand.u32 %s110, 1
        %s315 = smul.addr %s314, 3
        %s316 = scalar_lea.vmem [#allocation7], %s315
        %p317 = pneg %p123
        %p318 = pneg %p120
        %p319 = pneg %p149
        %p320 = pneg %p146
        %s321 = sand.u32 %s136, 1
        %s322 = sand.u32 %s136, 1
        %s323 = smul.addr %s322, 672
        %s324 = scalar_lea.vmem [#allocation9], %s323
        %s325 = smul.u32 3, %s24
        %s326 = smul.u32 3, %s24
        %s327 = smul.u32 3, %s24
        %s328 = smul.u32 3, %s24
        %s329 = smul.u32 3, %s24
        %v330 = vld [vmem:[%s268] ss:$4 sm:$0x7]
        %s331 = scalar_lea.vmem %s268, 1 [#allocation4]
        %v332 = vld [vmem:[%s331] ss:$4 sm:$0x7]
        %s333 = scalar_lea.vmem %s268, 2 [#allocation4]
        %v334 = vld [vmem:[%s333] ss:$4 sm:$0x7]
        %s335 = scalar_lea.vmem %s268, 12 [#allocation4]
        %v336 = vld [vmem:[%s335] ss:$4 sm:$0x7]
        %s337 = scalar_lea.vmem %s335, 1 [#allocation4]
        %v338 = vld [vmem:[%s337] ss:$4 sm:$0x7]
        %s339 = scalar_lea.vmem %s335, 2 [#allocation4]
        %v340 = vld [vmem:[%s339] ss:$4 sm:$0x7]
        %s341 = scalar_lea.vmem %s268, 24 [#allocation4]
        %v342 = vld [vmem:[%s341] ss:$4 sm:$0x7]
        %s343 = scalar_lea.vmem %s341, 1 [#allocation4]
        %v344 = vld [vmem:[%s343] ss:$4 sm:$0x7]
        %s345 = scalar_lea.vmem %s341, 2 [#allocation4]
        %v346 = vld [vmem:[%s345] ss:$4 sm:$0x7]
        %v347 = vld [vmem:[%s259] sm:$0xff]
        %v348 = vld [vmem:[%s259 + $0x8] sm:$0xff]
        %v349 = vld [vmem:[%s259 + $0x10] sm:$0xff]
        %v350 = vld [vmem:[%s259 + $0x18] sm:$0xff]
        %v351 = vld [vmem:[%s259 + $0x20] sm:$0xff]
        %v352 = vld [vmem:[%s259 + $0x28] sm:$0xff]
        %v354 = vlaneseq
        %v355 = vshrl.u32 %v354, 7
        %v356 = vsub.s32 0, %v355
        %v357 = vrot.slane %v330, %v356
        %v358 = vlaneseq
        %v359 = vshrl.u32 %v358, 7
        %v360 = vsub.s32 1, %v359
        %v361 = vrot.slane %v330, %v360
        %v362 = vlaneseq
        %v363 = vshrl.u32 %v362, 7
        %v364 = vsub.s32 2, %v363
        %v365 = vrot.slane %v330, %v364
        %v369 = vmul.f32 %v347, %v357
        %v370 = vmul.f32 %v348, %v361
        %v371 = vmul.f32 %v349, %v365
        %v372 = vmul.f32 %v350, %v357
        %v373 = vmul.f32 %v351, %v361
        %v374 = vmul.f32 %v352, %v365
        %v376 = vlaneseq
        %v377 = vshrl.u32 %v376, 7
        %v378 = vsub.s32 0, %v377
        %v379 = vrot.slane %v332, %v378
        %v380 = vlaneseq
        %v381 = vshrl.u32 %v380, 7
        %v382 = vsub.s32 1, %v381
        %v383 = vrot.slane %v332, %v382
        %v384 = vlaneseq
        %v385 = vshrl.u32 %v384, 7
        %v386 = vsub.s32 2, %v385
        %v387 = vrot.slane %v332, %v386
        %v391 = vmul.f32 %v347, %v379
        %v392 = vmul.f32 %v348, %v383
        %v393 = vmul.f32 %v349, %v387
        %v394 = vmul.f32 %v350, %v379
        %v395 = vmul.f32 %v351, %v383
        %v396 = vmul.f32 %v352, %v387
        %vm403 = vcmask 1046528
        %v404 = vrot.slane %v391, 1
        %v405 = vrot.slane %v394, 1
        %v406 = vsel %vm403, %v404, %v405
        %v407 = vrot.slane %v392, 1
        %v408 = vrot.slane %v395, 1
        %v409 = vsel %vm403, %v407, %v408
        %v410 = vrot.slane %v393, 1
        %v411 = vrot.slane %v396, 1
        %v412 = vsel %vm403, %v410, %v411
        %v419 = vadd.f32 %v369, %v406
        %v420 = vadd.f32 %v370, %v409
        %v421 = vadd.f32 %v371, %v412
        %v422 = vadd.f32 %v372, %v405
        %v423 = vadd.f32 %v373, %v408
        %v424 = vadd.f32 %v374, %v411
        %v426 = vlaneseq
        %v427 = vshrl.u32 %v426, 7
        %v428 = vsub.s32 0, %v427
        %v429 = vrot.slane %v334, %v428
        %v430 = vlaneseq
        %v431 = vshrl.u32 %v430, 7
        %v432 = vsub.s32 1, %v431
        %v433 = vrot.slane %v334, %v432
        %v434 = vlaneseq
        %v435 = vshrl.u32 %v434, 7
        %v436 = vsub.s32 2, %v435
        %v437 = vrot.slane %v334, %v436
        %v441 = vmul.f32 %v347, %v429
        %v442 = vmul.f32 %v348, %v433
        %v443 = vmul.f32 %v349, %v437
        %v444 = vmul.f32 %v350, %v429
        %v445 = vmul.f32 %v351, %v433
        %v446 = vmul.f32 %v352, %v437
        %vm453 = vcmask 1045504
        %v454 = vrot.slane %v441, 2
        %v455 = vrot.slane %v444, 2
        %v456 = vsel %vm453, %v454, %v455
        %v457 = vrot.slane %v442, 2
        %v458 = vrot.slane %v445, 2
        %v459 = vsel %vm453, %v457, %v458
        %v460 = vrot.slane %v443, 2
        %v461 = vrot.slane %v446, 2
        %v462 = vsel %vm453, %v460, %v461
        %v469 = vadd.f32 %v419, %v456
        %v470 = vadd.f32 %v420, %v459
        %v471 = vadd.f32 %v421, %v462
        %v472 = vadd.f32 %v422, %v455
        %v473 = vadd.f32 %v423, %v458
        %v474 = vadd.f32 %v424, %v461
        %s475 = scalar_lea.vmem %s259, 48 [#allocation2]
        %v476 = vld [vmem:[%s475] sm:$0xff]
        %v477 = vld [vmem:[%s475 + $0x8] sm:$0xff]
        %v478 = vld [vmem:[%s475 + $0x10] sm:$0xff]
        %v479 = vld [vmem:[%s475 + $0x18] sm:$0xff]
        %v480 = vld [vmem:[%s475 + $0x20] sm:$0xff]
        %v481 = vld [vmem:[%s475 + $0x28] sm:$0xff]
        %v483 = vlaneseq
        %v484 = vshrl.u32 %v483, 7
        %v485 = vsub.s32 0, %v484
        %v486 = vrot.slane %v336, %v485
        %v487 = vlaneseq
        %v488 = vshrl.u32 %v487, 7
        %v489 = vsub.s32 1, %v488
        %v490 = vrot.slane %v336, %v489
        %v491 = vlaneseq
        %v492 = vshrl.u32 %v491, 7
        %v493 = vsub.s32 2, %v492
        %v494 = vrot.slane %v336, %v493
        %v498 = vmul.f32 %v476, %v486
        %v499 = vmul.f32 %v477, %v490
        %v500 = vmul.f32 %v478, %v494
        %v501 = vmul.f32 %v479, %v486
        %v502 = vmul.f32 %v480, %v490
        %v503 = vmul.f32 %v481, %v494
        %v505 = vlaneseq
        %v506 = vshrl.u32 %v505, 7
        %v507 = vsub.s32 0, %v506
        %v508 = vrot.slane %v338, %v507
        %v509 = vlaneseq
        %v510 = vshrl.u32 %v509, 7
        %v511 = vsub.s32 1, %v510
        %v512 = vrot.slane %v338, %v511
        %v513 = vlaneseq
        %v514 = vshrl.u32 %v513, 7
        %v515 = vsub.s32 2, %v514
        %v516 = vrot.slane %v338, %v515
        %v520 = vmul.f32 %v476, %v508
        %v521 = vmul.f32 %v477, %v512
        %v522 = vmul.f32 %v478, %v516
        %v523 = vmul.f32 %v479, %v508
        %v524 = vmul.f32 %v480, %v512
        %v525 = vmul.f32 %v481, %v516
        %v532 = vrot.slane %v520, 1
        %v533 = vrot.slane %v523, 1
        %v534 = vsel %vm403, %v532, %v533
        %v535 = vrot.slane %v521, 1
        %v536 = vrot.slane %v524, 1
        %v537 = vsel %vm403, %v535, %v536
        %v538 = vrot.slane %v522, 1
        %v539 = vrot.slane %v525, 1
        %v540 = vsel %vm403, %v538, %v539
        %v547 = vadd.f32 %v498, %v534
        %v548 = vadd.f32 %v499, %v537
        %v549 = vadd.f32 %v500, %v540
        %v550 = vadd.f32 %v501, %v533
        %v551 = vadd.f32 %v502, %v536
        %v552 = vadd.f32 %v503, %v539
        %v554 = vlaneseq
        %v555 = vshrl.u32 %v554, 7
        %v556 = vsub.s32 0, %v555
        %v557 = vrot.slane %v340, %v556
        %v558 = vlaneseq
        %v559 = vshrl.u32 %v558, 7
        %v560 = vsub.s32 1, %v559
        %v561 = vrot.slane %v340, %v560
        %v562 = vlaneseq
        %v563 = vshrl.u32 %v562, 7
        %v564 = vsub.s32 2, %v563
        %v565 = vrot.slane %v340, %v564
        %v569 = vmul.f32 %v476, %v557
        %v570 = vmul.f32 %v477, %v561
        %v571 = vmul.f32 %v478, %v565
        %v572 = vmul.f32 %v479, %v557
        %v573 = vmul.f32 %v480, %v561
        %v574 = vmul.f32 %v481, %v565
        %v581 = vrot.slane %v569, 2
        %v582 = vrot.slane %v572, 2
        %v583 = vsel %vm453, %v581, %v582
        %v584 = vrot.slane %v570, 2
        %v585 = vrot.slane %v573, 2
        %v586 = vsel %vm453, %v584, %v585
        %v587 = vrot.slane %v571, 2
        %v588 = vrot.slane %v574, 2
        %v589 = vsel %vm453, %v587, %v588
        %v596 = vadd.f32 %v547, %v583
        %v597 = vadd.f32 %v548, %v586
        %v598 = vadd.f32 %v549, %v589
        %v599 = vadd.f32 %v550, %v582
        %v600 = vadd.f32 %v551, %v585
        %v601 = vadd.f32 %v552, %v588
        %v602 = vadd.f32 %v469, %v596
        %v603 = vadd.f32 %v470, %v597
        %v604 = vadd.f32 %v471, %v598
        %v605 = vadd.f32 %v472, %v599
        %v606 = vadd.f32 %v473, %v600
        %v607 = vadd.f32 %v474, %v601
        %s608 = scalar_lea.vmem %s259, 96 [#allocation2]
        %v609 = vld [vmem:[%s608] sm:$0xff]
        %v610 = vld [vmem:[%s608 + $0x8] sm:$0xff]
        %v611 = vld [vmem:[%s608 + $0x10] sm:$0xff]
        %v612 = vld [vmem:[%s608 + $0x18] sm:$0xff]
        %v613 = vld [vmem:[%s608 + $0x20] sm:$0xff]
        %v614 = vld [vmem:[%s608 + $0x28] sm:$0xff]
        %v616 = vlaneseq
        %v617 = vshrl.u32 %v616, 7
        %v618 = vsub.s32 0, %v617
        %v619 = vrot.slane %v342, %v618
        %v620 = vlaneseq
        %v621 = vshrl.u32 %v620, 7
        %v622 = vsub.s32 1, %v621
        %v623 = vrot.slane %v342, %v622
        %v624 = vlaneseq
        %v625 = vshrl.u32 %v624, 7
        %v626 = vsub.s32 2, %v625
        %v627 = vrot.slane %v342, %v626
        %v631 = vmul.f32 %v609, %v619
        %v632 = vmul.f32 %v610, %v623
        %v633 = vmul.f32 %v611, %v627
        %v634 = vmul.f32 %v612, %v619
        %v635 = vmul.f32 %v613, %v623
        %v636 = vmul.f32 %v614, %v627
        %v638 = vlaneseq
        %v639 = vshrl.u32 %v638, 7
        %v640 = vsub.s32 0, %v639
        %v641 = vrot.slane %v344, %v640
        %v642 = vlaneseq
        %v643 = vshrl.u32 %v642, 7
        %v644 = vsub.s32 1, %v643
        %v645 = vrot.slane %v344, %v644
        %v646 = vlaneseq
        %v647 = vshrl.u32 %v646, 7
        %v648 = vsub.s32 2, %v647
        %v649 = vrot.slane %v344, %v648
        %v653 = vmul.f32 %v609, %v641
        %v654 = vmul.f32 %v610, %v645
        %v655 = vmul.f32 %v611, %v649
        %v656 = vmul.f32 %v612, %v641
        %v657 = vmul.f32 %v613, %v645
        %v658 = vmul.f32 %v614, %v649
        %v665 = vrot.slane %v653, 1
        %v666 = vrot.slane %v656, 1
        %v667 = vsel %vm403, %v665, %v666
        %v668 = vrot.slane %v654, 1
        %v669 = vrot.slane %v657, 1
        %v670 = vsel %vm403, %v668, %v669
        %v671 = vrot.slane %v655, 1
        %v672 = vrot.slane %v658, 1
        %v673 = vsel %vm403, %v671, %v672
        %v680 = vadd.f32 %v631, %v667
        %v681 = vadd.f32 %v632, %v670
        %v682 = vadd.f32 %v633, %v673
        %v683 = vadd.f32 %v634, %v666
        %v684 = vadd.f32 %v635, %v669
        %v685 = vadd.f32 %v636, %v672
        %v687 = vlaneseq
        %v688 = vshrl.u32 %v687, 7
        %v689 = vsub.s32 0, %v688
        %v690 = vrot.slane %v346, %v689
        %v691 = vlaneseq
        %v692 = vshrl.u32 %v691, 7
        %v693 = vsub.s32 1, %v692
        %v694 = vrot.slane %v346, %v693
        %v695 = vlaneseq
        %v696 = vshrl.u32 %v695, 7
        %v697 = vsub.s32 2, %v696
        %v698 = vrot.slane %v346, %v697
        %v702 = vmul.f32 %v609, %v690
        %v703 = vmul.f32 %v610, %v694
        %v704 = vmul.f32 %v611, %v698
        %v705 = vmul.f32 %v612, %v690
        %v706 = vmul.f32 %v613, %v694
        %v707 = vmul.f32 %v614, %v698
        %v714 = vrot.slane %v702, 2
        %v715 = vrot.slane %v705, 2
        %v716 = vsel %vm453, %v714, %v715
        %v717 = vrot.slane %v703, 2
        %v718 = vrot.slane %v706, 2
        %v719 = vsel %vm453, %v717, %v718
        %v720 = vrot.slane %v704, 2
        %v721 = vrot.slane %v707, 2
        %v722 = vsel %vm453, %v720, %v721
        %v729 = vadd.f32 %v680, %v716
        %v730 = vadd.f32 %v681, %v719
        %v731 = vadd.f32 %v682, %v722
        %v732 = vadd.f32 %v683, %v715
        %v733 = vadd.f32 %v684, %v718
        %v734 = vadd.f32 %v685, %v721
        %v735 = vadd.f32 %v602, %v729
        %v736 = vadd.f32 %v603, %v730
        %v737 = vadd.f32 %v604, %v731
        %v738 = vadd.f32 %v605, %v732
        %v739 = vadd.f32 %v606, %v733
        %v740 = vadd.f32 %v607, %v734
        %741 = vst [vmem:[%s324] sm:$0xff] %v735
        %742 = vst [vmem:[%s324 + $0x8] sm:$0xff] %v736
        %743 = vst [vmem:[%s324 + $0x10] sm:$0xff] %v737
        %744 = vst [vmem:[%s324 + $0x18] sm:$0x3f] %v738
        %745 = vst [vmem:[%s324 + $0x20] sm:$0x3f] %v739
        %746 = vst [vmem:[%s324 + $0x28] sm:$0x3f] %v740
        %v747 = vadd.f32 %v735, 0.0
        %v748 = vadd.f32 %v736, 0.0
        %v749 = vadd.f32 %v737, 0.0
        %v750 = vadd.f32 %v738, 0.0
        %v751 = vadd.f32 %v739, 0.0
        %v752 = vadd.f32 %v740, 0.0
        %v753 = vmul.f32 %v735, %v735
        %v754 = vmul.f32 %v736, %v736
        %v755 = vmul.f32 %v737, %v737
        %v756 = vmul.f32 %v738, %v738
        %v757 = vmul.f32 %v739, %v739
        %v758 = vmul.f32 %v740, %v740
        %v759 = vadd.f32 %v753, 0.0
        %v760 = vadd.f32 %v754, 0.0
        %v761 = vadd.f32 %v755, 0.0
        %v762 = vadd.f32 %v756, 0.0
        %v763 = vadd.f32 %v757, 0.0
        %v764 = vadd.f32 %v758, 0.0
        %v765 = vld [vmem:[%s475] sm:$0xff]
        %v766 = vld [vmem:[%s475 + $0x8] sm:$0xff]
        %v767 = vld [vmem:[%s475 + $0x10] sm:$0xff]
        %v768 = vld [vmem:[%s475 + $0x18] sm:$0xff]
        %v769 = vld [vmem:[%s475 + $0x20] sm:$0xff]
        %v770 = vld [vmem:[%s475 + $0x28] sm:$0xff]
        %v771 = vmul.f32 %v765, %v357
        %v772 = vmul.f32 %v766, %v361
        %v773 = vmul.f32 %v767, %v365
        %v774 = vmul.f32 %v768, %v357
        %v775 = vmul.f32 %v769, %v361
        %v776 = vmul.f32 %v770, %v365
        %v777 = vmul.f32 %v765, %v379
        %v778 = vmul.f32 %v766, %v383
        %v779 = vmul.f32 %v767, %v387
        %v780 = vmul.f32 %v768, %v379
        %v781 = vmul.f32 %v769, %v383
        %v782 = vmul.f32 %v770, %v387
        %v789 = vrot.slane %v777, 1
        %v790 = vrot.slane %v780, 1
        %v791 = vsel %vm403, %v789, %v790
        %v792 = vrot.slane %v778, 1
        %v793 = vrot.slane %v781, 1
        %v794 = vsel %vm403, %v792, %v793
        %v795 = vrot.slane %v779, 1
        %v796 = vrot.slane %v782, 1
        %v797 = vsel %vm403, %v795, %v796
        %v804 = vadd.f32 %v771, %v791
        %v805 = vadd.f32 %v772, %v794
        %v806 = vadd.f32 %v773, %v797
        %v807 = vadd.f32 %v774, %v790
        %v808 = vadd.f32 %v775, %v793
        %v809 = vadd.f32 %v776, %v796
        %v810 = vmul.f32 %v765, %v429
        %v811 = vmul.f32 %v766, %v433
        %v812 = vmul.f32 %v767, %v437
        %v813 = vmul.f32 %v768, %v429
        %v814 = vmul.f32 %v769, %v433
        %v815 = vmul.f32 %v770, %v437
        %v822 = vrot.slane %v810, 2
        %v823 = vrot.slane %v813, 2
        %v824 = vsel %vm453, %v822, %v823
        %v825 = vrot.slane %v811, 2
        %v826 = vrot.slane %v814, 2
        %v827 = vsel %vm453, %v825, %v826
        %v828 = vrot.slane %v812, 2
        %v829 = vrot.slane %v815, 2
        %v830 = vsel %vm453, %v828, %v829
        %v837 = vadd.f32 %v804, %v824
        %v838 = vadd.f32 %v805, %v827
        %v839 = vadd.f32 %v806, %v830
        %v840 = vadd.f32 %v807, %v823
        %v841 = vadd.f32 %v808, %v826
        %v842 = vadd.f32 %v809, %v829
        %v843 = vld [vmem:[%s608] sm:$0xff]
        %v844 = vld [vmem:[%s608 + $0x8] sm:$0xff]
        %v845 = vld [vmem:[%s608 + $0x10] sm:$0xff]
        %v846 = vld [vmem:[%s608 + $0x18] sm:$0xff]
        %v847 = vld [vmem:[%s608 + $0x20] sm:$0xff]
        %v848 = vld [vmem:[%s608 + $0x28] sm:$0xff]
        %v849 = vmul.f32 %v843, %v486
        %v850 = vmul.f32 %v844, %v490
        %v851 = vmul.f32 %v845, %v494
        %v852 = vmul.f32 %v846, %v486
        %v853 = vmul.f32 %v847, %v490
        %v854 = vmul.f32 %v848, %v494
        %v855 = vmul.f32 %v843, %v508
        %v856 = vmul.f32 %v844, %v512
        %v857 = vmul.f32 %v845, %v516
        %v858 = vmul.f32 %v846, %v508
        %v859 = vmul.f32 %v847, %v512
        %v860 = vmul.f32 %v848, %v516
        %v867 = vrot.slane %v855, 1
        %v868 = vrot.slane %v858, 1
        %v869 = vsel %vm403, %v867, %v868
        %v870 = vrot.slane %v856, 1
        %v871 = vrot.slane %v859, 1
        %v872 = vsel %vm403, %v870, %v871
        %v873 = vrot.slane %v857, 1
        %v874 = vrot.slane %v860, 1
        %v875 = vsel %vm403, %v873, %v874
        %v882 = vadd.f32 %v849, %v869
        %v883 = vadd.f32 %v850, %v872
        %v884 = vadd.f32 %v851, %v875
        %v885 = vadd.f32 %v852, %v868
        %v886 = vadd.f32 %v853, %v871
        %v887 = vadd.f32 %v854, %v874
        %v888 = vmul.f32 %v843, %v557
        %v889 = vmul.f32 %v844, %v561
        %v890 = vmul.f32 %v845, %v565
        %v891 = vmul.f32 %v846, %v557
        %v892 = vmul.f32 %v847, %v561
        %v893 = vmul.f32 %v848, %v565
        %v900 = vrot.slane %v888, 2
        %v901 = vrot.slane %v891, 2
        %v902 = vsel %vm453, %v900, %v901
        %v903 = vrot.slane %v889, 2
        %v904 = vrot.slane %v892, 2
        %v905 = vsel %vm453, %v903, %v904
        %v906 = vrot.slane %v890, 2
        %v907 = vrot.slane %v893, 2
        %v908 = vsel %vm453, %v906, %v907
        %v915 = vadd.f32 %v882, %v902
        %v916 = vadd.f32 %v883, %v905
        %v917 = vadd.f32 %v884, %v908
        %v918 = vadd.f32 %v885, %v901
        %v919 = vadd.f32 %v886, %v904
        %v920 = vadd.f32 %v887, %v907
        %v921 = vadd.f32 %v837, %v915
        %v922 = vadd.f32 %v838, %v916
        %v923 = vadd.f32 %v839, %v917
        %v924 = vadd.f32 %v840, %v918
        %v925 = vadd.f32 %v841, %v919
        %v926 = vadd.f32 %v842, %v920
        %s927 = scalar_lea.vmem %s259, 144 [#allocation2]
        %v928 = vld [vmem:[%s927] sm:$0xff]
        %v929 = vld [vmem:[%s927 + $0x8] sm:$0xff]
        %v930 = vld [vmem:[%s927 + $0x10] sm:$0xff]
        %v931 = vld [vmem:[%s927 + $0x18] sm:$0xff]
        %v932 = vld [vmem:[%s927 + $0x20] sm:$0xff]
        %v933 = vld [vmem:[%s927 + $0x28] sm:$0xff]
        %v934 = vmul.f32 %v928, %v619
        %v935 = vmul.f32 %v929, %v623
        %v936 = vmul.f32 %v930, %v627
        %v937 = vmul.f32 %v931, %v619
        %v938 = vmul.f32 %v932, %v623
        %v939 = vmul.f32 %v933, %v627
        %v940 = vmul.f32 %v928, %v641
        %v941 = vmul.f32 %v929, %v645
        %v942 = vmul.f32 %v930, %v649
        %v943 = vmul.f32 %v931, %v641
        %v944 = vmul.f32 %v932, %v645
        %v945 = vmul.f32 %v933, %v649
        %v952 = vrot.slane %v940, 1
        %v953 = vrot.slane %v943, 1
        %v954 = vsel %vm403, %v952, %v953
        %v955 = vrot.slane %v941, 1
        %v956 = vrot.slane %v944, 1
        %v957 = vsel %vm403, %v955, %v956
        %v958 = vrot.slane %v942, 1
        %v959 = vrot.slane %v945, 1
        %v960 = vsel %vm403, %v958, %v959
        %v967 = vadd.f32 %v934, %v954
        %v968 = vadd.f32 %v935, %v957
        %v969 = vadd.f32 %v936, %v960
        %v970 = vadd.f32 %v937, %v953
        %v971 = vadd.f32 %v938, %v956
        %v972 = vadd.f32 %v939, %v959
        %v973 = vmul.f32 %v928, %v690
        %v974 = vmul.f32 %v929, %v694
        %v975 = vmul.f32 %v930, %v698
        %v976 = vmul.f32 %v931, %v690
        %v977 = vmul.f32 %v932, %v694
        %v978 = vmul.f32 %v933, %v698
        %v985 = vrot.slane %v973, 2
        %v986 = vrot.slane %v976, 2
        %v987 = vsel %vm453, %v985, %v986
        %v988 = vrot.slane %v974, 2
        %v989 = vrot.slane %v977, 2
        %v990 = vsel %vm453, %v988, %v989
        %v991 = vrot.slane %v975, 2
        %v992 = vrot.slane %v978, 2
        %v993 = vsel %vm453, %v991, %v992
        %v1000 = vadd.f32 %v967, %v987
        %v1001 = vadd.f32 %v968, %v990
        %v1002 = vadd.f32 %v969, %v993
        %v1003 = vadd.f32 %v970, %v986
        %v1004 = vadd.f32 %v971, %v989
        %v1005 = vadd.f32 %v972, %v992
        %v1006 = vadd.f32 %v921, %v1000
        %v1007 = vadd.f32 %v922, %v1001
        %v1008 = vadd.f32 %v923, %v1002
        %v1009 = vadd.f32 %v924, %v1003
        %v1010 = vadd.f32 %v925, %v1004
        %v1011 = vadd.f32 %v926, %v1005
        %s1012 = scalar_lea.vmem %s324, 48 [#allocation9]
        %1013 = vst [vmem:[%s1012] sm:$0xff] %v1006
        %1014 = vst [vmem:[%s1012 + $0x8] sm:$0xff] %v1007
        %1015 = vst [vmem:[%s1012 + $0x10] sm:$0xff] %v1008
        %1016 = vst [vmem:[%s1012 + $0x18] sm:$0x3f] %v1009
        %1017 = vst [vmem:[%s1012 + $0x20] sm:$0x3f] %v1010
        %1018 = vst [vmem:[%s1012 + $0x28] sm:$0x3f] %v1011
        %v1019 = vadd.f32 %v747, %v1006
        %v1020 = vadd.f32 %v748, %v1007
        %v1021 = vadd.f32 %v749, %v1008
        %v1022 = vadd.f32 %v750, %v1009
        %v1023 = vadd.f32 %v751, %v1010
        %v1024 = vadd.f32 %v752, %v1011
        %v1025 = vmul.f32 %v1006, %v1006
        %v1026 = vmul.f32 %v1007, %v1007
        %v1027 = vmul.f32 %v1008, %v1008
        %v1028 = vmul.f32 %v1009, %v1009
        %v1029 = vmul.f32 %v1010, %v1010
        %v1030 = vmul.f32 %v1011, %v1011
        %v1031 = vadd.f32 %v759, %v1025
        %v1032 = vadd.f32 %v760, %v1026
        %v1033 = vadd.f32 %v761, %v1027
        %v1034 = vadd.f32 %v762, %v1028
        %v1035 = vadd.f32 %v763, %v1029
        %v1036 = vadd.f32 %v764, %v1030
        %v1037 = vld [vmem:[%s608] sm:$0xff]
        %v1038 = vld [vmem:[%s608 + $0x8] sm:$0xff]
        %v1039 = vld [vmem:[%s608 + $0x10] sm:$0xff]
        %v1040 = vld [vmem:[%s608 + $0x18] sm:$0xff]
        %v1041 = vld [vmem:[%s608 + $0x20] sm:$0xff]
        %v1042 = vld [vmem:[%s608 + $0x28] sm:$0xff]
        %v1043 = vmul.f32 %v1037, %v357
        %v1044 = vmul.f32 %v1038, %v361
        %v1045 = vmul.f32 %v1039, %v365
        %v1046 = vmul.f32 %v1040, %v357
        %v1047 = vmul.f32 %v1041, %v361
        %v1048 = vmul.f32 %v1042, %v365
        %v1049 = vmul.f32 %v1037, %v379
        %v1050 = vmul.f32 %v1038, %v383
        %v1051 = vmul.f32 %v1039, %v387
        %v1052 = vmul.f32 %v1040, %v379
        %v1053 = vmul.f32 %v1041, %v383
        %v1054 = vmul.f32 %v1042, %v387
        %v1061 = vrot.slane %v1049, 1
        %v1062 = vrot.slane %v1052, 1
        %v1063 = vsel %vm403, %v1061, %v1062
        %v1064 = vrot.slane %v1050, 1
        %v1065 = vrot.slane %v1053, 1
        %v1066 = vsel %vm403, %v1064, %v1065
        %v1067 = vrot.slane %v1051, 1
        %v1068 = vrot.slane %v1054, 1
        %v1069 = vsel %vm403, %v1067, %v1068
        %v1076 = vadd.f32 %v1043, %v1063
        %v1077 = vadd.f32 %v1044, %v1066
        %v1078 = vadd.f32 %v1045, %v1069
        %v1079 = vadd.f32 %v1046, %v1062
        %v1080 = vadd.f32 %v1047, %v1065
        %v1081 = vadd.f32 %v1048, %v1068
        %v1082 = vmul.f32 %v1037, %v429
        %v1083 = vmul.f32 %v1038, %v433
        %v1084 = vmul.f32 %v1039, %v437
        %v1085 = vmul.f32 %v1040, %v429
        %v1086 = vmul.f32 %v1041, %v433
        %v1087 = vmul.f32 %v1042, %v437
        %v1094 = vrot.slane %v1082, 2
        %v1095 = vrot.slane %v1085, 2
        %v1096 = vsel %vm453, %v1094, %v1095
        %v1097 = vrot.slane %v1083, 2
        %v1098 = vrot.slane %v1086, 2
        %v1099 = vsel %vm453, %v1097, %v1098
        %v1100 = vrot.slane %v1084, 2
        %v1101 = vrot.slane %v1087, 2
        %v1102 = vsel %vm453, %v1100, %v1101
        %v1109 = vadd.f32 %v1076, %v1096
        %v1110 = vadd.f32 %v1077, %v1099
        %v1111 = vadd.f32 %v1078, %v1102
        %v1112 = vadd.f32 %v1079, %v1095
        %v1113 = vadd.f32 %v1080, %v1098
        %v1114 = vadd.f32 %v1081, %v1101
        %v1115 = vld [vmem:[%s927] sm:$0xff]
        %v1116 = vld [vmem:[%s927 + $0x8] sm:$0xff]
        %v1117 = vld [vmem:[%s927 + $0x10] sm:$0xff]
        %v1118 = vld [vmem:[%s927 + $0x18] sm:$0xff]
        %v1119 = vld [vmem:[%s927 + $0x20] sm:$0xff]
        %v1120 = vld [vmem:[%s927 + $0x28] sm:$0xff]
        %v1121 = vmul.f32 %v1115, %v486
        %v1122 = vmul.f32 %v1116, %v490
        %v1123 = vmul.f32 %v1117, %v494
        %v1124 = vmul.f32 %v1118, %v486
        %v1125 = vmul.f32 %v1119, %v490
        %v1126 = vmul.f32 %v1120, %v494
        %v1127 = vmul.f32 %v1115, %v508
        %v1128 = vmul.f32 %v1116, %v512
        %v1129 = vmul.f32 %v1117, %v516
        %v1130 = vmul.f32 %v1118, %v508
        %v1131 = vmul.f32 %v1119, %v512
        %v1132 = vmul.f32 %v1120, %v516
        %v1139 = vrot.slane %v1127, 1
        %v1140 = vrot.slane %v1130, 1
        %v1141 = vsel %vm403, %v1139, %v1140
        %v1142 = vrot.slane %v1128, 1
        %v1143 = vrot.slane %v1131, 1
        %v1144 = vsel %vm403, %v1142, %v1143
        %v1145 = vrot.slane %v1129, 1
        %v1146 = vrot.slane %v1132, 1
        %v1147 = vsel %vm403, %v1145, %v1146
        %v1154 = vadd.f32 %v1121, %v1141
        %v1155 = vadd.f32 %v1122, %v1144
        %v1156 = vadd.f32 %v1123, %v1147
        %v1157 = vadd.f32 %v1124, %v1140
        %v1158 = vadd.f32 %v1125, %v1143
        %v1159 = vadd.f32 %v1126, %v1146
        %v1160 = vmul.f32 %v1115, %v557
        %v1161 = vmul.f32 %v1116, %v561
        %v1162 = vmul.f32 %v1117, %v565
        %v1163 = vmul.f32 %v1118, %v557
        %v1164 = vmul.f32 %v1119, %v561
        %v1165 = vmul.f32 %v1120, %v565
        %v1172 = vrot.slane %v1160, 2
        %v1173 = vrot.slane %v1163, 2
        %v1174 = vsel %vm453, %v1172, %v1173
        %v1175 = vrot.slane %v1161, 2
        %v1176 = vrot.slane %v1164, 2
        %v1177 = vsel %vm453, %v1175, %v1176
        %v1178 = vrot.slane %v1162, 2
        %v1179 = vrot.slane %v1165, 2
        %v1180 = vsel %vm453, %v1178, %v1179
        %v1187 = vadd.f32 %v1154, %v1174
        %v1188 = vadd.f32 %v1155, %v1177
        %v1189 = vadd.f32 %v1156, %v1180
        %v1190 = vadd.f32 %v1157, %v1173
        %v1191 = vadd.f32 %v1158, %v1176
        %v1192 = vadd.f32 %v1159, %v1179
        %v1193 = vadd.f32 %v1109, %v1187
        %v1194 = vadd.f32 %v1110, %v1188
        %v1195 = vadd.f32 %v1111, %v1189
        %v1196 = vadd.f32 %v1112, %v1190
        %v1197 = vadd.f32 %v1113, %v1191
        %v1198 = vadd.f32 %v1114, %v1192
        %s1199 = scalar_lea.vmem %s259, 192 [#allocation2]
        %v1200 = vld [vmem:[%s1199] sm:$0xff]
        %v1201 = vld [vmem:[%s1199 + $0x8] sm:$0xff]
        %v1202 = vld [vmem:[%s1199 + $0x10] sm:$0xff]
        %v1203 = vld [vmem:[%s1199 + $0x18] sm:$0xff]
        %v1204 = vld [vmem:[%s1199 + $0x20] sm:$0xff]
        %v1205 = vld [vmem:[%s1199 + $0x28] sm:$0xff]
        %v1206 = vmul.f32 %v1200, %v619
        %v1207 = vmul.f32 %v1201, %v623
        %v1208 = vmul.f32 %v1202, %v627
        %v1209 = vmul.f32 %v1203, %v619
        %v1210 = vmul.f32 %v1204, %v623
        %v1211 = vmul.f32 %v1205, %v627
        %v1212 = vmul.f32 %v1200, %v641
        %v1213 = vmul.f32 %v1201, %v645
        %v1214 = vmul.f32 %v1202, %v649
        %v1215 = vmul.f32 %v1203, %v641
        %v1216 = vmul.f32 %v1204, %v645
        %v1217 = vmul.f32 %v1205, %v649
        %v1224 = vrot.slane %v1212, 1
        %v1225 = vrot.slane %v1215, 1
        %v1226 = vsel %vm403, %v1224, %v1225
        %v1227 = vrot.slane %v1213, 1
        %v1228 = vrot.slane %v1216, 1
        %v1229 = vsel %vm403, %v1227, %v1228
        %v1230 = vrot.slane %v1214, 1
        %v1231 = vrot.slane %v1217, 1
        %v1232 = vsel %vm403, %v1230, %v1231
        %v1239 = vadd.f32 %v1206, %v1226
        %v1240 = vadd.f32 %v1207, %v1229
        %v1241 = vadd.f32 %v1208, %v1232
        %v1242 = vadd.f32 %v1209, %v1225
        %v1243 = vadd.f32 %v1210, %v1228
        %v1244 = vadd.f32 %v1211, %v1231
        %v1245 = vmul.f32 %v1200, %v690
        %v1246 = vmul.f32 %v1201, %v694
        %v1247 = vmul.f32 %v1202, %v698
        %v1248 = vmul.f32 %v1203, %v690
        %v1249 = vmul.f32 %v1204, %v694
        %v1250 = vmul.f32 %v1205, %v698
        %v1257 = vrot.slane %v1245, 2
        %v1258 = vrot.slane %v1248, 2
        %v1259 = vsel %vm453, %v1257, %v1258
        %v1260 = vrot.slane %v1246, 2
        %v1261 = vrot.slane %v1249, 2
        %v1262 = vsel %vm453, %v1260, %v1261
        %v1263 = vrot.slane %v1247, 2
        %v1264 = vrot.slane %v1250, 2
        %v1265 = vsel %vm453, %v1263, %v1264
        %v1272 = vadd.f32 %v1239, %v1259
        %v1273 = vadd.f32 %v1240, %v1262
        %v1274 = vadd.f32 %v1241, %v1265
        %v1275 = vadd.f32 %v1242, %v1258
        %v1276 = vadd.f32 %v1243, %v1261
        %v1277 = vadd.f32 %v1244, %v1264
        %v1278 = vadd.f32 %v1193, %v1272
        %v1279 = vadd.f32 %v1194, %v1273
        %v1280 = vadd.f32 %v1195, %v1274
        %v1281 = vadd.f32 %v1196, %v1275
        %v1282 = vadd.f32 %v1197, %v1276
        %v1283 = vadd.f32 %v1198, %v1277
        %s1284 = scalar_lea.vmem %s324, 96 [#allocation9]
        %1285 = vst [vmem:[%s1284] sm:$0xff] %v1278
        %1286 = vst [vmem:[%s1284 + $0x8] sm:$0xff] %v1279
        %1287 = vst [vmem:[%s1284 + $0x10] sm:$0xff] %v1280
        %1288 = vst [vmem:[%s1284 + $0x18] sm:$0x3f] %v1281
        %1289 = vst [vmem:[%s1284 + $0x20] sm:$0x3f] %v1282
        %1290 = vst [vmem:[%s1284 + $0x28] sm:$0x3f] %v1283
        %v1291 = vadd.f32 %v1019, %v1278
        %v1292 = vadd.f32 %v1020, %v1279
        %v1293 = vadd.f32 %v1021, %v1280
        %v1294 = vadd.f32 %v1022, %v1281
        %v1295 = vadd.f32 %v1023, %v1282
        %v1296 = vadd.f32 %v1024, %v1283
        %v1297 = vmul.f32 %v1278, %v1278
        %v1298 = vmul.f32 %v1279, %v1279
        %v1299 = vmul.f32 %v1280, %v1280
        %v1300 = vmul.f32 %v1281, %v1281
        %v1301 = vmul.f32 %v1282, %v1282
        %v1302 = vmul.f32 %v1283, %v1283
        %v1303 = vadd.f32 %v1031, %v1297
        %v1304 = vadd.f32 %v1032, %v1298
        %v1305 = vadd.f32 %v1033, %v1299
        %v1306 = vadd.f32 %v1034, %v1300
        %v1307 = vadd.f32 %v1035, %v1301
        %v1308 = vadd.f32 %v1036, %v1302
        %v1309 = vld [vmem:[%s927] sm:$0xff]
        %v1310 = vld [vmem:[%s927 + $0x8] sm:$0xff]
        %v1311 = vld [vmem:[%s927 + $0x10] sm:$0xff]
        %v1312 = vld [vmem:[%s927 + $0x18] sm:$0xff]
        %v1313 = vld [vmem:[%s927 + $0x20] sm:$0xff]
        %v1314 = vld [vmem:[%s927 + $0x28] sm:$0xff]
        %v1315 = vmul.f32 %v1309, %v357
        %v1316 = vmul.f32 %v1310, %v361
        %v1317 = vmul.f32 %v1311, %v365
        %v1318 = vmul.f32 %v1312, %v357
        %v1319 = vmul.f32 %v1313, %v361
        %v1320 = vmul.f32 %v1314, %v365
        %v1321 = vmul.f32 %v1309, %v379
        %v1322 = vmul.f32 %v1310, %v383
        %v1323 = vmul.f32 %v1311, %v387
        %v1324 = vmul.f32 %v1312, %v379
        %v1325 = vmul.f32 %v1313, %v383
        %v1326 = vmul.f32 %v1314, %v387
        %v1333 = vrot.slane %v1321, 1
        %v1334 = vrot.slane %v1324, 1
        %v1335 = vsel %vm403, %v1333, %v1334
        %v1336 = vrot.slane %v1322, 1
        %v1337 = vrot.slane %v1325, 1
        %v1338 = vsel %vm403, %v1336, %v1337
        %v1339 = vrot.slane %v1323, 1
        %v1340 = vrot.slane %v1326, 1
        %v1341 = vsel %vm403, %v1339, %v1340
        %v1348 = vadd.f32 %v1315, %v1335
        %v1349 = vadd.f32 %v1316, %v1338
        %v1350 = vadd.f32 %v1317, %v1341
        %v1351 = vadd.f32 %v1318, %v1334
        %v1352 = vadd.f32 %v1319, %v1337
        %v1353 = vadd.f32 %v1320, %v1340
        %v1354 = vmul.f32 %v1309, %v429
        %v1355 = vmul.f32 %v1310, %v433
        %v1356 = vmul.f32 %v1311, %v437
        %v1357 = vmul.f32 %v1312, %v429
        %v1358 = vmul.f32 %v1313, %v433
        %v1359 = vmul.f32 %v1314, %v437
        %v1366 = vrot.slane %v1354, 2
        %v1367 = vrot.slane %v1357, 2
        %v1368 = vsel %vm453, %v1366, %v1367
        %v1369 = vrot.slane %v1355, 2
        %v1370 = vrot.slane %v1358, 2
        %v1371 = vsel %vm453, %v1369, %v1370
        %v1372 = vrot.slane %v1356, 2
        %v1373 = vrot.slane %v1359, 2
        %v1374 = vsel %vm453, %v1372, %v1373
        %v1381 = vadd.f32 %v1348, %v1368
        %v1382 = vadd.f32 %v1349, %v1371
        %v1383 = vadd.f32 %v1350, %v1374
        %v1384 = vadd.f32 %v1351, %v1367
        %v1385 = vadd.f32 %v1352, %v1370
        %v1386 = vadd.f32 %v1353, %v1373
        %v1387 = vld [vmem:[%s1199] sm:$0xff]
        %v1388 = vld [vmem:[%s1199 + $0x8] sm:$0xff]
        %v1389 = vld [vmem:[%s1199 + $0x10] sm:$0xff]
        %v1390 = vld [vmem:[%s1199 + $0x18] sm:$0xff]
        %v1391 = vld [vmem:[%s1199 + $0x20] sm:$0xff]
        %v1392 = vld [vmem:[%s1199 + $0x28] sm:$0xff]
        %v1393 = vmul.f32 %v1387, %v486
        %v1394 = vmul.f32 %v1388, %v490
        %v1395 = vmul.f32 %v1389, %v494
        %v1396 = vmul.f32 %v1390, %v486
        %v1397 = vmul.f32 %v1391, %v490
        %v1398 = vmul.f32 %v1392, %v494
        %v1399 = vmul.f32 %v1387, %v508
        %v1400 = vmul.f32 %v1388, %v512
        %v1401 = vmul.f32 %v1389, %v516
        %v1402 = vmul.f32 %v1390, %v508
        %v1403 = vmul.f32 %v1391, %v512
        %v1404 = vmul.f32 %v1392, %v516
        %v1411 = vrot.slane %v1399, 1
        %v1412 = vrot.slane %v1402, 1
        %v1413 = vsel %vm403, %v1411, %v1412
        %v1414 = vrot.slane %v1400, 1
        %v1415 = vrot.slane %v1403, 1
        %v1416 = vsel %vm403, %v1414, %v1415
        %v1417 = vrot.slane %v1401, 1
        %v1418 = vrot.slane %v1404, 1
        %v1419 = vsel %vm403, %v1417, %v1418
        %v1426 = vadd.f32 %v1393, %v1413
        %v1427 = vadd.f32 %v1394, %v1416
        %v1428 = vadd.f32 %v1395, %v1419
        %v1429 = vadd.f32 %v1396, %v1412
        %v1430 = vadd.f32 %v1397, %v1415
        %v1431 = vadd.f32 %v1398, %v1418
        %v1432 = vmul.f32 %v1387, %v557
        %v1433 = vmul.f32 %v1388, %v561
        %v1434 = vmul.f32 %v1389, %v565
        %v1435 = vmul.f32 %v1390, %v557
        %v1436 = vmul.f32 %v1391, %v561
        %v1437 = vmul.f32 %v1392, %v565
        %v1444 = vrot.slane %v1432, 2
        %v1445 = vrot.slane %v1435, 2
        %v1446 = vsel %vm453, %v1444, %v1445
        %v1447 = vrot.slane %v1433, 2
        %v1448 = vrot.slane %v1436, 2
        %v1449 = vsel %vm453, %v1447, %v1448
        %v1450 = vrot.slane %v1434, 2
        %v1451 = vrot.slane %v1437, 2
        %v1452 = vsel %vm453, %v1450, %v1451
        %v1459 = vadd.f32 %v1426, %v1446
        %v1460 = vadd.f32 %v1427, %v1449
        %v1461 = vadd.f32 %v1428, %v1452
        %v1462 = vadd.f32 %v1429, %v1445
        %v1463 = vadd.f32 %v1430, %v1448
        %v1464 = vadd.f32 %v1431, %v1451
        %v1465 = vadd.f32 %v1381, %v1459
        %v1466 = vadd.f32 %v1382, %v1460
        %v1467 = vadd.f32 %v1383, %v1461
        %v1468 = vadd.f32 %v1384, %v1462
        %v1469 = vadd.f32 %v1385, %v1463
        %v1470 = vadd.f32 %v1386, %v1464
        %s1471 = scalar_lea.vmem %s259, 240 [#allocation2]
        %v1472 = vld [vmem:[%s1471] sm:$0xff]
        %v1473 = vld [vmem:[%s1471 + $0x8] sm:$0xff]
        %v1474 = vld [vmem:[%s1471 + $0x10] sm:$0xff]
        %v1475 = vld [vmem:[%s1471 + $0x18] sm:$0xff]
        %v1476 = vld [vmem:[%s1471 + $0x20] sm:$0xff]
        %v1477 = vld [vmem:[%s1471 + $0x28] sm:$0xff]
        %v1478 = vmul.f32 %v1472, %v619
        %v1479 = vmul.f32 %v1473, %v623
        %v1480 = vmul.f32 %v1474, %v627
        %v1481 = vmul.f32 %v1475, %v619
        %v1482 = vmul.f32 %v1476, %v623
        %v1483 = vmul.f32 %v1477, %v627
        %v1484 = vmul.f32 %v1472, %v641
        %v1485 = vmul.f32 %v1473, %v645
        %v1486 = vmul.f32 %v1474, %v649
        %v1487 = vmul.f32 %v1475, %v641
        %v1488 = vmul.f32 %v1476, %v645
        %v1489 = vmul.f32 %v1477, %v649
        %v1496 = vrot.slane %v1484, 1
        %v1497 = vrot.slane %v1487, 1
        %v1498 = vsel %vm403, %v1496, %v1497
        %v1499 = vrot.slane %v1485, 1
        %v1500 = vrot.slane %v1488, 1
        %v1501 = vsel %vm403, %v1499, %v1500
        %v1502 = vrot.slane %v1486, 1
        %v1503 = vrot.slane %v1489, 1
        %v1504 = vsel %vm403, %v1502, %v1503
        %v1511 = vadd.f32 %v1478, %v1498
        %v1512 = vadd.f32 %v1479, %v1501
        %v1513 = vadd.f32 %v1480, %v1504
        %v1514 = vadd.f32 %v1481, %v1497
        %v1515 = vadd.f32 %v1482, %v1500
        %v1516 = vadd.f32 %v1483, %v1503
        %v1517 = vmul.f32 %v1472, %v690
        %v1518 = vmul.f32 %v1473, %v694
        %v1519 = vmul.f32 %v1474, %v698
        %v1520 = vmul.f32 %v1475, %v690
        %v1521 = vmul.f32 %v1476, %v694
        %v1522 = vmul.f32 %v1477, %v698
        %v1529 = vrot.slane %v1517, 2
        %v1530 = vrot.slane %v1520, 2
        %v1531 = vsel %vm453, %v1529, %v1530
        %v1532 = vrot.slane %v1518, 2
        %v1533 = vrot.slane %v1521, 2
        %v1534 = vsel %vm453, %v1532, %v1533
        %v1535 = vrot.slane %v1519, 2
        %v1536 = vrot.slane %v1522, 2
        %v1537 = vsel %vm453, %v1535, %v1536
        %v1544 = vadd.f32 %v1511, %v1531
        %v1545 = vadd.f32 %v1512, %v1534
        %v1546 = vadd.f32 %v1513, %v1537
        %v1547 = vadd.f32 %v1514, %v1530
        %v1548 = vadd.f32 %v1515, %v1533
        %v1549 = vadd.f32 %v1516, %v1536
        %v1550 = vadd.f32 %v1465, %v1544
        %v1551 = vadd.f32 %v1466, %v1545
        %v1552 = vadd.f32 %v1467, %v1546
        %v1553 = vadd.f32 %v1468, %v1547
        %v1554 = vadd.f32 %v1469, %v1548
        %v1555 = vadd.f32 %v1470, %v1549
        %s1556 = scalar_lea.vmem %s324, 144 [#allocation9]
        %1557 = vst [vmem:[%s1556] sm:$0xff] %v1550
        %1558 = vst [vmem:[%s1556 + $0x8] sm:$0xff] %v1551
        %1559 = vst [vmem:[%s1556 + $0x10] sm:$0xff] %v1552
        %1560 = vst [vmem:[%s1556 + $0x18] sm:$0x3f] %v1553
        %1561 = vst [vmem:[%s1556 + $0x20] sm:$0x3f] %v1554
        %1562 = vst [vmem:[%s1556 + $0x28] sm:$0x3f] %v1555
        %v1563 = vadd.f32 %v1291, %v1550
        %v1564 = vadd.f32 %v1292, %v1551
        %v1565 = vadd.f32 %v1293, %v1552
        %v1566 = vadd.f32 %v1294, %v1553
        %v1567 = vadd.f32 %v1295, %v1554
        %v1568 = vadd.f32 %v1296, %v1555
        %v1569 = vmul.f32 %v1550, %v1550
        %v1570 = vmul.f32 %v1551, %v1551
        %v1571 = vmul.f32 %v1552, %v1552
        %v1572 = vmul.f32 %v1553, %v1553
        %v1573 = vmul.f32 %v1554, %v1554
        %v1574 = vmul.f32 %v1555, %v1555
        %v1575 = vadd.f32 %v1303, %v1569
        %v1576 = vadd.f32 %v1304, %v1570
        %v1577 = vadd.f32 %v1305, %v1571
        %v1578 = vadd.f32 %v1306, %v1572
        %v1579 = vadd.f32 %v1307, %v1573
        %v1580 = vadd.f32 %v1308, %v1574
        %v1581 = vld [vmem:[%s1199] sm:$0xff]
        %v1582 = vld [vmem:[%s1199 + $0x8] sm:$0xff]
        %v1583 = vld [vmem:[%s1199 + $0x10] sm:$0xff]
        %v1584 = vld [vmem:[%s1199 + $0x18] sm:$0xff]
        %v1585 = vld [vmem:[%s1199 + $0x20] sm:$0xff]
        %v1586 = vld [vmem:[%s1199 + $0x28] sm:$0xff]
        %v1587 = vmul.f32 %v1581, %v357
        %v1588 = vmul.f32 %v1582, %v361
        %v1589 = vmul.f32 %v1583, %v365
        %v1590 = vmul.f32 %v1584, %v357
        %v1591 = vmul.f32 %v1585, %v361
        %v1592 = vmul.f32 %v1586, %v365
        %v1593 = vmul.f32 %v1581, %v379
        %v1594 = vmul.f32 %v1582, %v383
        %v1595 = vmul.f32 %v1583, %v387
        %v1596 = vmul.f32 %v1584, %v379
        %v1597 = vmul.f32 %v1585, %v383
        %v1598 = vmul.f32 %v1586, %v387
        %v1605 = vrot.slane %v1593, 1
        %v1606 = vrot.slane %v1596, 1
        %v1607 = vsel %vm403, %v1605, %v1606
        %v1608 = vrot.slane %v1594, 1
        %v1609 = vrot.slane %v1597, 1
        %v1610 = vsel %vm403, %v1608, %v1609
        %v1611 = vrot.slane %v1595, 1
        %v1612 = vrot.slane %v1598, 1
        %v1613 = vsel %vm403, %v1611, %v1612
        %v1620 = vadd.f32 %v1587, %v1607
        %v1621 = vadd.f32 %v1588, %v1610
        %v1622 = vadd.f32 %v1589, %v1613
        %v1623 = vadd.f32 %v1590, %v1606
        %v1624 = vadd.f32 %v1591, %v1609
        %v1625 = vadd.f32 %v1592, %v1612
        %v1626 = vmul.f32 %v1581, %v429
        %v1627 = vmul.f32 %v1582, %v433
        %v1628 = vmul.f32 %v1583, %v437
        %v1629 = vmul.f32 %v1584, %v429
        %v1630 = vmul.f32 %v1585, %v433
        %v1631 = vmul.f32 %v1586, %v437
        %v1638 = vrot.slane %v1626, 2
        %v1639 = vrot.slane %v1629, 2
        %v1640 = vsel %vm453, %v1638, %v1639
        %v1641 = vrot.slane %v1627, 2
        %v1642 = vrot.slane %v1630, 2
        %v1643 = vsel %vm453, %v1641, %v1642
        %v1644 = vrot.slane %v1628, 2
        %v1645 = vrot.slane %v1631, 2
        %v1646 = vsel %vm453, %v1644, %v1645
        %v1653 = vadd.f32 %v1620, %v1640
        %v1654 = vadd.f32 %v1621, %v1643
        %v1655 = vadd.f32 %v1622, %v1646
        %v1656 = vadd.f32 %v1623, %v1639
        %v1657 = vadd.f32 %v1624, %v1642
        %v1658 = vadd.f32 %v1625, %v1645
        %v1659 = vld [vmem:[%s1471] sm:$0xff]
        %v1660 = vld [vmem:[%s1471 + $0x8] sm:$0xff]
        %v1661 = vld [vmem:[%s1471 + $0x10] sm:$0xff]
        %v1662 = vld [vmem:[%s1471 + $0x18] sm:$0xff]
        %v1663 = vld [vmem:[%s1471 + $0x20] sm:$0xff]
        %v1664 = vld [vmem:[%s1471 + $0x28] sm:$0xff]
        %v1665 = vmul.f32 %v1659, %v486
        %v1666 = vmul.f32 %v1660, %v490
        %v1667 = vmul.f32 %v1661, %v494
        %v1668 = vmul.f32 %v1662, %v486
        %v1669 = vmul.f32 %v1663, %v490
        %v1670 = vmul.f32 %v1664, %v494
        %v1671 = vmul.f32 %v1659, %v508
        %v1672 = vmul.f32 %v1660, %v512
        %v1673 = vmul.f32 %v1661, %v516
        %v1674 = vmul.f32 %v1662, %v508
        %v1675 = vmul.f32 %v1663, %v512
        %v1676 = vmul.f32 %v1664, %v516
        %v1683 = vrot.slane %v1671, 1
        %v1684 = vrot.slane %v1674, 1
        %v1685 = vsel %vm403, %v1683, %v1684
        %v1686 = vrot.slane %v1672, 1
        %v1687 = vrot.slane %v1675, 1
        %v1688 = vsel %vm403, %v1686, %v1687
        %v1689 = vrot.slane %v1673, 1
        %v1690 = vrot.slane %v1676, 1
        %v1691 = vsel %vm403, %v1689, %v1690
        %v1698 = vadd.f32 %v1665, %v1685
        %v1699 = vadd.f32 %v1666, %v1688
        %v1700 = vadd.f32 %v1667, %v1691
        %v1701 = vadd.f32 %v1668, %v1684
        %v1702 = vadd.f32 %v1669, %v1687
        %v1703 = vadd.f32 %v1670, %v1690
        %v1704 = vmul.f32 %v1659, %v557
        %v1705 = vmul.f32 %v1660, %v561
        %v1706 = vmul.f32 %v1661, %v565
        %v1707 = vmul.f32 %v1662, %v557
        %v1708 = vmul.f32 %v1663, %v561
        %v1709 = vmul.f32 %v1664, %v565
        %v1716 = vrot.slane %v1704, 2
        %v1717 = vrot.slane %v1707, 2
        %v1718 = vsel %vm453, %v1716, %v1717
        %v1719 = vrot.slane %v1705, 2
        %v1720 = vrot.slane %v1708, 2
        %v1721 = vsel %vm453, %v1719, %v1720
        %v1722 = vrot.slane %v1706, 2
        %v1723 = vrot.slane %v1709, 2
        %v1724 = vsel %vm453, %v1722, %v1723
        %v1731 = vadd.f32 %v1698, %v1718
        %v1732 = vadd.f32 %v1699, %v1721
        %v1733 = vadd.f32 %v1700, %v1724
        %v1734 = vadd.f32 %v1701, %v1717
        %v1735 = vadd.f32 %v1702, %v1720
        %v1736 = vadd.f32 %v1703, %v1723
        %v1737 = vadd.f32 %v1653, %v1731
        %v1738 = vadd.f32 %v1654, %v1732
        %v1739 = vadd.f32 %v1655, %v1733
        %v1740 = vadd.f32 %v1656, %v1734
        %v1741 = vadd.f32 %v1657, %v1735
        %v1742 = vadd.f32 %v1658, %v1736
        %s1743 = scalar_lea.vmem %s259, 288 [#allocation2]
        %v1744 = vld [vmem:[%s1743] sm:$0xff]
        %v1745 = vld [vmem:[%s1743 + $0x8] sm:$0xff]
        %v1746 = vld [vmem:[%s1743 + $0x10] sm:$0xff]
        %v1747 = vld [vmem:[%s1743 + $0x18] sm:$0xff]
        %v1748 = vld [vmem:[%s1743 + $0x20] sm:$0xff]
        %v1749 = vld [vmem:[%s1743 + $0x28] sm:$0xff]
        %v1750 = vmul.f32 %v1744, %v619
        %v1751 = vmul.f32 %v1745, %v623
        %v1752 = vmul.f32 %v1746, %v627
        %v1753 = vmul.f32 %v1747, %v619
        %v1754 = vmul.f32 %v1748, %v623
        %v1755 = vmul.f32 %v1749, %v627
        %v1756 = vmul.f32 %v1744, %v641
        %v1757 = vmul.f32 %v1745, %v645
        %v1758 = vmul.f32 %v1746, %v649
        %v1759 = vmul.f32 %v1747, %v641
        %v1760 = vmul.f32 %v1748, %v645
        %v1761 = vmul.f32 %v1749, %v649
        %v1768 = vrot.slane %v1756, 1
        %v1769 = vrot.slane %v1759, 1
        %v1770 = vsel %vm403, %v1768, %v1769
        %v1771 = vrot.slane %v1757, 1
        %v1772 = vrot.slane %v1760, 1
        %v1773 = vsel %vm403, %v1771, %v1772
        %v1774 = vrot.slane %v1758, 1
        %v1775 = vrot.slane %v1761, 1
        %v1776 = vsel %vm403, %v1774, %v1775
        %v1783 = vadd.f32 %v1750, %v1770
        %v1784 = vadd.f32 %v1751, %v1773
        %v1785 = vadd.f32 %v1752, %v1776
        %v1786 = vadd.f32 %v1753, %v1769
        %v1787 = vadd.f32 %v1754, %v1772
        %v1788 = vadd.f32 %v1755, %v1775
        %v1789 = vmul.f32 %v1744, %v690
        %v1790 = vmul.f32 %v1745, %v694
        %v1791 = vmul.f32 %v1746, %v698
        %v1792 = vmul.f32 %v1747, %v690
        %v1793 = vmul.f32 %v1748, %v694
        %v1794 = vmul.f32 %v1749, %v698
        %v1801 = vrot.slane %v1789, 2
        %v1802 = vrot.slane %v1792, 2
        %v1803 = vsel %vm453, %v1801, %v1802
        %v1804 = vrot.slane %v1790, 2
        %v1805 = vrot.slane %v1793, 2
        %v1806 = vsel %vm453, %v1804, %v1805
        %v1807 = vrot.slane %v1791, 2
        %v1808 = vrot.slane %v1794, 2
        %v1809 = vsel %vm453, %v1807, %v1808
        %v1816 = vadd.f32 %v1783, %v1803
        %v1817 = vadd.f32 %v1784, %v1806
        %v1818 = vadd.f32 %v1785, %v1809
        %v1819 = vadd.f32 %v1786, %v1802
        %v1820 = vadd.f32 %v1787, %v1805
        %v1821 = vadd.f32 %v1788, %v1808
        %v1822 = vadd.f32 %v1737, %v1816
        %v1823 = vadd.f32 %v1738, %v1817
        %v1824 = vadd.f32 %v1739, %v1818
        %v1825 = vadd.f32 %v1740, %v1819
        %v1826 = vadd.f32 %v1741, %v1820
        %v1827 = vadd.f32 %v1742, %v1821
        %s1828 = scalar_lea.vmem %s324, 192 [#allocation9]
        %1829 = vst [vmem:[%s1828] sm:$0xff] %v1822
        %1830 = vst [vmem:[%s1828 + $0x8] sm:$0xff] %v1823
        %1831 = vst [vmem:[%s1828 + $0x10] sm:$0xff] %v1824
        %1832 = vst [vmem:[%s1828 + $0x18] sm:$0x3f] %v1825
        %1833 = vst [vmem:[%s1828 + $0x20] sm:$0x3f] %v1826
        %1834 = vst [vmem:[%s1828 + $0x28] sm:$0x3f] %v1827
        %v1835 = vadd.f32 %v1563, %v1822
        %v1836 = vadd.f32 %v1564, %v1823
        %v1837 = vadd.f32 %v1565, %v1824
        %v1838 = vadd.f32 %v1566, %v1825
        %v1839 = vadd.f32 %v1567, %v1826
        %v1840 = vadd.f32 %v1568, %v1827
        %v1841 = vmul.f32 %v1822, %v1822
        %v1842 = vmul.f32 %v1823, %v1823
        %v1843 = vmul.f32 %v1824, %v1824
        %v1844 = vmul.f32 %v1825, %v1825
        %v1845 = vmul.f32 %v1826, %v1826
        %v1846 = vmul.f32 %v1827, %v1827
        %v1847 = vadd.f32 %v1575, %v1841
        %v1848 = vadd.f32 %v1576, %v1842
        %v1849 = vadd.f32 %v1577, %v1843
        %v1850 = vadd.f32 %v1578, %v1844
        %v1851 = vadd.f32 %v1579, %v1845
        %v1852 = vadd.f32 %v1580, %v1846
        %v1853 = vld [vmem:[%s1471] sm:$0xff]
        %v1854 = vld [vmem:[%s1471 + $0x8] sm:$0xff]
        %v1855 = vld [vmem:[%s1471 + $0x10] sm:$0xff]
        %v1856 = vld [vmem:[%s1471 + $0x18] sm:$0xff]
        %v1857 = vld [vmem:[%s1471 + $0x20] sm:$0xff]
        %v1858 = vld [vmem:[%s1471 + $0x28] sm:$0xff]
        %v1859 = vmul.f32 %v1853, %v357
        %v1860 = vmul.f32 %v1854, %v361
        %v1861 = vmul.f32 %v1855, %v365
        %v1862 = vmul.f32 %v1856, %v357
        %v1863 = vmul.f32 %v1857, %v361
        %v1864 = vmul.f32 %v1858, %v365
        %v1865 = vmul.f32 %v1853, %v379
        %v1866 = vmul.f32 %v1854, %v383
        %v1867 = vmul.f32 %v1855, %v387
        %v1868 = vmul.f32 %v1856, %v379
        %v1869 = vmul.f32 %v1857, %v383
        %v1870 = vmul.f32 %v1858, %v387
        %v1877 = vrot.slane %v1865, 1
        %v1878 = vrot.slane %v1868, 1
        %v1879 = vsel %vm403, %v1877, %v1878
        %v1880 = vrot.slane %v1866, 1
        %v1881 = vrot.slane %v1869, 1
        %v1882 = vsel %vm403, %v1880, %v1881
        %v1883 = vrot.slane %v1867, 1
        %v1884 = vrot.slane %v1870, 1
        %v1885 = vsel %vm403, %v1883, %v1884
        %v1892 = vadd.f32 %v1859, %v1879
        %v1893 = vadd.f32 %v1860, %v1882
        %v1894 = vadd.f32 %v1861, %v1885
        %v1895 = vadd.f32 %v1862, %v1878
        %v1896 = vadd.f32 %v1863, %v1881
        %v1897 = vadd.f32 %v1864, %v1884
        %v1898 = vmul.f32 %v1853, %v429
        %v1899 = vmul.f32 %v1854, %v433
        %v1900 = vmul.f32 %v1855, %v437
        %v1901 = vmul.f32 %v1856, %v429
        %v1902 = vmul.f32 %v1857, %v433
        %v1903 = vmul.f32 %v1858, %v437
        %v1910 = vrot.slane %v1898, 2
        %v1911 = vrot.slane %v1901, 2
        %v1912 = vsel %vm453, %v1910, %v1911
        %v1913 = vrot.slane %v1899, 2
        %v1914 = vrot.slane %v1902, 2
        %v1915 = vsel %vm453, %v1913, %v1914
        %v1916 = vrot.slane %v1900, 2
        %v1917 = vrot.slane %v1903, 2
        %v1918 = vsel %vm453, %v1916, %v1917
        %v1925 = vadd.f32 %v1892, %v1912
        %v1926 = vadd.f32 %v1893, %v1915
        %v1927 = vadd.f32 %v1894, %v1918
        %v1928 = vadd.f32 %v1895, %v1911
        %v1929 = vadd.f32 %v1896, %v1914
        %v1930 = vadd.f32 %v1897, %v1917
        %v1931 = vld [vmem:[%s1743] sm:$0xff]
        %v1932 = vld [vmem:[%s1743 + $0x8] sm:$0xff]
        %v1933 = vld [vmem:[%s1743 + $0x10] sm:$0xff]
        %v1934 = vld [vmem:[%s1743 + $0x18] sm:$0xff]
        %v1935 = vld [vmem:[%s1743 + $0x20] sm:$0xff]
        %v1936 = vld [vmem:[%s1743 + $0x28] sm:$0xff]
        %v1937 = vmul.f32 %v1931, %v486
        %v1938 = vmul.f32 %v1932, %v490
        %v1939 = vmul.f32 %v1933, %v494
        %v1940 = vmul.f32 %v1934, %v486
        %v1941 = vmul.f32 %v1935, %v490
        %v1942 = vmul.f32 %v1936, %v494
        %v1943 = vmul.f32 %v1931, %v508
        %v1944 = vmul.f32 %v1932, %v512
        %v1945 = vmul.f32 %v1933, %v516
        %v1946 = vmul.f32 %v1934, %v508
        %v1947 = vmul.f32 %v1935, %v512
        %v1948 = vmul.f32 %v1936, %v516
        %v1955 = vrot.slane %v1943, 1
        %v1956 = vrot.slane %v1946, 1
        %v1957 = vsel %vm403, %v1955, %v1956
        %v1958 = vrot.slane %v1944, 1
        %v1959 = vrot.slane %v1947, 1
        %v1960 = vsel %vm403, %v1958, %v1959
        %v1961 = vrot.slane %v1945, 1
        %v1962 = vrot.slane %v1948, 1
        %v1963 = vsel %vm403, %v1961, %v1962
        %v1970 = vadd.f32 %v1937, %v1957
        %v1971 = vadd.f32 %v1938, %v1960
        %v1972 = vadd.f32 %v1939, %v1963
        %v1973 = vadd.f32 %v1940, %v1956
        %v1974 = vadd.f32 %v1941, %v1959
        %v1975 = vadd.f32 %v1942, %v1962
        %v1976 = vmul.f32 %v1931, %v557
        %v1977 = vmul.f32 %v1932, %v561
        %v1978 = vmul.f32 %v1933, %v565
        %v1979 = vmul.f32 %v1934, %v557
        %v1980 = vmul.f32 %v1935, %v561
        %v1981 = vmul.f32 %v1936, %v565
        %v1988 = vrot.slane %v1976, 2
        %v1989 = vrot.slane %v1979, 2
        %v1990 = vsel %vm453, %v1988, %v1989
        %v1991 = vrot.slane %v1977, 2
        %v1992 = vrot.slane %v1980, 2
        %v1993 = vsel %vm453, %v1991, %v1992
        %v1994 = vrot.slane %v1978, 2
        %v1995 = vrot.slane %v1981, 2
        %v1996 = vsel %vm453, %v1994, %v1995
        %v2003 = vadd.f32 %v1970, %v1990
        %v2004 = vadd.f32 %v1971, %v1993
        %v2005 = vadd.f32 %v1972, %v1996
        %v2006 = vadd.f32 %v1973, %v1989
        %v2007 = vadd.f32 %v1974, %v1992
        %v2008 = vadd.f32 %v1975, %v1995
        %v2009 = vadd.f32 %v1925, %v2003
        %v2010 = vadd.f32 %v1926, %v2004
        %v2011 = vadd.f32 %v1927, %v2005
        %v2012 = vadd.f32 %v1928, %v2006
        %v2013 = vadd.f32 %v1929, %v2007
        %v2014 = vadd.f32 %v1930, %v2008
        %s2015 = scalar_lea.vmem %s259, 336 [#allocation2]
        %v2016 = vld [vmem:[%s2015] sm:$0xff]
        %v2017 = vld [vmem:[%s2015 + $0x8] sm:$0xff]
        %v2018 = vld [vmem:[%s2015 + $0x10] sm:$0xff]
        %v2019 = vld [vmem:[%s2015 + $0x18] sm:$0xff]
        %v2020 = vld [vmem:[%s2015 + $0x20] sm:$0xff]
        %v2021 = vld [vmem:[%s2015 + $0x28] sm:$0xff]
        %v2022 = vmul.f32 %v2016, %v619
        %v2023 = vmul.f32 %v2017, %v623
        %v2024 = vmul.f32 %v2018, %v627
        %v2025 = vmul.f32 %v2019, %v619
        %v2026 = vmul.f32 %v2020, %v623
        %v2027 = vmul.f32 %v2021, %v627
        %v2028 = vmul.f32 %v2016, %v641
        %v2029 = vmul.f32 %v2017, %v645
        %v2030 = vmul.f32 %v2018, %v649
        %v2031 = vmul.f32 %v2019, %v641
        %v2032 = vmul.f32 %v2020, %v645
        %v2033 = vmul.f32 %v2021, %v649
        %v2040 = vrot.slane %v2028, 1
        %v2041 = vrot.slane %v2031, 1
        %v2042 = vsel %vm403, %v2040, %v2041
        %v2043 = vrot.slane %v2029, 1
        %v2044 = vrot.slane %v2032, 1
        %v2045 = vsel %vm403, %v2043, %v2044
        %v2046 = vrot.slane %v2030, 1
        %v2047 = vrot.slane %v2033, 1
        %v2048 = vsel %vm403, %v2046, %v2047
        %v2055 = vadd.f32 %v2022, %v2042
        %v2056 = vadd.f32 %v2023, %v2045
        %v2057 = vadd.f32 %v2024, %v2048
        %v2058 = vadd.f32 %v2025, %v2041
        %v2059 = vadd.f32 %v2026, %v2044
        %v2060 = vadd.f32 %v2027, %v2047
        %v2061 = vmul.f32 %v2016, %v690
        %v2062 = vmul.f32 %v2017, %v694
        %v2063 = vmul.f32 %v2018, %v698
        %v2064 = vmul.f32 %v2019, %v690
        %v2065 = vmul.f32 %v2020, %v694
        %v2066 = vmul.f32 %v2021, %v698
        %v2073 = vrot.slane %v2061, 2
        %v2074 = vrot.slane %v2064, 2
        %v2075 = vsel %vm453, %v2073, %v2074
        %v2076 = vrot.slane %v2062, 2
        %v2077 = vrot.slane %v2065, 2
        %v2078 = vsel %vm453, %v2076, %v2077
        %v2079 = vrot.slane %v2063, 2
        %v2080 = vrot.slane %v2066, 2
        %v2081 = vsel %vm453, %v2079, %v2080
        %v2088 = vadd.f32 %v2055, %v2075
        %v2089 = vadd.f32 %v2056, %v2078
        %v2090 = vadd.f32 %v2057, %v2081
        %v2091 = vadd.f32 %v2058, %v2074
        %v2092 = vadd.f32 %v2059, %v2077
        %v2093 = vadd.f32 %v2060, %v2080
        %v2094 = vadd.f32 %v2009, %v2088
        %v2095 = vadd.f32 %v2010, %v2089
        %v2096 = vadd.f32 %v2011, %v2090
        %v2097 = vadd.f32 %v2012, %v2091
        %v2098 = vadd.f32 %v2013, %v2092
        %v2099 = vadd.f32 %v2014, %v2093
        %s2100 = scalar_lea.vmem %s324, 240 [#allocation9]
        %2101 = vst [vmem:[%s2100] sm:$0xff] %v2094
        %2102 = vst [vmem:[%s2100 + $0x8] sm:$0xff] %v2095
        %2103 = vst [vmem:[%s2100 + $0x10] sm:$0xff] %v2096
        %2104 = vst [vmem:[%s2100 + $0x18] sm:$0x3f] %v2097
        %2105 = vst [vmem:[%s2100 + $0x20] sm:$0x3f] %v2098
        %2106 = vst [vmem:[%s2100 + $0x28] sm:$0x3f] %v2099
        %v2107 = vadd.f32 %v1835, %v2094
        %v2108 = vadd.f32 %v1836, %v2095
        %v2109 = vadd.f32 %v1837, %v2096
        %v2110 = vadd.f32 %v1838, %v2097
        %v2111 = vadd.f32 %v1839, %v2098
        %v2112 = vadd.f32 %v1840, %v2099
        %v2113 = vmul.f32 %v2094, %v2094
        %v2114 = vmul.f32 %v2095, %v2095
        %v2115 = vmul.f32 %v2096, %v2096
        %v2116 = vmul.f32 %v2097, %v2097
        %v2117 = vmul.f32 %v2098, %v2098
        %v2118 = vmul.f32 %v2099, %v2099
        %v2119 = vadd.f32 %v1847, %v2113
        %v2120 = vadd.f32 %v1848, %v2114
        %v2121 = vadd.f32 %v1849, %v2115
        %v2122 = vadd.f32 %v1850, %v2116
        %v2123 = vadd.f32 %v1851, %v2117
        %v2124 = vadd.f32 %v1852, %v2118
        %v2125 = vld [vmem:[%s1743] sm:$0xff]
        %v2126 = vld [vmem:[%s1743 + $0x8] sm:$0xff]
        %v2127 = vld [vmem:[%s1743 + $0x10] sm:$0xff]
        %v2128 = vld [vmem:[%s1743 + $0x18] sm:$0xff]
        %v2129 = vld [vmem:[%s1743 + $0x20] sm:$0xff]
        %v2130 = vld [vmem:[%s1743 + $0x28] sm:$0xff]
        %v2131 = vmul.f32 %v2125, %v357
        %v2132 = vmul.f32 %v2126, %v361
        %v2133 = vmul.f32 %v2127, %v365
        %v2134 = vmul.f32 %v2128, %v357
        %v2135 = vmul.f32 %v2129, %v361
        %v2136 = vmul.f32 %v2130, %v365
        %v2137 = vmul.f32 %v2125, %v379
        %v2138 = vmul.f32 %v2126, %v383
        %v2139 = vmul.f32 %v2127, %v387
        %v2140 = vmul.f32 %v2128, %v379
        %v2141 = vmul.f32 %v2129, %v383
        %v2142 = vmul.f32 %v2130, %v387
        %v2149 = vrot.slane %v2137, 1
        %v2150 = vrot.slane %v2140, 1
        %v2151 = vsel %vm403, %v2149, %v2150
        %v2152 = vrot.slane %v2138, 1
        %v2153 = vrot.slane %v2141, 1
        %v2154 = vsel %vm403, %v2152, %v2153
        %v2155 = vrot.slane %v2139, 1
        %v2156 = vrot.slane %v2142, 1
        %v2157 = vsel %vm403, %v2155, %v2156
        %v2164 = vadd.f32 %v2131, %v2151
        %v2165 = vadd.f32 %v2132, %v2154
        %v2166 = vadd.f32 %v2133, %v2157
        %v2167 = vadd.f32 %v2134, %v2150
        %v2168 = vadd.f32 %v2135, %v2153
        %v2169 = vadd.f32 %v2136, %v2156
        %v2170 = vmul.f32 %v2125, %v429
        %v2171 = vmul.f32 %v2126, %v433
        %v2172 = vmul.f32 %v2127, %v437
        %v2173 = vmul.f32 %v2128, %v429
        %v2174 = vmul.f32 %v2129, %v433
        %v2175 = vmul.f32 %v2130, %v437
        %v2182 = vrot.slane %v2170, 2
        %v2183 = vrot.slane %v2173, 2
        %v2184 = vsel %vm453, %v2182, %v2183
        %v2185 = vrot.slane %v2171, 2
        %v2186 = vrot.slane %v2174, 2
        %v2187 = vsel %vm453, %v2185, %v2186
        %v2188 = vrot.slane %v2172, 2
        %v2189 = vrot.slane %v2175, 2
        %v2190 = vsel %vm453, %v2188, %v2189
        %v2197 = vadd.f32 %v2164, %v2184
        %v2198 = vadd.f32 %v2165, %v2187
        %v2199 = vadd.f32 %v2166, %v2190
        %v2200 = vadd.f32 %v2167, %v2183
        %v2201 = vadd.f32 %v2168, %v2186
        %v2202 = vadd.f32 %v2169, %v2189
        %v2203 = vld [vmem:[%s2015] sm:$0xff]
        %v2204 = vld [vmem:[%s2015 + $0x8] sm:$0xff]
        %v2205 = vld [vmem:[%s2015 + $0x10] sm:$0xff]
        %v2206 = vld [vmem:[%s2015 + $0x18] sm:$0xff]
        %v2207 = vld [vmem:[%s2015 + $0x20] sm:$0xff]
        %v2208 = vld [vmem:[%s2015 + $0x28] sm:$0xff]
        %v2209 = vmul.f32 %v2203, %v486
        %v2210 = vmul.f32 %v2204, %v490
        %v2211 = vmul.f32 %v2205, %v494
        %v2212 = vmul.f32 %v2206, %v486
        %v2213 = vmul.f32 %v2207, %v490
        %v2214 = vmul.f32 %v2208, %v494
        %v2215 = vmul.f32 %v2203, %v508
        %v2216 = vmul.f32 %v2204, %v512
        %v2217 = vmul.f32 %v2205, %v516
        %v2218 = vmul.f32 %v2206, %v508
        %v2219 = vmul.f32 %v2207, %v512
        %v2220 = vmul.f32 %v2208, %v516
        %v2227 = vrot.slane %v2215, 1
        %v2228 = vrot.slane %v2218, 1
        %v2229 = vsel %vm403, %v2227, %v2228
        %v2230 = vrot.slane %v2216, 1
        %v2231 = vrot.slane %v2219, 1
        %v2232 = vsel %vm403, %v2230, %v2231
        %v2233 = vrot.slane %v2217, 1
        %v2234 = vrot.slane %v2220, 1
        %v2235 = vsel %vm403, %v2233, %v2234
        %v2242 = vadd.f32 %v2209, %v2229
        %v2243 = vadd.f32 %v2210, %v2232
        %v2244 = vadd.f32 %v2211, %v2235
        %v2245 = vadd.f32 %v2212, %v2228
        %v2246 = vadd.f32 %v2213, %v2231
        %v2247 = vadd.f32 %v2214, %v2234
        %v2248 = vmul.f32 %v2203, %v557
        %v2249 = vmul.f32 %v2204, %v561
        %v2250 = vmul.f32 %v2205, %v565
        %v2251 = vmul.f32 %v2206, %v557
        %v2252 = vmul.f32 %v2207, %v561
        %v2253 = vmul.f32 %v2208, %v565
        %v2260 = vrot.slane %v2248, 2
        %v2261 = vrot.slane %v2251, 2
        %v2262 = vsel %vm453, %v2260, %v2261
        %v2263 = vrot.slane %v2249, 2
        %v2264 = vrot.slane %v2252, 2
        %v2265 = vsel %vm453, %v2263, %v2264
        %v2266 = vrot.slane %v2250, 2
        %v2267 = vrot.slane %v2253, 2
        %v2268 = vsel %vm453, %v2266, %v2267
        %v2275 = vadd.f32 %v2242, %v2262
        %v2276 = vadd.f32 %v2243, %v2265
        %v2277 = vadd.f32 %v2244, %v2268
        %v2278 = vadd.f32 %v2245, %v2261
        %v2279 = vadd.f32 %v2246, %v2264
        %v2280 = vadd.f32 %v2247, %v2267
        %v2281 = vadd.f32 %v2197, %v2275
        %v2282 = vadd.f32 %v2198, %v2276
        %v2283 = vadd.f32 %v2199, %v2277
        %v2284 = vadd.f32 %v2200, %v2278
        %v2285 = vadd.f32 %v2201, %v2279
        %v2286 = vadd.f32 %v2202, %v2280
        %s2287 = scalar_lea.vmem %s259, 384 [#allocation2]
        %v2288 = vld [vmem:[%s2287] sm:$0xff]
        %v2289 = vld [vmem:[%s2287 + $0x8] sm:$0xff]
        %v2290 = vld [vmem:[%s2287 + $0x10] sm:$0xff]
        %v2291 = vld [vmem:[%s2287 + $0x18] sm:$0xff]
        %v2292 = vld [vmem:[%s2287 + $0x20] sm:$0xff]
        %v2293 = vld [vmem:[%s2287 + $0x28] sm:$0xff]
        %v2294 = vmul.f32 %v2288, %v619
        %v2295 = vmul.f32 %v2289, %v623
        %v2296 = vmul.f32 %v2290, %v627
        %v2297 = vmul.f32 %v2291, %v619
        %v2298 = vmul.f32 %v2292, %v623
        %v2299 = vmul.f32 %v2293, %v627
        %v2300 = vmul.f32 %v2288, %v641
        %v2301 = vmul.f32 %v2289, %v645
        %v2302 = vmul.f32 %v2290, %v649
        %v2303 = vmul.f32 %v2291, %v641
        %v2304 = vmul.f32 %v2292, %v645
        %v2305 = vmul.f32 %v2293, %v649
        %v2312 = vrot.slane %v2300, 1
        %v2313 = vrot.slane %v2303, 1
        %v2314 = vsel %vm403, %v2312, %v2313
        %v2315 = vrot.slane %v2301, 1
        %v2316 = vrot.slane %v2304, 1
        %v2317 = vsel %vm403, %v2315, %v2316
        %v2318 = vrot.slane %v2302, 1
        %v2319 = vrot.slane %v2305, 1
        %v2320 = vsel %vm403, %v2318, %v2319
        %v2327 = vadd.f32 %v2294, %v2314
        %v2328 = vadd.f32 %v2295, %v2317
        %v2329 = vadd.f32 %v2296, %v2320
        %v2330 = vadd.f32 %v2297, %v2313
        %v2331 = vadd.f32 %v2298, %v2316
        %v2332 = vadd.f32 %v2299, %v2319
        %v2333 = vmul.f32 %v2288, %v690
        %v2334 = vmul.f32 %v2289, %v694
        %v2335 = vmul.f32 %v2290, %v698
        %v2336 = vmul.f32 %v2291, %v690
        %v2337 = vmul.f32 %v2292, %v694
        %v2338 = vmul.f32 %v2293, %v698
        %v2345 = vrot.slane %v2333, 2
        %v2346 = vrot.slane %v2336, 2
        %v2347 = vsel %vm453, %v2345, %v2346
        %v2348 = vrot.slane %v2334, 2
        %v2349 = vrot.slane %v2337, 2
        %v2350 = vsel %vm453, %v2348, %v2349
        %v2351 = vrot.slane %v2335, 2
        %v2352 = vrot.slane %v2338, 2
        %v2353 = vsel %vm453, %v2351, %v2352
        %v2360 = vadd.f32 %v2327, %v2347
        %v2361 = vadd.f32 %v2328, %v2350
        %v2362 = vadd.f32 %v2329, %v2353
        %v2363 = vadd.f32 %v2330, %v2346
        %v2364 = vadd.f32 %v2331, %v2349
        %v2365 = vadd.f32 %v2332, %v2352
        %v2366 = vadd.f32 %v2281, %v2360
        %v2367 = vadd.f32 %v2282, %v2361
        %v2368 = vadd.f32 %v2283, %v2362
        %v2369 = vadd.f32 %v2284, %v2363
        %v2370 = vadd.f32 %v2285, %v2364
        %v2371 = vadd.f32 %v2286, %v2365
        %s2372 = scalar_lea.vmem %s324, 288 [#allocation9]
        %2373 = vst [vmem:[%s2372] sm:$0xff] %v2366
        %2374 = vst [vmem:[%s2372 + $0x8] sm:$0xff] %v2367
        %2375 = vst [vmem:[%s2372 + $0x10] sm:$0xff] %v2368
        %2376 = vst [vmem:[%s2372 + $0x18] sm:$0x3f] %v2369
        %2377 = vst [vmem:[%s2372 + $0x20] sm:$0x3f] %v2370
        %2378 = vst [vmem:[%s2372 + $0x28] sm:$0x3f] %v2371
        %v2379 = vadd.f32 %v2107, %v2366
        %v2380 = vadd.f32 %v2108, %v2367
        %v2381 = vadd.f32 %v2109, %v2368
        %v2382 = vadd.f32 %v2110, %v2369
        %v2383 = vadd.f32 %v2111, %v2370
        %v2384 = vadd.f32 %v2112, %v2371
        %v2385 = vmul.f32 %v2366, %v2366
        %v2386 = vmul.f32 %v2367, %v2367
        %v2387 = vmul.f32 %v2368, %v2368
        %v2388 = vmul.f32 %v2369, %v2369
        %v2389 = vmul.f32 %v2370, %v2370
        %v2390 = vmul.f32 %v2371, %v2371
        %v2391 = vadd.f32 %v2119, %v2385
        %v2392 = vadd.f32 %v2120, %v2386
        %v2393 = vadd.f32 %v2121, %v2387
        %v2394 = vadd.f32 %v2122, %v2388
        %v2395 = vadd.f32 %v2123, %v2389
        %v2396 = vadd.f32 %v2124, %v2390
        %v2397 = vld [vmem:[%s2015] sm:$0xff]
        %v2398 = vld [vmem:[%s2015 + $0x8] sm:$0xff]
        %v2399 = vld [vmem:[%s2015 + $0x10] sm:$0xff]
        %v2400 = vld [vmem:[%s2015 + $0x18] sm:$0xff]
        %v2401 = vld [vmem:[%s2015 + $0x20] sm:$0xff]
        %v2402 = vld [vmem:[%s2015 + $0x28] sm:$0xff]
        %v2403 = vmul.f32 %v2397, %v357
        %v2404 = vmul.f32 %v2398, %v361
        %v2405 = vmul.f32 %v2399, %v365
        %v2406 = vmul.f32 %v2400, %v357
        %v2407 = vmul.f32 %v2401, %v361
        %v2408 = vmul.f32 %v2402, %v365
        %v2409 = vmul.f32 %v2397, %v379
        %v2410 = vmul.f32 %v2398, %v383
        %v2411 = vmul.f32 %v2399, %v387
        %v2412 = vmul.f32 %v2400, %v379
        %v2413 = vmul.f32 %v2401, %v383
        %v2414 = vmul.f32 %v2402, %v387
        %v2421 = vrot.slane %v2409, 1
        %v2422 = vrot.slane %v2412, 1
        %v2423 = vsel %vm403, %v2421, %v2422
        %v2424 = vrot.slane %v2410, 1
        %v2425 = vrot.slane %v2413, 1
        %v2426 = vsel %vm403, %v2424, %v2425
        %v2427 = vrot.slane %v2411, 1
        %v2428 = vrot.slane %v2414, 1
        %v2429 = vsel %vm403, %v2427, %v2428
        %v2436 = vadd.f32 %v2403, %v2423
        %v2437 = vadd.f32 %v2404, %v2426
        %v2438 = vadd.f32 %v2405, %v2429
        %v2439 = vadd.f32 %v2406, %v2422
        %v2440 = vadd.f32 %v2407, %v2425
        %v2441 = vadd.f32 %v2408, %v2428
        %v2442 = vmul.f32 %v2397, %v429
        %v2443 = vmul.f32 %v2398, %v433
        %v2444 = vmul.f32 %v2399, %v437
        %v2445 = vmul.f32 %v2400, %v429
        %v2446 = vmul.f32 %v2401, %v433
        %v2447 = vmul.f32 %v2402, %v437
        %v2454 = vrot.slane %v2442, 2
        %v2455 = vrot.slane %v2445, 2
        %v2456 = vsel %vm453, %v2454, %v2455
        %v2457 = vrot.slane %v2443, 2
        %v2458 = vrot.slane %v2446, 2
        %v2459 = vsel %vm453, %v2457, %v2458
        %v2460 = vrot.slane %v2444, 2
        %v2461 = vrot.slane %v2447, 2
        %v2462 = vsel %vm453, %v2460, %v2461
        %v2469 = vadd.f32 %v2436, %v2456
        %v2470 = vadd.f32 %v2437, %v2459
        %v2471 = vadd.f32 %v2438, %v2462
        %v2472 = vadd.f32 %v2439, %v2455
        %v2473 = vadd.f32 %v2440, %v2458
        %v2474 = vadd.f32 %v2441, %v2461
        %v2475 = vld [vmem:[%s2287] sm:$0xff]
        %v2476 = vld [vmem:[%s2287 + $0x8] sm:$0xff]
        %v2477 = vld [vmem:[%s2287 + $0x10] sm:$0xff]
        %v2478 = vld [vmem:[%s2287 + $0x18] sm:$0xff]
        %v2479 = vld [vmem:[%s2287 + $0x20] sm:$0xff]
        %v2480 = vld [vmem:[%s2287 + $0x28] sm:$0xff]
        %v2481 = vmul.f32 %v2475, %v486
        %v2482 = vmul.f32 %v2476, %v490
        %v2483 = vmul.f32 %v2477, %v494
        %v2484 = vmul.f32 %v2478, %v486
        %v2485 = vmul.f32 %v2479, %v490
        %v2486 = vmul.f32 %v2480, %v494
        %v2487 = vmul.f32 %v2475, %v508
        %v2488 = vmul.f32 %v2476, %v512
        %v2489 = vmul.f32 %v2477, %v516
        %v2490 = vmul.f32 %v2478, %v508
        %v2491 = vmul.f32 %v2479, %v512
        %v2492 = vmul.f32 %v2480, %v516
        %v2499 = vrot.slane %v2487, 1
        %v2500 = vrot.slane %v2490, 1
        %v2501 = vsel %vm403, %v2499, %v2500
        %v2502 = vrot.slane %v2488, 1
        %v2503 = vrot.slane %v2491, 1
        %v2504 = vsel %vm403, %v2502, %v2503
        %v2505 = vrot.slane %v2489, 1
        %v2506 = vrot.slane %v2492, 1
        %v2507 = vsel %vm403, %v2505, %v2506
        %v2514 = vadd.f32 %v2481, %v2501
        %v2515 = vadd.f32 %v2482, %v2504
        %v2516 = vadd.f32 %v2483, %v2507
        %v2517 = vadd.f32 %v2484, %v2500
        %v2518 = vadd.f32 %v2485, %v2503
        %v2519 = vadd.f32 %v2486, %v2506
        %v2520 = vmul.f32 %v2475, %v557
        %v2521 = vmul.f32 %v2476, %v561
        %v2522 = vmul.f32 %v2477, %v565
        %v2523 = vmul.f32 %v2478, %v557
        %v2524 = vmul.f32 %v2479, %v561
        %v2525 = vmul.f32 %v2480, %v565
        %v2532 = vrot.slane %v2520, 2
        %v2533 = vrot.slane %v2523, 2
        %v2534 = vsel %vm453, %v2532, %v2533
        %v2535 = vrot.slane %v2521, 2
        %v2536 = vrot.slane %v2524, 2
        %v2537 = vsel %vm453, %v2535, %v2536
        %v2538 = vrot.slane %v2522, 2
        %v2539 = vrot.slane %v2525, 2
        %v2540 = vsel %vm453, %v2538, %v2539
        %v2547 = vadd.f32 %v2514, %v2534
        %v2548 = vadd.f32 %v2515, %v2537
        %v2549 = vadd.f32 %v2516, %v2540
        %v2550 = vadd.f32 %v2517, %v2533
        %v2551 = vadd.f32 %v2518, %v2536
        %v2552 = vadd.f32 %v2519, %v2539
        %v2553 = vadd.f32 %v2469, %v2547
        %v2554 = vadd.f32 %v2470, %v2548
        %v2555 = vadd.f32 %v2471, %v2549
        %v2556 = vadd.f32 %v2472, %v2550
        %v2557 = vadd.f32 %v2473, %v2551
        %v2558 = vadd.f32 %v2474, %v2552
        %s2559 = scalar_lea.vmem %s259, 432 [#allocation2]
        %v2560 = vld [vmem:[%s2559] sm:$0xff]
        %v2561 = vld [vmem:[%s2559 + $0x8] sm:$0xff]
        %v2562 = vld [vmem:[%s2559 + $0x10] sm:$0xff]
        %v2563 = vld [vmem:[%s2559 + $0x18] sm:$0xff]
        %v2564 = vld [vmem:[%s2559 + $0x20] sm:$0xff]
        %v2565 = vld [vmem:[%s2559 + $0x28] sm:$0xff]
        %v2566 = vmul.f32 %v2560, %v619
        %v2567 = vmul.f32 %v2561, %v623
        %v2568 = vmul.f32 %v2562, %v627
        %v2569 = vmul.f32 %v2563, %v619
        %v2570 = vmul.f32 %v2564, %v623
        %v2571 = vmul.f32 %v2565, %v627
        %v2572 = vmul.f32 %v2560, %v641
        %v2573 = vmul.f32 %v2561, %v645
        %v2574 = vmul.f32 %v2562, %v649
        %v2575 = vmul.f32 %v2563, %v641
        %v2576 = vmul.f32 %v2564, %v645
        %v2577 = vmul.f32 %v2565, %v649
        %v2584 = vrot.slane %v2572, 1
        %v2585 = vrot.slane %v2575, 1
        %v2586 = vsel %vm403, %v2584, %v2585
        %v2587 = vrot.slane %v2573, 1
        %v2588 = vrot.slane %v2576, 1
        %v2589 = vsel %vm403, %v2587, %v2588
        %v2590 = vrot.slane %v2574, 1
        %v2591 = vrot.slane %v2577, 1
        %v2592 = vsel %vm403, %v2590, %v2591
        %v2599 = vadd.f32 %v2566, %v2586
        %v2600 = vadd.f32 %v2567, %v2589
        %v2601 = vadd.f32 %v2568, %v2592
        %v2602 = vadd.f32 %v2569, %v2585
        %v2603 = vadd.f32 %v2570, %v2588
        %v2604 = vadd.f32 %v2571, %v2591
        %v2605 = vmul.f32 %v2560, %v690
        %v2606 = vmul.f32 %v2561, %v694
        %v2607 = vmul.f32 %v2562, %v698
        %v2608 = vmul.f32 %v2563, %v690
        %v2609 = vmul.f32 %v2564, %v694
        %v2610 = vmul.f32 %v2565, %v698
        %v2617 = vrot.slane %v2605, 2
        %v2618 = vrot.slane %v2608, 2
        %v2619 = vsel %vm453, %v2617, %v2618
        %v2620 = vrot.slane %v2606, 2
        %v2621 = vrot.slane %v2609, 2
        %v2622 = vsel %vm453, %v2620, %v2621
        %v2623 = vrot.slane %v2607, 2
        %v2624 = vrot.slane %v2610, 2
        %v2625 = vsel %vm453, %v2623, %v2624
        %v2632 = vadd.f32 %v2599, %v2619
        %v2633 = vadd.f32 %v2600, %v2622
        %v2634 = vadd.f32 %v2601, %v2625
        %v2635 = vadd.f32 %v2602, %v2618
        %v2636 = vadd.f32 %v2603, %v2621
        %v2637 = vadd.f32 %v2604, %v2624
        %v2638 = vadd.f32 %v2553, %v2632
        %v2639 = vadd.f32 %v2554, %v2633
        %v2640 = vadd.f32 %v2555, %v2634
        %v2641 = vadd.f32 %v2556, %v2635
        %v2642 = vadd.f32 %v2557, %v2636
        %v2643 = vadd.f32 %v2558, %v2637
        %s2644 = scalar_lea.vmem %s324, 336 [#allocation9]
        %2645 = vst [vmem:[%s2644] sm:$0xff] %v2638
        %2646 = vst [vmem:[%s2644 + $0x8] sm:$0xff] %v2639
        %2647 = vst [vmem:[%s2644 + $0x10] sm:$0xff] %v2640
        %2648 = vst [vmem:[%s2644 + $0x18] sm:$0x3f] %v2641
        %2649 = vst [vmem:[%s2644 + $0x20] sm:$0x3f] %v2642
        %2650 = vst [vmem:[%s2644 + $0x28] sm:$0x3f] %v2643
        %v2651 = vadd.f32 %v2379, %v2638
        %v2652 = vadd.f32 %v2380, %v2639
        %v2653 = vadd.f32 %v2381, %v2640
        %v2654 = vadd.f32 %v2382, %v2641
        %v2655 = vadd.f32 %v2383, %v2642
        %v2656 = vadd.f32 %v2384, %v2643
        %v2657 = vmul.f32 %v2638, %v2638
        %v2658 = vmul.f32 %v2639, %v2639
        %v2659 = vmul.f32 %v2640, %v2640
        %v2660 = vmul.f32 %v2641, %v2641
        %v2661 = vmul.f32 %v2642, %v2642
        %v2662 = vmul.f32 %v2643, %v2643
        %v2663 = vadd.f32 %v2391, %v2657
        %v2664 = vadd.f32 %v2392, %v2658
        %v2665 = vadd.f32 %v2393, %v2659
        %v2666 = vadd.f32 %v2394, %v2660
        %v2667 = vadd.f32 %v2395, %v2661
        %v2668 = vadd.f32 %v2396, %v2662
        %v2669 = vld [vmem:[%s2287] sm:$0xff]
        %v2670 = vld [vmem:[%s2287 + $0x8] sm:$0xff]
        %v2671 = vld [vmem:[%s2287 + $0x10] sm:$0xff]
        %v2672 = vld [vmem:[%s2287 + $0x18] sm:$0xff]
        %v2673 = vld [vmem:[%s2287 + $0x20] sm:$0xff]
        %v2674 = vld [vmem:[%s2287 + $0x28] sm:$0xff]
        %v2675 = vmul.f32 %v2669, %v357
        %v2676 = vmul.f32 %v2670, %v361
        %v2677 = vmul.f32 %v2671, %v365
        %v2678 = vmul.f32 %v2672, %v357
        %v2679 = vmul.f32 %v2673, %v361
        %v2680 = vmul.f32 %v2674, %v365
        %v2681 = vmul.f32 %v2669, %v379
        %v2682 = vmul.f32 %v2670, %v383
        %v2683 = vmul.f32 %v2671, %v387
        %v2684 = vmul.f32 %v2672, %v379
        %v2685 = vmul.f32 %v2673, %v383
        %v2686 = vmul.f32 %v2674, %v387
        %v2693 = vrot.slane %v2681, 1
        %v2694 = vrot.slane %v2684, 1
        %v2695 = vsel %vm403, %v2693, %v2694
        %v2696 = vrot.slane %v2682, 1
        %v2697 = vrot.slane %v2685, 1
        %v2698 = vsel %vm403, %v2696, %v2697
        %v2699 = vrot.slane %v2683, 1
        %v2700 = vrot.slane %v2686, 1
        %v2701 = vsel %vm403, %v2699, %v2700
        %v2708 = vadd.f32 %v2675, %v2695
        %v2709 = vadd.f32 %v2676, %v2698
        %v2710 = vadd.f32 %v2677, %v2701
        %v2711 = vadd.f32 %v2678, %v2694
        %v2712 = vadd.f32 %v2679, %v2697
        %v2713 = vadd.f32 %v2680, %v2700
        %v2714 = vmul.f32 %v2669, %v429
        %v2715 = vmul.f32 %v2670, %v433
        %v2716 = vmul.f32 %v2671, %v437
        %v2717 = vmul.f32 %v2672, %v429
        %v2718 = vmul.f32 %v2673, %v433
        %v2719 = vmul.f32 %v2674, %v437
        %v2726 = vrot.slane %v2714, 2
        %v2727 = vrot.slane %v2717, 2
        %v2728 = vsel %vm453, %v2726, %v2727
        %v2729 = vrot.slane %v2715, 2
        %v2730 = vrot.slane %v2718, 2
        %v2731 = vsel %vm453, %v2729, %v2730
        %v2732 = vrot.slane %v2716, 2
        %v2733 = vrot.slane %v2719, 2
        %v2734 = vsel %vm453, %v2732, %v2733
        %v2741 = vadd.f32 %v2708, %v2728
        %v2742 = vadd.f32 %v2709, %v2731
        %v2743 = vadd.f32 %v2710, %v2734
        %v2744 = vadd.f32 %v2711, %v2727
        %v2745 = vadd.f32 %v2712, %v2730
        %v2746 = vadd.f32 %v2713, %v2733
        %v2747 = vld [vmem:[%s2559] sm:$0xff]
        %v2748 = vld [vmem:[%s2559 + $0x8] sm:$0xff]
        %v2749 = vld [vmem:[%s2559 + $0x10] sm:$0xff]
        %v2750 = vld [vmem:[%s2559 + $0x18] sm:$0xff]
        %v2751 = vld [vmem:[%s2559 + $0x20] sm:$0xff]
        %v2752 = vld [vmem:[%s2559 + $0x28] sm:$0xff]
        %v2753 = vmul.f32 %v2747, %v486
        %v2754 = vmul.f32 %v2748, %v490
        %v2755 = vmul.f32 %v2749, %v494
        %v2756 = vmul.f32 %v2750, %v486
        %v2757 = vmul.f32 %v2751, %v490
        %v2758 = vmul.f32 %v2752, %v494
        %v2759 = vmul.f32 %v2747, %v508
        %v2760 = vmul.f32 %v2748, %v512
        %v2761 = vmul.f32 %v2749, %v516
        %v2762 = vmul.f32 %v2750, %v508
        %v2763 = vmul.f32 %v2751, %v512
        %v2764 = vmul.f32 %v2752, %v516
        %v2771 = vrot.slane %v2759, 1
        %v2772 = vrot.slane %v2762, 1
        %v2773 = vsel %vm403, %v2771, %v2772
        %v2774 = vrot.slane %v2760, 1
        %v2775 = vrot.slane %v2763, 1
        %v2776 = vsel %vm403, %v2774, %v2775
        %v2777 = vrot.slane %v2761, 1
        %v2778 = vrot.slane %v2764, 1
        %v2779 = vsel %vm403, %v2777, %v2778
        %v2786 = vadd.f32 %v2753, %v2773
        %v2787 = vadd.f32 %v2754, %v2776
        %v2788 = vadd.f32 %v2755, %v2779
        %v2789 = vadd.f32 %v2756, %v2772
        %v2790 = vadd.f32 %v2757, %v2775
        %v2791 = vadd.f32 %v2758, %v2778
        %v2792 = vmul.f32 %v2747, %v557
        %v2793 = vmul.f32 %v2748, %v561
        %v2794 = vmul.f32 %v2749, %v565
        %v2795 = vmul.f32 %v2750, %v557
        %v2796 = vmul.f32 %v2751, %v561
        %v2797 = vmul.f32 %v2752, %v565
        %v2804 = vrot.slane %v2792, 2
        %v2805 = vrot.slane %v2795, 2
        %v2806 = vsel %vm453, %v2804, %v2805
        %v2807 = vrot.slane %v2793, 2
        %v2808 = vrot.slane %v2796, 2
        %v2809 = vsel %vm453, %v2807, %v2808
        %v2810 = vrot.slane %v2794, 2
        %v2811 = vrot.slane %v2797, 2
        %v2812 = vsel %vm453, %v2810, %v2811
        %v2819 = vadd.f32 %v2786, %v2806
        %v2820 = vadd.f32 %v2787, %v2809
        %v2821 = vadd.f32 %v2788, %v2812
        %v2822 = vadd.f32 %v2789, %v2805
        %v2823 = vadd.f32 %v2790, %v2808
        %v2824 = vadd.f32 %v2791, %v2811
        %v2825 = vadd.f32 %v2741, %v2819
        %v2826 = vadd.f32 %v2742, %v2820
        %v2827 = vadd.f32 %v2743, %v2821
        %v2828 = vadd.f32 %v2744, %v2822
        %v2829 = vadd.f32 %v2745, %v2823
        %v2830 = vadd.f32 %v2746, %v2824
        %s2831 = scalar_lea.vmem %s259, 480 [#allocation2]
        %v2832 = vld [vmem:[%s2831] sm:$0xff]
        %v2833 = vld [vmem:[%s2831 + $0x8] sm:$0xff]
        %v2834 = vld [vmem:[%s2831 + $0x10] sm:$0xff]
        %v2835 = vld [vmem:[%s2831 + $0x18] sm:$0xff]
        %v2836 = vld [vmem:[%s2831 + $0x20] sm:$0xff]
        %v2837 = vld [vmem:[%s2831 + $0x28] sm:$0xff]
        %v2838 = vmul.f32 %v2832, %v619
        %v2839 = vmul.f32 %v2833, %v623
        %v2840 = vmul.f32 %v2834, %v627
        %v2841 = vmul.f32 %v2835, %v619
        %v2842 = vmul.f32 %v2836, %v623
        %v2843 = vmul.f32 %v2837, %v627
        %v2844 = vmul.f32 %v2832, %v641
        %v2845 = vmul.f32 %v2833, %v645
        %v2846 = vmul.f32 %v2834, %v649
        %v2847 = vmul.f32 %v2835, %v641
        %v2848 = vmul.f32 %v2836, %v645
        %v2849 = vmul.f32 %v2837, %v649
        %v2856 = vrot.slane %v2844, 1
        %v2857 = vrot.slane %v2847, 1
        %v2858 = vsel %vm403, %v2856, %v2857
        %v2859 = vrot.slane %v2845, 1
        %v2860 = vrot.slane %v2848, 1
        %v2861 = vsel %vm403, %v2859, %v2860
        %v2862 = vrot.slane %v2846, 1
        %v2863 = vrot.slane %v2849, 1
        %v2864 = vsel %vm403, %v2862, %v2863
        %v2871 = vadd.f32 %v2838, %v2858
        %v2872 = vadd.f32 %v2839, %v2861
        %v2873 = vadd.f32 %v2840, %v2864
        %v2874 = vadd.f32 %v2841, %v2857
        %v2875 = vadd.f32 %v2842, %v2860
        %v2876 = vadd.f32 %v2843, %v2863
        %v2877 = vmul.f32 %v2832, %v690
        %v2878 = vmul.f32 %v2833, %v694
        %v2879 = vmul.f32 %v2834, %v698
        %v2880 = vmul.f32 %v2835, %v690
        %v2881 = vmul.f32 %v2836, %v694
        %v2882 = vmul.f32 %v2837, %v698
        %v2889 = vrot.slane %v2877, 2
        %v2890 = vrot.slane %v2880, 2
        %v2891 = vsel %vm453, %v2889, %v2890
        %v2892 = vrot.slane %v2878, 2
        %v2893 = vrot.slane %v2881, 2
        %v2894 = vsel %vm453, %v2892, %v2893
        %v2895 = vrot.slane %v2879, 2
        %v2896 = vrot.slane %v2882, 2
        %v2897 = vsel %vm453, %v2895, %v2896
        %v2904 = vadd.f32 %v2871, %v2891
        %v2905 = vadd.f32 %v2872, %v2894
        %v2906 = vadd.f32 %v2873, %v2897
        %v2907 = vadd.f32 %v2874, %v2890
        %v2908 = vadd.f32 %v2875, %v2893
        %v2909 = vadd.f32 %v2876, %v2896
        %v2910 = vadd.f32 %v2825, %v2904
        %v2911 = vadd.f32 %v2826, %v2905
        %v2912 = vadd.f32 %v2827, %v2906
        %v2913 = vadd.f32 %v2828, %v2907
        %v2914 = vadd.f32 %v2829, %v2908
        %v2915 = vadd.f32 %v2830, %v2909
        %s2916 = scalar_lea.vmem %s324, 384 [#allocation9]
        %2917 = vst [vmem:[%s2916] sm:$0xff] %v2910
        %2918 = vst [vmem:[%s2916 + $0x8] sm:$0xff] %v2911
        %2919 = vst [vmem:[%s2916 + $0x10] sm:$0xff] %v2912
        %2920 = vst [vmem:[%s2916 + $0x18] sm:$0x3f] %v2913
        %2921 = vst [vmem:[%s2916 + $0x20] sm:$0x3f] %v2914
        %2922 = vst [vmem:[%s2916 + $0x28] sm:$0x3f] %v2915
        %v2923 = vadd.f32 %v2651, %v2910
        %v2924 = vadd.f32 %v2652, %v2911
        %v2925 = vadd.f32 %v2653, %v2912
        %v2926 = vadd.f32 %v2654, %v2913
        %v2927 = vadd.f32 %v2655, %v2914
        %v2928 = vadd.f32 %v2656, %v2915
        %v2929 = vmul.f32 %v2910, %v2910
        %v2930 = vmul.f32 %v2911, %v2911
        %v2931 = vmul.f32 %v2912, %v2912
        %v2932 = vmul.f32 %v2913, %v2913
        %v2933 = vmul.f32 %v2914, %v2914
        %v2934 = vmul.f32 %v2915, %v2915
        %v2935 = vadd.f32 %v2663, %v2929
        %v2936 = vadd.f32 %v2664, %v2930
        %v2937 = vadd.f32 %v2665, %v2931
        %v2938 = vadd.f32 %v2666, %v2932
        %v2939 = vadd.f32 %v2667, %v2933
        %v2940 = vadd.f32 %v2668, %v2934
        %v2941 = vld [vmem:[%s2559] sm:$0xff]
        %v2942 = vld [vmem:[%s2559 + $0x8] sm:$0xff]
        %v2943 = vld [vmem:[%s2559 + $0x10] sm:$0xff]
        %v2944 = vld [vmem:[%s2559 + $0x18] sm:$0xff]
        %v2945 = vld [vmem:[%s2559 + $0x20] sm:$0xff]
        %v2946 = vld [vmem:[%s2559 + $0x28] sm:$0xff]
        %v2947 = vmul.f32 %v2941, %v357
        %v2948 = vmul.f32 %v2942, %v361
        %v2949 = vmul.f32 %v2943, %v365
        %v2950 = vmul.f32 %v2944, %v357
        %v2951 = vmul.f32 %v2945, %v361
        %v2952 = vmul.f32 %v2946, %v365
        %v2953 = vmul.f32 %v2941, %v379
        %v2954 = vmul.f32 %v2942, %v383
        %v2955 = vmul.f32 %v2943, %v387
        %v2956 = vmul.f32 %v2944, %v379
        %v2957 = vmul.f32 %v2945, %v383
        %v2958 = vmul.f32 %v2946, %v387
        %v2965 = vrot.slane %v2953, 1
        %v2966 = vrot.slane %v2956, 1
        %v2967 = vsel %vm403, %v2965, %v2966
        %v2968 = vrot.slane %v2954, 1
        %v2969 = vrot.slane %v2957, 1
        %v2970 = vsel %vm403, %v2968, %v2969
        %v2971 = vrot.slane %v2955, 1
        %v2972 = vrot.slane %v2958, 1
        %v2973 = vsel %vm403, %v2971, %v2972
        %v2980 = vadd.f32 %v2947, %v2967
        %v2981 = vadd.f32 %v2948, %v2970
        %v2982 = vadd.f32 %v2949, %v2973
        %v2983 = vadd.f32 %v2950, %v2966
        %v2984 = vadd.f32 %v2951, %v2969
        %v2985 = vadd.f32 %v2952, %v2972
        %v2986 = vmul.f32 %v2941, %v429
        %v2987 = vmul.f32 %v2942, %v433
        %v2988 = vmul.f32 %v2943, %v437
        %v2989 = vmul.f32 %v2944, %v429
        %v2990 = vmul.f32 %v2945, %v433
        %v2991 = vmul.f32 %v2946, %v437
        %v2998 = vrot.slane %v2986, 2
        %v2999 = vrot.slane %v2989, 2
        %v3000 = vsel %vm453, %v2998, %v2999
        %v3001 = vrot.slane %v2987, 2
        %v3002 = vrot.slane %v2990, 2
        %v3003 = vsel %vm453, %v3001, %v3002
        %v3004 = vrot.slane %v2988, 2
        %v3005 = vrot.slane %v2991, 2
        %v3006 = vsel %vm453, %v3004, %v3005
        %v3013 = vadd.f32 %v2980, %v3000
        %v3014 = vadd.f32 %v2981, %v3003
        %v3015 = vadd.f32 %v2982, %v3006
        %v3016 = vadd.f32 %v2983, %v2999
        %v3017 = vadd.f32 %v2984, %v3002
        %v3018 = vadd.f32 %v2985, %v3005
        %v3019 = vld [vmem:[%s2831] sm:$0xff]
        %v3020 = vld [vmem:[%s2831 + $0x8] sm:$0xff]
        %v3021 = vld [vmem:[%s2831 + $0x10] sm:$0xff]
        %v3022 = vld [vmem:[%s2831 + $0x18] sm:$0xff]
        %v3023 = vld [vmem:[%s2831 + $0x20] sm:$0xff]
        %v3024 = vld [vmem:[%s2831 + $0x28] sm:$0xff]
        %v3025 = vmul.f32 %v3019, %v486
        %v3026 = vmul.f32 %v3020, %v490
        %v3027 = vmul.f32 %v3021, %v494
        %v3028 = vmul.f32 %v3022, %v486
        %v3029 = vmul.f32 %v3023, %v490
        %v3030 = vmul.f32 %v3024, %v494
        %v3031 = vmul.f32 %v3019, %v508
        %v3032 = vmul.f32 %v3020, %v512
        %v3033 = vmul.f32 %v3021, %v516
        %v3034 = vmul.f32 %v3022, %v508
        %v3035 = vmul.f32 %v3023, %v512
        %v3036 = vmul.f32 %v3024, %v516
        %v3043 = vrot.slane %v3031, 1
        %v3044 = vrot.slane %v3034, 1
        %v3045 = vsel %vm403, %v3043, %v3044
        %v3046 = vrot.slane %v3032, 1
        %v3047 = vrot.slane %v3035, 1
        %v3048 = vsel %vm403, %v3046, %v3047
        %v3049 = vrot.slane %v3033, 1
        %v3050 = vrot.slane %v3036, 1
        %v3051 = vsel %vm403, %v3049, %v3050
        %v3058 = vadd.f32 %v3025, %v3045
        %v3059 = vadd.f32 %v3026, %v3048
        %v3060 = vadd.f32 %v3027, %v3051
        %v3061 = vadd.f32 %v3028, %v3044
        %v3062 = vadd.f32 %v3029, %v3047
        %v3063 = vadd.f32 %v3030, %v3050
        %v3064 = vmul.f32 %v3019, %v557
        %v3065 = vmul.f32 %v3020, %v561
        %v3066 = vmul.f32 %v3021, %v565
        %v3067 = vmul.f32 %v3022, %v557
        %v3068 = vmul.f32 %v3023, %v561
        %v3069 = vmul.f32 %v3024, %v565
        %v3076 = vrot.slane %v3064, 2
        %v3077 = vrot.slane %v3067, 2
        %v3078 = vsel %vm453, %v3076, %v3077
        %v3079 = vrot.slane %v3065, 2
        %v3080 = vrot.slane %v3068, 2
        %v3081 = vsel %vm453, %v3079, %v3080
        %v3082 = vrot.slane %v3066, 2
        %v3083 = vrot.slane %v3069, 2
        %v3084 = vsel %vm453, %v3082, %v3083
        %v3091 = vadd.f32 %v3058, %v3078
        %v3092 = vadd.f32 %v3059, %v3081
        %v3093 = vadd.f32 %v3060, %v3084
        %v3094 = vadd.f32 %v3061, %v3077
        %v3095 = vadd.f32 %v3062, %v3080
        %v3096 = vadd.f32 %v3063, %v3083
        %v3097 = vadd.f32 %v3013, %v3091
        %v3098 = vadd.f32 %v3014, %v3092
        %v3099 = vadd.f32 %v3015, %v3093
        %v3100 = vadd.f32 %v3016, %v3094
        %v3101 = vadd.f32 %v3017, %v3095
        %v3102 = vadd.f32 %v3018, %v3096
        %s3103 = scalar_lea.vmem %s259, 528 [#allocation2]
        %v3104 = vld [vmem:[%s3103] sm:$0xff]
        %v3105 = vld [vmem:[%s3103 + $0x8] sm:$0xff]
        %v3106 = vld [vmem:[%s3103 + $0x10] sm:$0xff]
        %v3107 = vld [vmem:[%s3103 + $0x18] sm:$0xff]
        %v3108 = vld [vmem:[%s3103 + $0x20] sm:$0xff]
        %v3109 = vld [vmem:[%s3103 + $0x28] sm:$0xff]
        %v3110 = vmul.f32 %v3104, %v619
        %v3111 = vmul.f32 %v3105, %v623
        %v3112 = vmul.f32 %v3106, %v627
        %v3113 = vmul.f32 %v3107, %v619
        %v3114 = vmul.f32 %v3108, %v623
        %v3115 = vmul.f32 %v3109, %v627
        %v3116 = vmul.f32 %v3104, %v641
        %v3117 = vmul.f32 %v3105, %v645
        %v3118 = vmul.f32 %v3106, %v649
        %v3119 = vmul.f32 %v3107, %v641
        %v3120 = vmul.f32 %v3108, %v645
        %v3121 = vmul.f32 %v3109, %v649
        %v3128 = vrot.slane %v3116, 1
        %v3129 = vrot.slane %v3119, 1
        %v3130 = vsel %vm403, %v3128, %v3129
        %v3131 = vrot.slane %v3117, 1
        %v3132 = vrot.slane %v3120, 1
        %v3133 = vsel %vm403, %v3131, %v3132
        %v3134 = vrot.slane %v3118, 1
        %v3135 = vrot.slane %v3121, 1
        %v3136 = vsel %vm403, %v3134, %v3135
        %v3143 = vadd.f32 %v3110, %v3130
        %v3144 = vadd.f32 %v3111, %v3133
        %v3145 = vadd.f32 %v3112, %v3136
        %v3146 = vadd.f32 %v3113, %v3129
        %v3147 = vadd.f32 %v3114, %v3132
        %v3148 = vadd.f32 %v3115, %v3135
        %v3149 = vmul.f32 %v3104, %v690
        %v3150 = vmul.f32 %v3105, %v694
        %v3151 = vmul.f32 %v3106, %v698
        %v3152 = vmul.f32 %v3107, %v690
        %v3153 = vmul.f32 %v3108, %v694
        %v3154 = vmul.f32 %v3109, %v698
        %v3161 = vrot.slane %v3149, 2
        %v3162 = vrot.slane %v3152, 2
        %v3163 = vsel %vm453, %v3161, %v3162
        %v3164 = vrot.slane %v3150, 2
        %v3165 = vrot.slane %v3153, 2
        %v3166 = vsel %vm453, %v3164, %v3165
        %v3167 = vrot.slane %v3151, 2
        %v3168 = vrot.slane %v3154, 2
        %v3169 = vsel %vm453, %v3167, %v3168
        %v3176 = vadd.f32 %v3143, %v3163
        %v3177 = vadd.f32 %v3144, %v3166
        %v3178 = vadd.f32 %v3145, %v3169
        %v3179 = vadd.f32 %v3146, %v3162
        %v3180 = vadd.f32 %v3147, %v3165
        %v3181 = vadd.f32 %v3148, %v3168
        %v3182 = vadd.f32 %v3097, %v3176
        %v3183 = vadd.f32 %v3098, %v3177
        %v3184 = vadd.f32 %v3099, %v3178
        %v3185 = vadd.f32 %v3100, %v3179
        %v3186 = vadd.f32 %v3101, %v3180
        %v3187 = vadd.f32 %v3102, %v3181
        %s3188 = scalar_lea.vmem %s324, 432 [#allocation9]
        %3189 = vst [vmem:[%s3188] sm:$0xff] %v3182
        %3190 = vst [vmem:[%s3188 + $0x8] sm:$0xff] %v3183
        %3191 = vst [vmem:[%s3188 + $0x10] sm:$0xff] %v3184
        %3192 = vst [vmem:[%s3188 + $0x18] sm:$0x3f] %v3185
        %3193 = vst [vmem:[%s3188 + $0x20] sm:$0x3f] %v3186
        %3194 = vst [vmem:[%s3188 + $0x28] sm:$0x3f] %v3187
        %v3195 = vadd.f32 %v2923, %v3182
        %v3196 = vadd.f32 %v2924, %v3183
        %v3197 = vadd.f32 %v2925, %v3184
        %v3198 = vadd.f32 %v2926, %v3185
        %v3199 = vadd.f32 %v2927, %v3186
        %v3200 = vadd.f32 %v2928, %v3187
        %v3201 = vmul.f32 %v3182, %v3182
        %v3202 = vmul.f32 %v3183, %v3183
        %v3203 = vmul.f32 %v3184, %v3184
        %v3204 = vmul.f32 %v3185, %v3185
        %v3205 = vmul.f32 %v3186, %v3186
        %v3206 = vmul.f32 %v3187, %v3187
        %v3207 = vadd.f32 %v2935, %v3201
        %v3208 = vadd.f32 %v2936, %v3202
        %v3209 = vadd.f32 %v2937, %v3203
        %v3210 = vadd.f32 %v2938, %v3204
        %v3211 = vadd.f32 %v2939, %v3205
        %v3212 = vadd.f32 %v2940, %v3206
        %v3213 = vld [vmem:[%s2831] sm:$0xff]
        %v3214 = vld [vmem:[%s2831 + $0x8] sm:$0xff]
        %v3215 = vld [vmem:[%s2831 + $0x10] sm:$0xff]
        %v3216 = vld [vmem:[%s2831 + $0x18] sm:$0xff]
        %v3217 = vld [vmem:[%s2831 + $0x20] sm:$0xff]
        %v3218 = vld [vmem:[%s2831 + $0x28] sm:$0xff]
        %v3219 = vmul.f32 %v3213, %v357
        %v3220 = vmul.f32 %v3214, %v361
        %v3221 = vmul.f32 %v3215, %v365
        %v3222 = vmul.f32 %v3216, %v357
        %v3223 = vmul.f32 %v3217, %v361
        %v3224 = vmul.f32 %v3218, %v365
        %v3225 = vmul.f32 %v3213, %v379
        %v3226 = vmul.f32 %v3214, %v383
        %v3227 = vmul.f32 %v3215, %v387
        %v3228 = vmul.f32 %v3216, %v379
        %v3229 = vmul.f32 %v3217, %v383
        %v3230 = vmul.f32 %v3218, %v387
        %v3237 = vrot.slane %v3225, 1
        %v3238 = vrot.slane %v3228, 1
        %v3239 = vsel %vm403, %v3237, %v3238
        %v3240 = vrot.slane %v3226, 1
        %v3241 = vrot.slane %v3229, 1
        %v3242 = vsel %vm403, %v3240, %v3241
        %v3243 = vrot.slane %v3227, 1
        %v3244 = vrot.slane %v3230, 1
        %v3245 = vsel %vm403, %v3243, %v3244
        %v3252 = vadd.f32 %v3219, %v3239
        %v3253 = vadd.f32 %v3220, %v3242
        %v3254 = vadd.f32 %v3221, %v3245
        %v3255 = vadd.f32 %v3222, %v3238
        %v3256 = vadd.f32 %v3223, %v3241
        %v3257 = vadd.f32 %v3224, %v3244
        %v3258 = vmul.f32 %v3213, %v429
        %v3259 = vmul.f32 %v3214, %v433
        %v3260 = vmul.f32 %v3215, %v437
        %v3261 = vmul.f32 %v3216, %v429
        %v3262 = vmul.f32 %v3217, %v433
        %v3263 = vmul.f32 %v3218, %v437
        %v3270 = vrot.slane %v3258, 2
        %v3271 = vrot.slane %v3261, 2
        %v3272 = vsel %vm453, %v3270, %v3271
        %v3273 = vrot.slane %v3259, 2
        %v3274 = vrot.slane %v3262, 2
        %v3275 = vsel %vm453, %v3273, %v3274
        %v3276 = vrot.slane %v3260, 2
        %v3277 = vrot.slane %v3263, 2
        %v3278 = vsel %vm453, %v3276, %v3277
        %v3285 = vadd.f32 %v3252, %v3272
        %v3286 = vadd.f32 %v3253, %v3275
        %v3287 = vadd.f32 %v3254, %v3278
        %v3288 = vadd.f32 %v3255, %v3271
        %v3289 = vadd.f32 %v3256, %v3274
        %v3290 = vadd.f32 %v3257, %v3277
        %v3291 = vld [vmem:[%s3103] sm:$0xff]
        %v3292 = vld [vmem:[%s3103 + $0x8] sm:$0xff]
        %v3293 = vld [vmem:[%s3103 + $0x10] sm:$0xff]
        %v3294 = vld [vmem:[%s3103 + $0x18] sm:$0xff]
        %v3295 = vld [vmem:[%s3103 + $0x20] sm:$0xff]
        %v3296 = vld [vmem:[%s3103 + $0x28] sm:$0xff]
        %v3297 = vmul.f32 %v3291, %v486
        %v3298 = vmul.f32 %v3292, %v490
        %v3299 = vmul.f32 %v3293, %v494
        %v3300 = vmul.f32 %v3294, %v486
        %v3301 = vmul.f32 %v3295, %v490
        %v3302 = vmul.f32 %v3296, %v494
        %v3303 = vmul.f32 %v3291, %v508
        %v3304 = vmul.f32 %v3292, %v512
        %v3305 = vmul.f32 %v3293, %v516
        %v3306 = vmul.f32 %v3294, %v508
        %v3307 = vmul.f32 %v3295, %v512
        %v3308 = vmul.f32 %v3296, %v516
        %v3315 = vrot.slane %v3303, 1
        %v3316 = vrot.slane %v3306, 1
        %v3317 = vsel %vm403, %v3315, %v3316
        %v3318 = vrot.slane %v3304, 1
        %v3319 = vrot.slane %v3307, 1
        %v3320 = vsel %vm403, %v3318, %v3319
        %v3321 = vrot.slane %v3305, 1
        %v3322 = vrot.slane %v3308, 1
        %v3323 = vsel %vm403, %v3321, %v3322
        %v3330 = vadd.f32 %v3297, %v3317
        %v3331 = vadd.f32 %v3298, %v3320
        %v3332 = vadd.f32 %v3299, %v3323
        %v3333 = vadd.f32 %v3300, %v3316
        %v3334 = vadd.f32 %v3301, %v3319
        %v3335 = vadd.f32 %v3302, %v3322
        %v3336 = vmul.f32 %v3291, %v557
        %v3337 = vmul.f32 %v3292, %v561
        %v3338 = vmul.f32 %v3293, %v565
        %v3339 = vmul.f32 %v3294, %v557
        %v3340 = vmul.f32 %v3295, %v561
        %v3341 = vmul.f32 %v3296, %v565
        %v3348 = vrot.slane %v3336, 2
        %v3349 = vrot.slane %v3339, 2
        %v3350 = vsel %vm453, %v3348, %v3349
        %v3351 = vrot.slane %v3337, 2
        %v3352 = vrot.slane %v3340, 2
        %v3353 = vsel %vm453, %v3351, %v3352
        %v3354 = vrot.slane %v3338, 2
        %v3355 = vrot.slane %v3341, 2
        %v3356 = vsel %vm453, %v3354, %v3355
        %v3363 = vadd.f32 %v3330, %v3350
        %v3364 = vadd.f32 %v3331, %v3353
        %v3365 = vadd.f32 %v3332, %v3356
        %v3366 = vadd.f32 %v3333, %v3349
        %v3367 = vadd.f32 %v3334, %v3352
        %v3368 = vadd.f32 %v3335, %v3355
        %v3369 = vadd.f32 %v3285, %v3363
        %v3370 = vadd.f32 %v3286, %v3364
        %v3371 = vadd.f32 %v3287, %v3365
        %v3372 = vadd.f32 %v3288, %v3366
        %v3373 = vadd.f32 %v3289, %v3367
        %v3374 = vadd.f32 %v3290, %v3368
        %s3375 = scalar_lea.vmem %s259, 576 [#allocation2]
        %v3376 = vld [vmem:[%s3375] sm:$0xff]
        %v3377 = vld [vmem:[%s3375 + $0x8] sm:$0xff]
        %v3378 = vld [vmem:[%s3375 + $0x10] sm:$0xff]
        %v3379 = vld [vmem:[%s3375 + $0x18] sm:$0xff]
        %v3380 = vld [vmem:[%s3375 + $0x20] sm:$0xff]
        %v3381 = vld [vmem:[%s3375 + $0x28] sm:$0xff]
        %v3382 = vmul.f32 %v3376, %v619
        %v3383 = vmul.f32 %v3377, %v623
        %v3384 = vmul.f32 %v3378, %v627
        %v3385 = vmul.f32 %v3379, %v619
        %v3386 = vmul.f32 %v3380, %v623
        %v3387 = vmul.f32 %v3381, %v627
        %v3388 = vmul.f32 %v3376, %v641
        %v3389 = vmul.f32 %v3377, %v645
        %v3390 = vmul.f32 %v3378, %v649
        %v3391 = vmul.f32 %v3379, %v641
        %v3392 = vmul.f32 %v3380, %v645
        %v3393 = vmul.f32 %v3381, %v649
        %v3400 = vrot.slane %v3388, 1
        %v3401 = vrot.slane %v3391, 1
        %v3402 = vsel %vm403, %v3400, %v3401
        %v3403 = vrot.slane %v3389, 1
        %v3404 = vrot.slane %v3392, 1
        %v3405 = vsel %vm403, %v3403, %v3404
        %v3406 = vrot.slane %v3390, 1
        %v3407 = vrot.slane %v3393, 1
        %v3408 = vsel %vm403, %v3406, %v3407
        %v3415 = vadd.f32 %v3382, %v3402
        %v3416 = vadd.f32 %v3383, %v3405
        %v3417 = vadd.f32 %v3384, %v3408
        %v3418 = vadd.f32 %v3385, %v3401
        %v3419 = vadd.f32 %v3386, %v3404
        %v3420 = vadd.f32 %v3387, %v3407
        %v3421 = vmul.f32 %v3376, %v690
        %v3422 = vmul.f32 %v3377, %v694
        %v3423 = vmul.f32 %v3378, %v698
        %v3424 = vmul.f32 %v3379, %v690
        %v3425 = vmul.f32 %v3380, %v694
        %v3426 = vmul.f32 %v3381, %v698
        %v3433 = vrot.slane %v3421, 2
        %v3434 = vrot.slane %v3424, 2
        %v3435 = vsel %vm453, %v3433, %v3434
        %v3436 = vrot.slane %v3422, 2
        %v3437 = vrot.slane %v3425, 2
        %v3438 = vsel %vm453, %v3436, %v3437
        %v3439 = vrot.slane %v3423, 2
        %v3440 = vrot.slane %v3426, 2
        %v3441 = vsel %vm453, %v3439, %v3440
        %v3448 = vadd.f32 %v3415, %v3435
        %v3449 = vadd.f32 %v3416, %v3438
        %v3450 = vadd.f32 %v3417, %v3441
        %v3451 = vadd.f32 %v3418, %v3434
        %v3452 = vadd.f32 %v3419, %v3437
        %v3453 = vadd.f32 %v3420, %v3440
        %v3454 = vadd.f32 %v3369, %v3448
        %v3455 = vadd.f32 %v3370, %v3449
        %v3456 = vadd.f32 %v3371, %v3450
        %v3457 = vadd.f32 %v3372, %v3451
        %v3458 = vadd.f32 %v3373, %v3452
        %v3459 = vadd.f32 %v3374, %v3453
        %s3460 = scalar_lea.vmem %s324, 480 [#allocation9]
        %3461 = vst [vmem:[%s3460] sm:$0xff] %v3454
        %3462 = vst [vmem:[%s3460 + $0x8] sm:$0xff] %v3455
        %3463 = vst [vmem:[%s3460 + $0x10] sm:$0xff] %v3456
        %3464 = vst [vmem:[%s3460 + $0x18] sm:$0x3f] %v3457
        %3465 = vst [vmem:[%s3460 + $0x20] sm:$0x3f] %v3458
        %3466 = vst [vmem:[%s3460 + $0x28] sm:$0x3f] %v3459
        %v3467 = vadd.f32 %v3195, %v3454
        %v3468 = vadd.f32 %v3196, %v3455
        %v3469 = vadd.f32 %v3197, %v3456
        %v3470 = vadd.f32 %v3198, %v3457
        %v3471 = vadd.f32 %v3199, %v3458
        %v3472 = vadd.f32 %v3200, %v3459
        %v3473 = vmul.f32 %v3454, %v3454
        %v3474 = vmul.f32 %v3455, %v3455
        %v3475 = vmul.f32 %v3456, %v3456
        %v3476 = vmul.f32 %v3457, %v3457
        %v3477 = vmul.f32 %v3458, %v3458
        %v3478 = vmul.f32 %v3459, %v3459
        %v3479 = vadd.f32 %v3207, %v3473
        %v3480 = vadd.f32 %v3208, %v3474
        %v3481 = vadd.f32 %v3209, %v3475
        %v3482 = vadd.f32 %v3210, %v3476
        %v3483 = vadd.f32 %v3211, %v3477
        %v3484 = vadd.f32 %v3212, %v3478
        %v3485 = vld [vmem:[%s3103] sm:$0xff]
        %v3486 = vld [vmem:[%s3103 + $0x8] sm:$0xff]
        %v3487 = vld [vmem:[%s3103 + $0x10] sm:$0xff]
        %v3488 = vld [vmem:[%s3103 + $0x18] sm:$0xff]
        %v3489 = vld [vmem:[%s3103 + $0x20] sm:$0xff]
        %v3490 = vld [vmem:[%s3103 + $0x28] sm:$0xff]
        %v3491 = vmul.f32 %v3485, %v357
        %v3492 = vmul.f32 %v3486, %v361
        %v3493 = vmul.f32 %v3487, %v365
        %v3494 = vmul.f32 %v3488, %v357
        %v3495 = vmul.f32 %v3489, %v361
        %v3496 = vmul.f32 %v3490, %v365
        %v3497 = vmul.f32 %v3485, %v379
        %v3498 = vmul.f32 %v3486, %v383
        %v3499 = vmul.f32 %v3487, %v387
        %v3500 = vmul.f32 %v3488, %v379
        %v3501 = vmul.f32 %v3489, %v383
        %v3502 = vmul.f32 %v3490, %v387
        %v3509 = vrot.slane %v3497, 1
        %v3510 = vrot.slane %v3500, 1
        %v3511 = vsel %vm403, %v3509, %v3510
        %v3512 = vrot.slane %v3498, 1
        %v3513 = vrot.slane %v3501, 1
        %v3514 = vsel %vm403, %v3512, %v3513
        %v3515 = vrot.slane %v3499, 1
        %v3516 = vrot.slane %v3502, 1
        %v3517 = vsel %vm403, %v3515, %v3516
        %v3524 = vadd.f32 %v3491, %v3511
        %v3525 = vadd.f32 %v3492, %v3514
        %v3526 = vadd.f32 %v3493, %v3517
        %v3527 = vadd.f32 %v3494, %v3510
        %v3528 = vadd.f32 %v3495, %v3513
        %v3529 = vadd.f32 %v3496, %v3516
        %v3530 = vmul.f32 %v3485, %v429
        %v3531 = vmul.f32 %v3486, %v433
        %v3532 = vmul.f32 %v3487, %v437
        %v3533 = vmul.f32 %v3488, %v429
        %v3534 = vmul.f32 %v3489, %v433
        %v3535 = vmul.f32 %v3490, %v437
        %v3542 = vrot.slane %v3530, 2
        %v3543 = vrot.slane %v3533, 2
        %v3544 = vsel %vm453, %v3542, %v3543
        %v3545 = vrot.slane %v3531, 2
        %v3546 = vrot.slane %v3534, 2
        %v3547 = vsel %vm453, %v3545, %v3546
        %v3548 = vrot.slane %v3532, 2
        %v3549 = vrot.slane %v3535, 2
        %v3550 = vsel %vm453, %v3548, %v3549
        %v3557 = vadd.f32 %v3524, %v3544
        %v3558 = vadd.f32 %v3525, %v3547
        %v3559 = vadd.f32 %v3526, %v3550
        %v3560 = vadd.f32 %v3527, %v3543
        %v3561 = vadd.f32 %v3528, %v3546
        %v3562 = vadd.f32 %v3529, %v3549
        %v3563 = vld [vmem:[%s3375] sm:$0xff]
        %v3564 = vld [vmem:[%s3375 + $0x8] sm:$0xff]
        %v3565 = vld [vmem:[%s3375 + $0x10] sm:$0xff]
        %v3566 = vld [vmem:[%s3375 + $0x18] sm:$0xff]
        %v3567 = vld [vmem:[%s3375 + $0x20] sm:$0xff]
        %v3568 = vld [vmem:[%s3375 + $0x28] sm:$0xff]
        %v3569 = vmul.f32 %v3563, %v486
        %v3570 = vmul.f32 %v3564, %v490
        %v3571 = vmul.f32 %v3565, %v494
        %v3572 = vmul.f32 %v3566, %v486
        %v3573 = vmul.f32 %v3567, %v490
        %v3574 = vmul.f32 %v3568, %v494
        %v3575 = vmul.f32 %v3563, %v508
        %v3576 = vmul.f32 %v3564, %v512
        %v3577 = vmul.f32 %v3565, %v516
        %v3578 = vmul.f32 %v3566, %v508
        %v3579 = vmul.f32 %v3567, %v512
        %v3580 = vmul.f32 %v3568, %v516
        %v3587 = vrot.slane %v3575, 1
        %v3588 = vrot.slane %v3578, 1
        %v3589 = vsel %vm403, %v3587, %v3588
        %v3590 = vrot.slane %v3576, 1
        %v3591 = vrot.slane %v3579, 1
        %v3592 = vsel %vm403, %v3590, %v3591
        %v3593 = vrot.slane %v3577, 1
        %v3594 = vrot.slane %v3580, 1
        %v3595 = vsel %vm403, %v3593, %v3594
        %v3602 = vadd.f32 %v3569, %v3589
        %v3603 = vadd.f32 %v3570, %v3592
        %v3604 = vadd.f32 %v3571, %v3595
        %v3605 = vadd.f32 %v3572, %v3588
        %v3606 = vadd.f32 %v3573, %v3591
        %v3607 = vadd.f32 %v3574, %v3594
        %v3608 = vmul.f32 %v3563, %v557
        %v3609 = vmul.f32 %v3564, %v561
        %v3610 = vmul.f32 %v3565, %v565
        %v3611 = vmul.f32 %v3566, %v557
        %v3612 = vmul.f32 %v3567, %v561
        %v3613 = vmul.f32 %v3568, %v565
        %v3620 = vrot.slane %v3608, 2
        %v3621 = vrot.slane %v3611, 2
        %v3622 = vsel %vm453, %v3620, %v3621
        %v3623 = vrot.slane %v3609, 2
        %v3624 = vrot.slane %v3612, 2
        %v3625 = vsel %vm453, %v3623, %v3624
        %v3626 = vrot.slane %v3610, 2
        %v3627 = vrot.slane %v3613, 2
        %v3628 = vsel %vm453, %v3626, %v3627
        %v3635 = vadd.f32 %v3602, %v3622
        %v3636 = vadd.f32 %v3603, %v3625
        %v3637 = vadd.f32 %v3604, %v3628
        %v3638 = vadd.f32 %v3605, %v3621
        %v3639 = vadd.f32 %v3606, %v3624
        %v3640 = vadd.f32 %v3607, %v3627
        %v3641 = vadd.f32 %v3557, %v3635
        %v3642 = vadd.f32 %v3558, %v3636
        %v3643 = vadd.f32 %v3559, %v3637
        %v3644 = vadd.f32 %v3560, %v3638
        %v3645 = vadd.f32 %v3561, %v3639
        %v3646 = vadd.f32 %v3562, %v3640
        %s3647 = scalar_lea.vmem %s259, 624 [#allocation2]
        %v3648 = vld [vmem:[%s3647] sm:$0xff]
        %v3649 = vld [vmem:[%s3647 + $0x8] sm:$0xff]
        %v3650 = vld [vmem:[%s3647 + $0x10] sm:$0xff]
        %v3651 = vld [vmem:[%s3647 + $0x18] sm:$0xff]
        %v3652 = vld [vmem:[%s3647 + $0x20] sm:$0xff]
        %v3653 = vld [vmem:[%s3647 + $0x28] sm:$0xff]
        %v3654 = vmul.f32 %v3648, %v619
        %v3655 = vmul.f32 %v3649, %v623
        %v3656 = vmul.f32 %v3650, %v627
        %v3657 = vmul.f32 %v3651, %v619
        %v3658 = vmul.f32 %v3652, %v623
        %v3659 = vmul.f32 %v3653, %v627
        %v3660 = vmul.f32 %v3648, %v641
        %v3661 = vmul.f32 %v3649, %v645
        %v3662 = vmul.f32 %v3650, %v649
        %v3663 = vmul.f32 %v3651, %v641
        %v3664 = vmul.f32 %v3652, %v645
        %v3665 = vmul.f32 %v3653, %v649
        %v3672 = vrot.slane %v3660, 1
        %v3673 = vrot.slane %v3663, 1
        %v3674 = vsel %vm403, %v3672, %v3673
        %v3675 = vrot.slane %v3661, 1
        %v3676 = vrot.slane %v3664, 1
        %v3677 = vsel %vm403, %v3675, %v3676
        %v3678 = vrot.slane %v3662, 1
        %v3679 = vrot.slane %v3665, 1
        %v3680 = vsel %vm403, %v3678, %v3679
        %v3687 = vadd.f32 %v3654, %v3674
        %v3688 = vadd.f32 %v3655, %v3677
        %v3689 = vadd.f32 %v3656, %v3680
        %v3690 = vadd.f32 %v3657, %v3673
        %v3691 = vadd.f32 %v3658, %v3676
        %v3692 = vadd.f32 %v3659, %v3679
        %v3693 = vmul.f32 %v3648, %v690
        %v3694 = vmul.f32 %v3649, %v694
        %v3695 = vmul.f32 %v3650, %v698
        %v3696 = vmul.f32 %v3651, %v690
        %v3697 = vmul.f32 %v3652, %v694
        %v3698 = vmul.f32 %v3653, %v698
        %v3705 = vrot.slane %v3693, 2
        %v3706 = vrot.slane %v3696, 2
        %v3707 = vsel %vm453, %v3705, %v3706
        %v3708 = vrot.slane %v3694, 2
        %v3709 = vrot.slane %v3697, 2
        %v3710 = vsel %vm453, %v3708, %v3709
        %v3711 = vrot.slane %v3695, 2
        %v3712 = vrot.slane %v3698, 2
        %v3713 = vsel %vm453, %v3711, %v3712
        %v3720 = vadd.f32 %v3687, %v3707
        %v3721 = vadd.f32 %v3688, %v3710
        %v3722 = vadd.f32 %v3689, %v3713
        %v3723 = vadd.f32 %v3690, %v3706
        %v3724 = vadd.f32 %v3691, %v3709
        %v3725 = vadd.f32 %v3692, %v3712
        %v3726 = vadd.f32 %v3641, %v3720
        %v3727 = vadd.f32 %v3642, %v3721
        %v3728 = vadd.f32 %v3643, %v3722
        %v3729 = vadd.f32 %v3644, %v3723
        %v3730 = vadd.f32 %v3645, %v3724
        %v3731 = vadd.f32 %v3646, %v3725
        %s3732 = scalar_lea.vmem %s324, 528 [#allocation9]
        %3733 = vst [vmem:[%s3732] sm:$0xff] %v3726
        %3734 = vst [vmem:[%s3732 + $0x8] sm:$0xff] %v3727
        %3735 = vst [vmem:[%s3732 + $0x10] sm:$0xff] %v3728
        %3736 = vst [vmem:[%s3732 + $0x18] sm:$0x3f] %v3729
        %3737 = vst [vmem:[%s3732 + $0x20] sm:$0x3f] %v3730
        %3738 = vst [vmem:[%s3732 + $0x28] sm:$0x3f] %v3731
        %v3739 = vadd.f32 %v3467, %v3726
        %v3740 = vadd.f32 %v3468, %v3727
        %v3741 = vadd.f32 %v3469, %v3728
        %v3742 = vadd.f32 %v3470, %v3729
        %v3743 = vadd.f32 %v3471, %v3730
        %v3744 = vadd.f32 %v3472, %v3731
        %v3745 = vmul.f32 %v3726, %v3726
        %v3746 = vmul.f32 %v3727, %v3727
        %v3747 = vmul.f32 %v3728, %v3728
        %v3748 = vmul.f32 %v3729, %v3729
        %v3749 = vmul.f32 %v3730, %v3730
        %v3750 = vmul.f32 %v3731, %v3731
        %v3751 = vadd.f32 %v3479, %v3745
        %v3752 = vadd.f32 %v3480, %v3746
        %v3753 = vadd.f32 %v3481, %v3747
        %v3754 = vadd.f32 %v3482, %v3748
        %v3755 = vadd.f32 %v3483, %v3749
        %v3756 = vadd.f32 %v3484, %v3750
        %v3757 = vld [vmem:[%s3375] sm:$0xff]
        %v3758 = vld [vmem:[%s3375 + $0x8] sm:$0xff]
        %v3759 = vld [vmem:[%s3375 + $0x10] sm:$0xff]
        %v3760 = vld [vmem:[%s3375 + $0x18] sm:$0xff]
        %v3761 = vld [vmem:[%s3375 + $0x20] sm:$0xff]
        %v3762 = vld [vmem:[%s3375 + $0x28] sm:$0xff]
        %v3763 = vmul.f32 %v3757, %v357
        %v3764 = vmul.f32 %v3758, %v361
        %v3765 = vmul.f32 %v3759, %v365
        %v3766 = vmul.f32 %v3760, %v357
        %v3767 = vmul.f32 %v3761, %v361
        %v3768 = vmul.f32 %v3762, %v365
        %v3769 = vmul.f32 %v3757, %v379
        %v3770 = vmul.f32 %v3758, %v383
        %v3771 = vmul.f32 %v3759, %v387
        %v3772 = vmul.f32 %v3760, %v379
        %v3773 = vmul.f32 %v3761, %v383
        %v3774 = vmul.f32 %v3762, %v387
        %v3781 = vrot.slane %v3769, 1
        %v3782 = vrot.slane %v3772, 1
        %v3783 = vsel %vm403, %v3781, %v3782
        %v3784 = vrot.slane %v3770, 1
        %v3785 = vrot.slane %v3773, 1
        %v3786 = vsel %vm403, %v3784, %v3785
        %v3787 = vrot.slane %v3771, 1
        %v3788 = vrot.slane %v3774, 1
        %v3789 = vsel %vm403, %v3787, %v3788
        %v3796 = vadd.f32 %v3763, %v3783
        %v3797 = vadd.f32 %v3764, %v3786
        %v3798 = vadd.f32 %v3765, %v3789
        %v3799 = vadd.f32 %v3766, %v3782
        %v3800 = vadd.f32 %v3767, %v3785
        %v3801 = vadd.f32 %v3768, %v3788
        %v3802 = vmul.f32 %v3757, %v429
        %v3803 = vmul.f32 %v3758, %v433
        %v3804 = vmul.f32 %v3759, %v437
        %v3805 = vmul.f32 %v3760, %v429
        %v3806 = vmul.f32 %v3761, %v433
        %v3807 = vmul.f32 %v3762, %v437
        %v3814 = vrot.slane %v3802, 2
        %v3815 = vrot.slane %v3805, 2
        %v3816 = vsel %vm453, %v3814, %v3815
        %v3817 = vrot.slane %v3803, 2
        %v3818 = vrot.slane %v3806, 2
        %v3819 = vsel %vm453, %v3817, %v3818
        %v3820 = vrot.slane %v3804, 2
        %v3821 = vrot.slane %v3807, 2
        %v3822 = vsel %vm453, %v3820, %v3821
        %v3829 = vadd.f32 %v3796, %v3816
        %v3830 = vadd.f32 %v3797, %v3819
        %v3831 = vadd.f32 %v3798, %v3822
        %v3832 = vadd.f32 %v3799, %v3815
        %v3833 = vadd.f32 %v3800, %v3818
        %v3834 = vadd.f32 %v3801, %v3821
        %v3835 = vld [vmem:[%s3647] sm:$0xff]
        %v3836 = vld [vmem:[%s3647 + $0x8] sm:$0xff]
        %v3837 = vld [vmem:[%s3647 + $0x10] sm:$0xff]
        %v3838 = vld [vmem:[%s3647 + $0x18] sm:$0xff]
        %v3839 = vld [vmem:[%s3647 + $0x20] sm:$0xff]
        %v3840 = vld [vmem:[%s3647 + $0x28] sm:$0xff]
        %v3841 = vmul.f32 %v3835, %v486
        %v3842 = vmul.f32 %v3836, %v490
        %v3843 = vmul.f32 %v3837, %v494
        %v3844 = vmul.f32 %v3838, %v486
        %v3845 = vmul.f32 %v3839, %v490
        %v3846 = vmul.f32 %v3840, %v494
        %v3847 = vmul.f32 %v3835, %v508
        %v3848 = vmul.f32 %v3836, %v512
        %v3849 = vmul.f32 %v3837, %v516
        %v3850 = vmul.f32 %v3838, %v508
        %v3851 = vmul.f32 %v3839, %v512
        %v3852 = vmul.f32 %v3840, %v516
        %v3859 = vrot.slane %v3847, 1
        %v3860 = vrot.slane %v3850, 1
        %v3861 = vsel %vm403, %v3859, %v3860
        %v3862 = vrot.slane %v3848, 1
        %v3863 = vrot.slane %v3851, 1
        %v3864 = vsel %vm403, %v3862, %v3863
        %v3865 = vrot.slane %v3849, 1
        %v3866 = vrot.slane %v3852, 1
        %v3867 = vsel %vm403, %v3865, %v3866
        %v3874 = vadd.f32 %v3841, %v3861
        %v3875 = vadd.f32 %v3842, %v3864
        %v3876 = vadd.f32 %v3843, %v3867
        %v3877 = vadd.f32 %v3844, %v3860
        %v3878 = vadd.f32 %v3845, %v3863
        %v3879 = vadd.f32 %v3846, %v3866
        %v3880 = vmul.f32 %v3835, %v557
        %v3881 = vmul.f32 %v3836, %v561
        %v3882 = vmul.f32 %v3837, %v565
        %v3883 = vmul.f32 %v3838, %v557
        %v3884 = vmul.f32 %v3839, %v561
        %v3885 = vmul.f32 %v3840, %v565
        %v3892 = vrot.slane %v3880, 2
        %v3893 = vrot.slane %v3883, 2
        %v3894 = vsel %vm453, %v3892, %v3893
        %v3895 = vrot.slane %v3881, 2
        %v3896 = vrot.slane %v3884, 2
        %v3897 = vsel %vm453, %v3895, %v3896
        %v3898 = vrot.slane %v3882, 2
        %v3899 = vrot.slane %v3885, 2
        %v3900 = vsel %vm453, %v3898, %v3899
        %v3907 = vadd.f32 %v3874, %v3894
        %v3908 = vadd.f32 %v3875, %v3897
        %v3909 = vadd.f32 %v3876, %v3900
        %v3910 = vadd.f32 %v3877, %v3893
        %v3911 = vadd.f32 %v3878, %v3896
        %v3912 = vadd.f32 %v3879, %v3899
        %v3913 = vadd.f32 %v3829, %v3907
        %v3914 = vadd.f32 %v3830, %v3908
        %v3915 = vadd.f32 %v3831, %v3909
        %v3916 = vadd.f32 %v3832, %v3910
        %v3917 = vadd.f32 %v3833, %v3911
        %v3918 = vadd.f32 %v3834, %v3912
        %s3919 = scalar_lea.vmem %s259, 672 [#allocation2]
        %v3920 = vld [vmem:[%s3919] sm:$0xff]
        %v3921 = vld [vmem:[%s3919 + $0x8] sm:$0xff]
        %v3922 = vld [vmem:[%s3919 + $0x10] sm:$0xff]
        %v3923 = vld [vmem:[%s3919 + $0x18] sm:$0xff]
        %v3924 = vld [vmem:[%s3919 + $0x20] sm:$0xff]
        %v3925 = vld [vmem:[%s3919 + $0x28] sm:$0xff]
        %v3926 = vmul.f32 %v3920, %v619
        %v3927 = vmul.f32 %v3921, %v623
        %v3928 = vmul.f32 %v3922, %v627
        %v3929 = vmul.f32 %v3923, %v619
        %v3930 = vmul.f32 %v3924, %v623
        %v3931 = vmul.f32 %v3925, %v627
        %v3932 = vmul.f32 %v3920, %v641
        %v3933 = vmul.f32 %v3921, %v645
        %v3934 = vmul.f32 %v3922, %v649
        %v3935 = vmul.f32 %v3923, %v641
        %v3936 = vmul.f32 %v3924, %v645
        %v3937 = vmul.f32 %v3925, %v649
        %v3944 = vrot.slane %v3932, 1
        %v3945 = vrot.slane %v3935, 1
        %v3946 = vsel %vm403, %v3944, %v3945
        %v3947 = vrot.slane %v3933, 1
        %v3948 = vrot.slane %v3936, 1
        %v3949 = vsel %vm403, %v3947, %v3948
        %v3950 = vrot.slane %v3934, 1
        %v3951 = vrot.slane %v3937, 1
        %v3952 = vsel %vm403, %v3950, %v3951
        %v3959 = vadd.f32 %v3926, %v3946
        %v3960 = vadd.f32 %v3927, %v3949
        %v3961 = vadd.f32 %v3928, %v3952
        %v3962 = vadd.f32 %v3929, %v3945
        %v3963 = vadd.f32 %v3930, %v3948
        %v3964 = vadd.f32 %v3931, %v3951
        %v3965 = vmul.f32 %v3920, %v690
        %v3966 = vmul.f32 %v3921, %v694
        %v3967 = vmul.f32 %v3922, %v698
        %v3968 = vmul.f32 %v3923, %v690
        %v3969 = vmul.f32 %v3924, %v694
        %v3970 = vmul.f32 %v3925, %v698
        %v3977 = vrot.slane %v3965, 2
        %v3978 = vrot.slane %v3968, 2
        %v3979 = vsel %vm453, %v3977, %v3978
        %v3980 = vrot.slane %v3966, 2
        %v3981 = vrot.slane %v3969, 2
        %v3982 = vsel %vm453, %v3980, %v3981
        %v3983 = vrot.slane %v3967, 2
        %v3984 = vrot.slane %v3970, 2
        %v3985 = vsel %vm453, %v3983, %v3984
        %v3992 = vadd.f32 %v3959, %v3979
        %v3993 = vadd.f32 %v3960, %v3982
        %v3994 = vadd.f32 %v3961, %v3985
        %v3995 = vadd.f32 %v3962, %v3978
        %v3996 = vadd.f32 %v3963, %v3981
        %v3997 = vadd.f32 %v3964, %v3984
        %v3998 = vadd.f32 %v3913, %v3992
        %v3999 = vadd.f32 %v3914, %v3993
        %v4000 = vadd.f32 %v3915, %v3994
        %v4001 = vadd.f32 %v3916, %v3995
        %v4002 = vadd.f32 %v3917, %v3996
        %v4003 = vadd.f32 %v3918, %v3997
        %s4004 = scalar_lea.vmem %s324, 576 [#allocation9]
        %4005 = vst [vmem:[%s4004] sm:$0xff] %v3998
        %4006 = vst [vmem:[%s4004 + $0x8] sm:$0xff] %v3999
        %4007 = vst [vmem:[%s4004 + $0x10] sm:$0xff] %v4000
        %4008 = vst [vmem:[%s4004 + $0x18] sm:$0x3f] %v4001
        %4009 = vst [vmem:[%s4004 + $0x20] sm:$0x3f] %v4002
        %4010 = vst [vmem:[%s4004 + $0x28] sm:$0x3f] %v4003
        %v4011 = vadd.f32 %v3739, %v3998
        %v4012 = vadd.f32 %v3740, %v3999
        %v4013 = vadd.f32 %v3741, %v4000
        %v4014 = vadd.f32 %v3742, %v4001
        %v4015 = vadd.f32 %v3743, %v4002
        %v4016 = vadd.f32 %v3744, %v4003
        %v4017 = vmul.f32 %v3998, %v3998
        %v4018 = vmul.f32 %v3999, %v3999
        %v4019 = vmul.f32 %v4000, %v4000
        %v4020 = vmul.f32 %v4001, %v4001
        %v4021 = vmul.f32 %v4002, %v4002
        %v4022 = vmul.f32 %v4003, %v4003
        %v4023 = vadd.f32 %v3751, %v4017
        %v4024 = vadd.f32 %v3752, %v4018
        %v4025 = vadd.f32 %v3753, %v4019
        %v4026 = vadd.f32 %v3754, %v4020
        %v4027 = vadd.f32 %v3755, %v4021
        %v4028 = vadd.f32 %v3756, %v4022
        %v4029 = vld [vmem:[%s3647] sm:$0xff]
        %v4030 = vld [vmem:[%s3647 + $0x8] sm:$0xff]
        %v4031 = vld [vmem:[%s3647 + $0x10] sm:$0xff]
        %v4032 = vld [vmem:[%s3647 + $0x18] sm:$0xff]
        %v4033 = vld [vmem:[%s3647 + $0x20] sm:$0xff]
        %v4034 = vld [vmem:[%s3647 + $0x28] sm:$0xff]
        %v4035 = vmul.f32 %v4029, %v357
        %v4036 = vmul.f32 %v4030, %v361
        %v4037 = vmul.f32 %v4031, %v365
        %v4038 = vmul.f32 %v4032, %v357
        %v4039 = vmul.f32 %v4033, %v361
        %v4040 = vmul.f32 %v4034, %v365
        %v4041 = vmul.f32 %v4029, %v379
        %v4042 = vmul.f32 %v4030, %v383
        %v4043 = vmul.f32 %v4031, %v387
        %v4044 = vmul.f32 %v4032, %v379
        %v4045 = vmul.f32 %v4033, %v383
        %v4046 = vmul.f32 %v4034, %v387
        %v4053 = vrot.slane %v4041, 1
        %v4054 = vrot.slane %v4044, 1
        %v4055 = vsel %vm403, %v4053, %v4054
        %v4056 = vrot.slane %v4042, 1
        %v4057 = vrot.slane %v4045, 1
        %v4058 = vsel %vm403, %v4056, %v4057
        %v4059 = vrot.slane %v4043, 1
        %v4060 = vrot.slane %v4046, 1
        %v4061 = vsel %vm403, %v4059, %v4060
        %v4068 = vadd.f32 %v4035, %v4055
        %v4069 = vadd.f32 %v4036, %v4058
        %v4070 = vadd.f32 %v4037, %v4061
        %v4071 = vadd.f32 %v4038, %v4054
        %v4072 = vadd.f32 %v4039, %v4057
        %v4073 = vadd.f32 %v4040, %v4060
        %v4074 = vmul.f32 %v4029, %v429
        %v4075 = vmul.f32 %v4030, %v433
        %v4076 = vmul.f32 %v4031, %v437
        %v4077 = vmul.f32 %v4032, %v429
        %v4078 = vmul.f32 %v4033, %v433
        %v4079 = vmul.f32 %v4034, %v437
        %v4086 = vrot.slane %v4074, 2
        %v4087 = vrot.slane %v4077, 2
        %v4088 = vsel %vm453, %v4086, %v4087
        %v4089 = vrot.slane %v4075, 2
        %v4090 = vrot.slane %v4078, 2
        %v4091 = vsel %vm453, %v4089, %v4090
        %v4092 = vrot.slane %v4076, 2
        %v4093 = vrot.slane %v4079, 2
        %v4094 = vsel %vm453, %v4092, %v4093
        %v4101 = vadd.f32 %v4068, %v4088
        %v4102 = vadd.f32 %v4069, %v4091
        %v4103 = vadd.f32 %v4070, %v4094
        %v4104 = vadd.f32 %v4071, %v4087
        %v4105 = vadd.f32 %v4072, %v4090
        %v4106 = vadd.f32 %v4073, %v4093
        %v4107 = vld [vmem:[%s3919] sm:$0xff]
        %v4108 = vld [vmem:[%s3919 + $0x8] sm:$0xff]
        %v4109 = vld [vmem:[%s3919 + $0x10] sm:$0xff]
        %v4110 = vld [vmem:[%s3919 + $0x18] sm:$0xff]
        %v4111 = vld [vmem:[%s3919 + $0x20] sm:$0xff]
        %v4112 = vld [vmem:[%s3919 + $0x28] sm:$0xff]
        %v4113 = vmul.f32 %v4107, %v486
        %v4114 = vmul.f32 %v4108, %v490
        %v4115 = vmul.f32 %v4109, %v494
        %v4116 = vmul.f32 %v4110, %v486
        %v4117 = vmul.f32 %v4111, %v490
        %v4118 = vmul.f32 %v4112, %v494
        %v4119 = vmul.f32 %v4107, %v508
        %v4120 = vmul.f32 %v4108, %v512
        %v4121 = vmul.f32 %v4109, %v516
        %v4122 = vmul.f32 %v4110, %v508
        %v4123 = vmul.f32 %v4111, %v512
        %v4124 = vmul.f32 %v4112, %v516
        %v4131 = vrot.slane %v4119, 1
        %v4132 = vrot.slane %v4122, 1
        %v4133 = vsel %vm403, %v4131, %v4132
        %v4134 = vrot.slane %v4120, 1
        %v4135 = vrot.slane %v4123, 1
        %v4136 = vsel %vm403, %v4134, %v4135
        %v4137 = vrot.slane %v4121, 1
        %v4138 = vrot.slane %v4124, 1
        %v4139 = vsel %vm403, %v4137, %v4138
        %v4146 = vadd.f32 %v4113, %v4133
        %v4147 = vadd.f32 %v4114, %v4136
        %v4148 = vadd.f32 %v4115, %v4139
        %v4149 = vadd.f32 %v4116, %v4132
        %v4150 = vadd.f32 %v4117, %v4135
        %v4151 = vadd.f32 %v4118, %v4138
        %v4152 = vmul.f32 %v4107, %v557
        %v4153 = vmul.f32 %v4108, %v561
        %v4154 = vmul.f32 %v4109, %v565
        %v4155 = vmul.f32 %v4110, %v557
        %v4156 = vmul.f32 %v4111, %v561
        %v4157 = vmul.f32 %v4112, %v565
        %v4164 = vrot.slane %v4152, 2
        %v4165 = vrot.slane %v4155, 2
        %v4166 = vsel %vm453, %v4164, %v4165
        %v4167 = vrot.slane %v4153, 2
        %v4168 = vrot.slane %v4156, 2
        %v4169 = vsel %vm453, %v4167, %v4168
        %v4170 = vrot.slane %v4154, 2
        %v4171 = vrot.slane %v4157, 2
        %v4172 = vsel %vm453, %v4170, %v4171
        %v4179 = vadd.f32 %v4146, %v4166
        %v4180 = vadd.f32 %v4147, %v4169
        %v4181 = vadd.f32 %v4148, %v4172
        %v4182 = vadd.f32 %v4149, %v4165
        %v4183 = vadd.f32 %v4150, %v4168
        %v4184 = vadd.f32 %v4151, %v4171
        %v4185 = vadd.f32 %v4101, %v4179
        %v4186 = vadd.f32 %v4102, %v4180
        %v4187 = vadd.f32 %v4103, %v4181
        %v4188 = vadd.f32 %v4104, %v4182
        %v4189 = vadd.f32 %v4105, %v4183
        %v4190 = vadd.f32 %v4106, %v4184
        %s4191 = scalar_lea.vmem %s259, 720 [#allocation2]
        %v4192 = vld [vmem:[%s4191] sm:$0xff]
        %v4193 = vld [vmem:[%s4191 + $0x8] sm:$0xff]
        %v4194 = vld [vmem:[%s4191 + $0x10] sm:$0xff]
        %v4195 = vld [vmem:[%s4191 + $0x18] sm:$0xff]
        %v4196 = vld [vmem:[%s4191 + $0x20] sm:$0xff]
        %v4197 = vld [vmem:[%s4191 + $0x28] sm:$0xff]
        %v4198 = vmul.f32 %v4192, %v619
        %v4199 = vmul.f32 %v4193, %v623
        %v4200 = vmul.f32 %v4194, %v627
        %v4201 = vmul.f32 %v4195, %v619
        %v4202 = vmul.f32 %v4196, %v623
        %v4203 = vmul.f32 %v4197, %v627
        %v4204 = vmul.f32 %v4192, %v641
        %v4205 = vmul.f32 %v4193, %v645
        %v4206 = vmul.f32 %v4194, %v649
        %v4207 = vmul.f32 %v4195, %v641
        %v4208 = vmul.f32 %v4196, %v645
        %v4209 = vmul.f32 %v4197, %v649
        %v4216 = vrot.slane %v4204, 1
        %v4217 = vrot.slane %v4207, 1
        %v4218 = vsel %vm403, %v4216, %v4217
        %v4219 = vrot.slane %v4205, 1
        %v4220 = vrot.slane %v4208, 1
        %v4221 = vsel %vm403, %v4219, %v4220
        %v4222 = vrot.slane %v4206, 1
        %v4223 = vrot.slane %v4209, 1
        %v4224 = vsel %vm403, %v4222, %v4223
        %v4231 = vadd.f32 %v4198, %v4218
        %v4232 = vadd.f32 %v4199, %v4221
        %v4233 = vadd.f32 %v4200, %v4224
        %v4234 = vadd.f32 %v4201, %v4217
        %v4235 = vadd.f32 %v4202, %v4220
        %v4236 = vadd.f32 %v4203, %v4223
        %v4237 = vmul.f32 %v4192, %v690
        %v4238 = vmul.f32 %v4193, %v694
        %v4239 = vmul.f32 %v4194, %v698
        %v4240 = vmul.f32 %v4195, %v690
        %v4241 = vmul.f32 %v4196, %v694
        %v4242 = vmul.f32 %v4197, %v698
        %v4249 = vrot.slane %v4237, 2
        %v4250 = vrot.slane %v4240, 2
        %v4251 = vsel %vm453, %v4249, %v4250
        %v4252 = vrot.slane %v4238, 2
        %v4253 = vrot.slane %v4241, 2
        %v4254 = vsel %vm453, %v4252, %v4253
        %v4255 = vrot.slane %v4239, 2
        %v4256 = vrot.slane %v4242, 2
        %v4257 = vsel %vm453, %v4255, %v4256
        %v4264 = vadd.f32 %v4231, %v4251
        %v4265 = vadd.f32 %v4232, %v4254
        %v4266 = vadd.f32 %v4233, %v4257
        %v4267 = vadd.f32 %v4234, %v4250
        %v4268 = vadd.f32 %v4235, %v4253
        %v4269 = vadd.f32 %v4236, %v4256
        %v4270 = vadd.f32 %v4185, %v4264
        %v4271 = vadd.f32 %v4186, %v4265
        %v4272 = vadd.f32 %v4187, %v4266
        %v4273 = vadd.f32 %v4188, %v4267
        %v4274 = vadd.f32 %v4189, %v4268
        %v4275 = vadd.f32 %v4190, %v4269
        %s4276 = scalar_lea.vmem %s324, 624 [#allocation9]
        %4277 = vst [vmem:[%s4276] sm:$0xff] %v4270
        %4278 = vst [vmem:[%s4276 + $0x8] sm:$0xff] %v4271
        %4279 = vst [vmem:[%s4276 + $0x10] sm:$0xff] %v4272
        %4280 = vst [vmem:[%s4276 + $0x18] sm:$0x3f] %v4273
        %4281 = vst [vmem:[%s4276 + $0x20] sm:$0x3f] %v4274
        %4282 = vst [vmem:[%s4276 + $0x28] sm:$0x3f] %v4275
        %v4283 = vadd.f32 %v4011, %v4270
        %v4284 = vadd.f32 %v4012, %v4271
        %v4285 = vadd.f32 %v4013, %v4272
        %v4286 = vadd.f32 %v4014, %v4273
        %v4287 = vadd.f32 %v4015, %v4274
        %v4288 = vadd.f32 %v4016, %v4275
        %v4289 = vmul.f32 %v4270, %v4270
        %v4290 = vmul.f32 %v4271, %v4271
        %v4291 = vmul.f32 %v4272, %v4272
        %v4292 = vmul.f32 %v4273, %v4273
        %v4293 = vmul.f32 %v4274, %v4274
        %v4294 = vmul.f32 %v4275, %v4275
        %v4295 = vadd.f32 %v4023, %v4289
        %v4296 = vadd.f32 %v4024, %v4290
        %v4297 = vadd.f32 %v4025, %v4291
        %v4298 = vadd.f32 %v4026, %v4292
        %v4299 = vadd.f32 %v4027, %v4293
        %v4300 = vadd.f32 %v4028, %v4294
        %v4301 = vsel %vm453, %v4286, 0.0
        %v4302 = vadd.f32 %v4283, %v4301
        %v4303 = vrot.slane %v4302, 4
        %v4304 = vadd.f32 %v4302, %v4303
        %v4305 = vrot.slane %v4304, 2
        %v4306 = vadd.f32 %v4304, %v4305
        %v4307 = vrot.slane %v4306, 1
        %v4308 = vadd.f32 %v4306, %v4307
        %v4309 = vsel %vm453, %v4287, 0.0
        %v4310 = vadd.f32 %v4284, %v4309
        %v4311 = vrot.slane %v4310, 4
        %v4312 = vadd.f32 %v4310, %v4311
        %v4313 = vrot.slane %v4312, 2
        %v4314 = vadd.f32 %v4312, %v4313
        %v4315 = vrot.slane %v4314, 1
        %v4316 = vadd.f32 %v4314, %v4315
        %v4317 = vsel %vm453, %v4288, 0.0
        %v4318 = vadd.f32 %v4285, %v4317
        %v4319 = vrot.slane %v4318, 4
        %v4320 = vadd.f32 %v4318, %v4319
        %v4321 = vrot.slane %v4320, 2
        %v4322 = vadd.f32 %v4320, %v4321
        %v4323 = vrot.slane %v4322, 1
        %v4324 = vadd.f32 %v4322, %v4323
        %v4325 = vmul.f32 %v4308, 0.0051020407
        %v4326 = vmul.f32 %v4316, 0.0051020407
        %v4327 = vmul.f32 %v4324, 0.0051020407
        %v4328 = vsel %vm453, %v4298, 0.0
        %v4329 = vadd.f32 %v4295, %v4328
        %v4330 = vrot.slane %v4329, 4
        %v4331 = vadd.f32 %v4329, %v4330
        %v4332 = vrot.slane %v4331, 2
        %v4333 = vadd.f32 %v4331, %v4332
        %v4334 = vrot.slane %v4333, 1
        %v4335 = vadd.f32 %v4333, %v4334
        %v4336 = vsel %vm453, %v4299, 0.0
        %v4337 = vadd.f32 %v4296, %v4336
        %v4338 = vrot.slane %v4337, 4
        %v4339 = vadd.f32 %v4337, %v4338
        %v4340 = vrot.slane %v4339, 2
        %v4341 = vadd.f32 %v4339, %v4340
        %v4342 = vrot.slane %v4341, 1
        %v4343 = vadd.f32 %v4341, %v4342
        %v4344 = vsel %vm453, %v4300, 0.0
        %v4345 = vadd.f32 %v4297, %v4344
        %v4346 = vrot.slane %v4345, 4
        %v4347 = vadd.f32 %v4345, %v4346
        %v4348 = vrot.slane %v4347, 2
        %v4349 = vadd.f32 %v4347, %v4348
        %v4350 = vrot.slane %v4349, 1
        %v4351 = vadd.f32 %v4349, %v4350
        %v4352 = vmul.f32 %v4335, 0.0051020407
        %v4353 = vmul.f32 %v4343, 0.0051020407
        %v4354 = vmul.f32 %v4351, 0.0051020407
        %v4355 = vmul.f32 %v4325, %v4325
        %v4356 = vmul.f32 %v4326, %v4326
        %v4357 = vmul.f32 %v4327, %v4327
        %v4358 = vsub.f32 %v4352, %v4355
        %v4359 = vsub.f32 %v4353, %v4356
        %v4360 = vsub.f32 %v4354, %v4357
        %v4361 = vmax.f32 %v4358, 0.0
        %v4362 = vmax.f32 %v4359, 0.0
        %v4363 = vmax.f32 %v4360, 0.0
        %v4364 = vld [vmem:[%s277] sm:$0x7]
        %v4365 = vadd.f32 %v4361, 0.001
        %v4366 = vadd.f32 %v4362, 0.001
        %v4367 = vadd.f32 %v4363, 0.001
        %v4368 = vrsqrt.pop %v4365
        %v4369 = vrsqrt.pop %v4366
        %v4370 = vrsqrt.pop %v4367
        %v4374 = vcombine.low %v4368, %v4369
        %v4376 = vunpack.c.l.s4 1966171168
        %v4377 = vunpack.c.0.s8 %v4376
        %v4378 = vlaneseq
        %v4379 = vshrl.u32 %v4378, 7
        %v4380 = vsub.s32 %v4377, %v4379
        %v4381 = vrot.slane %v4374, %v4380
        %v4383 = vunpack.c.l.s4 1966171168
        %v4384 = vunpack.c.0.s8 %v4383
        %v4385 = vlaneseq
        %v4386 = vshrl.u32 %v4385, 7
        %v4387 = vsub.s32 %v4384, %v4386
        %v4388 = vrot.slane %v4370, %v4387
        %v4389 = vcombine.low %v4381, %v4388
        %v4391 = vunpack.c.l.s4 1966171168
        %v4392 = vunpack.c.0.s8 %v4391
        %v4393 = vlaneseq
        %v4394 = vshrl.u32 %v4393, 7
        %v4395 = vsub.s32 %v4392, %v4394
        %v4396 = vrot.slane %v4389, %v4395
        %v4398 = vmul.f32 %v4364, %v4396
        %v4399 = vld [vmem:[%s286] sm:$0x7]
        %v4401 = vlaneseq
        %v4402 = vshrl.u32 %v4401, 7
        %v4403 = vsub.s32 0, %v4402
        %v4404 = vrot.slane %v4398, %v4403
        %v4405 = vlaneseq
        %v4406 = vshrl.u32 %v4405, 7
        %v4407 = vsub.s32 1, %v4406
        %v4408 = vrot.slane %v4398, %v4407
        %v4409 = vlaneseq
        %v4410 = vshrl.u32 %v4409, 7
        %v4411 = vsub.s32 2, %v4410
        %v4412 = vrot.slane %v4398, %v4411
        %v4416 = vmul.f32 %v4325, %v4404
        %v4417 = vmul.f32 %v4326, %v4408
        %v4418 = vmul.f32 %v4327, %v4412
        %v4422 = vcombine.low %v4416, %v4417
        %v4424 = vunpack.c.l.s4 1966171168
        %v4425 = vunpack.c.0.s8 %v4424
        %v4426 = vlaneseq
        %v4427 = vshrl.u32 %v4426, 7
        %v4428 = vsub.s32 %v4425, %v4427
        %v4429 = vrot.slane %v4422, %v4428
        %v4431 = vunpack.c.l.s4 1966171168
        %v4432 = vunpack.c.0.s8 %v4431
        %v4433 = vlaneseq
        %v4434 = vshrl.u32 %v4433, 7
        %v4435 = vsub.s32 %v4432, %v4434
        %v4436 = vrot.slane %v4418, %v4435
        %v4437 = vcombine.low %v4429, %v4436
        %v4439 = vunpack.c.l.s4 1966171168
        %v4440 = vunpack.c.0.s8 %v4439
        %v4441 = vlaneseq
        %v4442 = vshrl.u32 %v4441, 7
        %v4443 = vsub.s32 %v4440, %v4442
        %v4444 = vrot.slane %v4437, %v4443
        %v4446 = vsub.f32 %v4399, %v4444
        %v4447 = vld [vmem:[%s324] sm:$0xff]
        %v4448 = vld [vmem:[%s324 + $0x8] sm:$0xff]
        %v4449 = vld [vmem:[%s324 + $0x10] sm:$0xff]
        %v4450 = vld [vmem:[%s324 + $0x18] sm:$0x3f]
        %v4451 = vld [vmem:[%s324 + $0x20] sm:$0x3f]
        %v4452 = vld [vmem:[%s324 + $0x28] sm:$0x3f]
        %v4453 = vmul.f32 %v4447, %v4404
        %v4454 = vmul.f32 %v4448, %v4408
        %v4455 = vmul.f32 %v4449, %v4412
        %v4456 = vmul.f32 %v4450, %v4404
        %v4457 = vmul.f32 %v4451, %v4408
        %v4458 = vmul.f32 %v4452, %v4412
        %v4460 = vlaneseq
        %v4461 = vshrl.u32 %v4460, 7
        %v4462 = vsub.s32 0, %v4461
        %v4463 = vrot.slane %v4446, %v4462
        %v4464 = vlaneseq
        %v4465 = vshrl.u32 %v4464, 7
        %v4466 = vsub.s32 1, %v4465
        %v4467 = vrot.slane %v4446, %v4466
        %v4468 = vlaneseq
        %v4469 = vshrl.u32 %v4468, 7
        %v4470 = vsub.s32 2, %v4469
        %v4471 = vrot.slane %v4446, %v4470
        %v4475 = vadd.f32 %v4453, %v4463
        %v4476 = vadd.f32 %v4454, %v4467
        %v4477 = vadd.f32 %v4455, %v4471
        %v4478 = vadd.f32 %v4456, %v4463
        %v4479 = vadd.f32 %v4457, %v4467
        %v4480 = vadd.f32 %v4458, %v4471
        %4481 = vst [vmem:[%s324] sm:$0xff] %v4475
        %4482 = vst [vmem:[%s324 + $0x8] sm:$0xff] %v4476
        %4483 = vst [vmem:[%s324 + $0x10] sm:$0xff] %v4477
        %4484 = vst [vmem:[%s324 + $0x18] sm:$0x3f] %v4478
        %4485 = vst [vmem:[%s324 + $0x20] sm:$0x3f] %v4479
        %4486 = vst [vmem:[%s324 + $0x28] sm:$0x3f] %v4480
        %v4487 = vld [vmem:[%s1012] sm:$0xff]
        %v4488 = vld [vmem:[%s1012 + $0x8] sm:$0xff]
        %v4489 = vld [vmem:[%s1012 + $0x10] sm:$0xff]
        %v4490 = vld [vmem:[%s1012 + $0x18] sm:$0x3f]
        %v4491 = vld [vmem:[%s1012 + $0x20] sm:$0x3f]
        %v4492 = vld [vmem:[%s1012 + $0x28] sm:$0x3f]
        %v4493 = vmul.f32 %v4487, %v4404
        %v4494 = vmul.f32 %v4488, %v4408
        %v4495 = vmul.f32 %v4489, %v4412
        %v4496 = vmul.f32 %v4490, %v4404
        %v4497 = vmul.f32 %v4491, %v4408
        %v4498 = vmul.f32 %v4492, %v4412
        %v4499 = vadd.f32 %v4493, %v4463
        %v4500 = vadd.f32 %v4494, %v4467
        %v4501 = vadd.f32 %v4495, %v4471
        %v4502 = vadd.f32 %v4496, %v4463
        %v4503 = vadd.f32 %v4497, %v4467
        %v4504 = vadd.f32 %v4498, %v4471
        %4505 = vst [vmem:[%s1012] sm:$0xff] %v4499
        %4506 = vst [vmem:[%s1012 + $0x8] sm:$0xff] %v4500
        %4507 = vst [vmem:[%s1012 + $0x10] sm:$0xff] %v4501
        %4508 = vst [vmem:[%s1012 + $0x18] sm:$0x3f] %v4502
        %4509 = vst [vmem:[%s1012 + $0x20] sm:$0x3f] %v4503
        %4510 = vst [vmem:[%s1012 + $0x28] sm:$0x3f] %v4504
        %v4511 = vld [vmem:[%s1284] sm:$0xff]
        %v4512 = vld [vmem:[%s1284 + $0x8] sm:$0xff]
        %v4513 = vld [vmem:[%s1284 + $0x10] sm:$0xff]
        %v4514 = vld [vmem:[%s1284 + $0x18] sm:$0x3f]
        %v4515 = vld [vmem:[%s1284 + $0x20] sm:$0x3f]
        %v4516 = vld [vmem:[%s1284 + $0x28] sm:$0x3f]
        %v4517 = vmul.f32 %v4511, %v4404
        %v4518 = vmul.f32 %v4512, %v4408
        %v4519 = vmul.f32 %v4513, %v4412
        %v4520 = vmul.f32 %v4514, %v4404
        %v4521 = vmul.f32 %v4515, %v4408
        %v4522 = vmul.f32 %v4516, %v4412
        %v4523 = vadd.f32 %v4517, %v4463
        %v4524 = vadd.f32 %v4518, %v4467
        %v4525 = vadd.f32 %v4519, %v4471
        %v4526 = vadd.f32 %v4520, %v4463
        %v4527 = vadd.f32 %v4521, %v4467
        %v4528 = vadd.f32 %v4522, %v4471
        %4529 = vst [vmem:[%s1284] sm:$0xff] %v4523
        %4530 = vst [vmem:[%s1284 + $0x8] sm:$0xff] %v4524
        %4531 = vst [vmem:[%s1284 + $0x10] sm:$0xff] %v4525
        %4532 = vst [vmem:[%s1284 + $0x18] sm:$0x3f] %v4526
        %4533 = vst [vmem:[%s1284 + $0x20] sm:$0x3f] %v4527
        %4534 = vst [vmem:[%s1284 + $0x28] sm:$0x3f] %v4528
        %v4535 = vld [vmem:[%s1556] sm:$0xff]
        %v4536 = vld [vmem:[%s1556 + $0x8] sm:$0xff]
        %v4537 = vld [vmem:[%s1556 + $0x10] sm:$0xff]
        %v4538 = vld [vmem:[%s1556 + $0x18] sm:$0x3f]
        %v4539 = vld [vmem:[%s1556 + $0x20] sm:$0x3f]
        %v4540 = vld [vmem:[%s1556 + $0x28] sm:$0x3f]
        %v4541 = vmul.f32 %v4535, %v4404
        %v4542 = vmul.f32 %v4536, %v4408
        %v4543 = vmul.f32 %v4537, %v4412
        %v4544 = vmul.f32 %v4538, %v4404
        %v4545 = vmul.f32 %v4539, %v4408
        %v4546 = vmul.f32 %v4540, %v4412
        %v4547 = vadd.f32 %v4541, %v4463
        %v4548 = vadd.f32 %v4542, %v4467
        %v4549 = vadd.f32 %v4543, %v4471
        %v4550 = vadd.f32 %v4544, %v4463
        %v4551 = vadd.f32 %v4545, %v4467
        %v4552 = vadd.f32 %v4546, %v4471
        %4553 = vst [vmem:[%s1556] sm:$0xff] %v4547
        %4554 = vst [vmem:[%s1556 + $0x8] sm:$0xff] %v4548
        %4555 = vst [vmem:[%s1556 + $0x10] sm:$0xff] %v4549
        %4556 = vst [vmem:[%s1556 + $0x18] sm:$0x3f] %v4550
        %4557 = vst [vmem:[%s1556 + $0x20] sm:$0x3f] %v4551
        %4558 = vst [vmem:[%s1556 + $0x28] sm:$0x3f] %v4552
        %v4559 = vld [vmem:[%s1828] sm:$0xff]
        %v4560 = vld [vmem:[%s1828 + $0x8] sm:$0xff]
        %v4561 = vld [vmem:[%s1828 + $0x10] sm:$0xff]
        %v4562 = vld [vmem:[%s1828 + $0x18] sm:$0x3f]
        %v4563 = vld [vmem:[%s1828 + $0x20] sm:$0x3f]
        %v4564 = vld [vmem:[%s1828 + $0x28] sm:$0x3f]
        %v4565 = vmul.f32 %v4559, %v4404
        %v4566 = vmul.f32 %v4560, %v4408
        %v4567 = vmul.f32 %v4561, %v4412
        %v4568 = vmul.f32 %v4562, %v4404
        %v4569 = vmul.f32 %v4563, %v4408
        %v4570 = vmul.f32 %v4564, %v4412
        %v4571 = vadd.f32 %v4565, %v4463
        %v4572 = vadd.f32 %v4566, %v4467
        %v4573 = vadd.f32 %v4567, %v4471
        %v4574 = vadd.f32 %v4568, %v4463
        %v4575 = vadd.f32 %v4569, %v4467
        %v4576 = vadd.f32 %v4570, %v4471
        %4577 = vst [vmem:[%s1828] sm:$0xff] %v4571
        %4578 = vst [vmem:[%s1828 + $0x8] sm:$0xff] %v4572
        %4579 = vst [vmem:[%s1828 + $0x10] sm:$0xff] %v4573
        %4580 = vst [vmem:[%s1828 + $0x18] sm:$0x3f] %v4574
        %4581 = vst [vmem:[%s1828 + $0x20] sm:$0x3f] %v4575
        %4582 = vst [vmem:[%s1828 + $0x28] sm:$0x3f] %v4576
        %v4583 = vld [vmem:[%s2100] sm:$0xff]
        %v4584 = vld [vmem:[%s2100 + $0x8] sm:$0xff]
        %v4585 = vld [vmem:[%s2100 + $0x10] sm:$0xff]
        %v4586 = vld [vmem:[%s2100 + $0x18] sm:$0x3f]
        %v4587 = vld [vmem:[%s2100 + $0x20] sm:$0x3f]
        %v4588 = vld [vmem:[%s2100 + $0x28] sm:$0x3f]
        %v4589 = vmul.f32 %v4583, %v4404
        %v4590 = vmul.f32 %v4584, %v4408
        %v4591 = vmul.f32 %v4585, %v4412
        %v4592 = vmul.f32 %v4586, %v4404
        %v4593 = vmul.f32 %v4587, %v4408
        %v4594 = vmul.f32 %v4588, %v4412
        %v4595 = vadd.f32 %v4589, %v4463
        %v4596 = vadd.f32 %v4590, %v4467
        %v4597 = vadd.f32 %v4591, %v4471
        %v4598 = vadd.f32 %v4592, %v4463
        %v4599 = vadd.f32 %v4593, %v4467
        %v4600 = vadd.f32 %v4594, %v4471
        %4601 = vst [vmem:[%s2100] sm:$0xff] %v4595
        %4602 = vst [vmem:[%s2100 + $0x8] sm:$0xff] %v4596
        %4603 = vst [vmem:[%s2100 + $0x10] sm:$0xff] %v4597
        %4604 = vst [vmem:[%s2100 + $0x18] sm:$0x3f] %v4598
        %4605 = vst [vmem:[%s2100 + $0x20] sm:$0x3f] %v4599
        %4606 = vst [vmem:[%s2100 + $0x28] sm:$0x3f] %v4600
        %v4607 = vld [vmem:[%s2372] sm:$0xff]
        %v4608 = vld [vmem:[%s2372 + $0x8] sm:$0xff]
        %v4609 = vld [vmem:[%s2372 + $0x10] sm:$0xff]
        %v4610 = vld [vmem:[%s2372 + $0x18] sm:$0x3f]
        %v4611 = vld [vmem:[%s2372 + $0x20] sm:$0x3f]
        %v4612 = vld [vmem:[%s2372 + $0x28] sm:$0x3f]
        %v4613 = vmul.f32 %v4607, %v4404
        %v4614 = vmul.f32 %v4608, %v4408
        %v4615 = vmul.f32 %v4609, %v4412
        %v4616 = vmul.f32 %v4610, %v4404
        %v4617 = vmul.f32 %v4611, %v4408
        %v4618 = vmul.f32 %v4612, %v4412
        %v4619 = vadd.f32 %v4613, %v4463
        %v4620 = vadd.f32 %v4614, %v4467
        %v4621 = vadd.f32 %v4615, %v4471
        %v4622 = vadd.f32 %v4616, %v4463
        %v4623 = vadd.f32 %v4617, %v4467
        %v4624 = vadd.f32 %v4618, %v4471
        %4625 = vst [vmem:[%s2372] sm:$0xff] %v4619
        %4626 = vst [vmem:[%s2372 + $0x8] sm:$0xff] %v4620
        %4627 = vst [vmem:[%s2372 + $0x10] sm:$0xff] %v4621
        %4628 = vst [vmem:[%s2372 + $0x18] sm:$0x3f] %v4622
        %4629 = vst [vmem:[%s2372 + $0x20] sm:$0x3f] %v4623
        %4630 = vst [vmem:[%s2372 + $0x28] sm:$0x3f] %v4624
        %v4631 = vld [vmem:[%s2644] sm:$0xff]
        %v4632 = vld [vmem:[%s2644 + $0x8] sm:$0xff]
        %v4633 = vld [vmem:[%s2644 + $0x10] sm:$0xff]
        %v4634 = vld [vmem:[%s2644 + $0x18] sm:$0x3f]
        %v4635 = vld [vmem:[%s2644 + $0x20] sm:$0x3f]
        %v4636 = vld [vmem:[%s2644 + $0x28] sm:$0x3f]
        %v4637 = vmul.f32 %v4631, %v4404
        %v4638 = vmul.f32 %v4632, %v4408
        %v4639 = vmul.f32 %v4633, %v4412
        %v4640 = vmul.f32 %v4634, %v4404
        %v4641 = vmul.f32 %v4635, %v4408
        %v4642 = vmul.f32 %v4636, %v4412
        %v4643 = vadd.f32 %v4637, %v4463
        %v4644 = vadd.f32 %v4638, %v4467
        %v4645 = vadd.f32 %v4639, %v4471
        %v4646 = vadd.f32 %v4640, %v4463
        %v4647 = vadd.f32 %v4641, %v4467
        %v4648 = vadd.f32 %v4642, %v4471
        %4649 = vst [vmem:[%s2644] sm:$0xff] %v4643
        %4650 = vst [vmem:[%s2644 + $0x8] sm:$0xff] %v4644
        %4651 = vst [vmem:[%s2644 + $0x10] sm:$0xff] %v4645
        %4652 = vst [vmem:[%s2644 + $0x18] sm:$0x3f] %v4646
        %4653 = vst [vmem:[%s2644 + $0x20] sm:$0x3f] %v4647
        %4654 = vst [vmem:[%s2644 + $0x28] sm:$0x3f] %v4648
        %v4655 = vld [vmem:[%s2916] sm:$0xff]
        %v4656 = vld [vmem:[%s2916 + $0x8] sm:$0xff]
        %v4657 = vld [vmem:[%s2916 + $0x10] sm:$0xff]
        %v4658 = vld [vmem:[%s2916 + $0x18] sm:$0x3f]
        %v4659 = vld [vmem:[%s2916 + $0x20] sm:$0x3f]
        %v4660 = vld [vmem:[%s2916 + $0x28] sm:$0x3f]
        %v4661 = vmul.f32 %v4655, %v4404
        %v4662 = vmul.f32 %v4656, %v4408
        %v4663 = vmul.f32 %v4657, %v4412
        %v4664 = vmul.f32 %v4658, %v4404
        %v4665 = vmul.f32 %v4659, %v4408
        %v4666 = vmul.f32 %v4660, %v4412
        %v4667 = vadd.f32 %v4661, %v4463
        %v4668 = vadd.f32 %v4662, %v4467
        %v4669 = vadd.f32 %v4663, %v4471
        %v4670 = vadd.f32 %v4664, %v4463
        %v4671 = vadd.f32 %v4665, %v4467
        %v4672 = vadd.f32 %v4666, %v4471
        %4673 = vst [vmem:[%s2916] sm:$0xff] %v4667
        %4674 = vst [vmem:[%s2916 + $0x8] sm:$0xff] %v4668
        %4675 = vst [vmem:[%s2916 + $0x10] sm:$0xff] %v4669
        %4676 = vst [vmem:[%s2916 + $0x18] sm:$0x3f] %v4670
        %4677 = vst [vmem:[%s2916 + $0x20] sm:$0x3f] %v4671
        %4678 = vst [vmem:[%s2916 + $0x28] sm:$0x3f] %v4672
        %v4679 = vld [vmem:[%s3188] sm:$0xff]
        %v4680 = vld [vmem:[%s3188 + $0x8] sm:$0xff]
        %v4681 = vld [vmem:[%s3188 + $0x10] sm:$0xff]
        %v4682 = vld [vmem:[%s3188 + $0x18] sm:$0x3f]
        %v4683 = vld [vmem:[%s3188 + $0x20] sm:$0x3f]
        %v4684 = vld [vmem:[%s3188 + $0x28] sm:$0x3f]
        %v4685 = vmul.f32 %v4679, %v4404
        %v4686 = vmul.f32 %v4680, %v4408
        %v4687 = vmul.f32 %v4681, %v4412
        %v4688 = vmul.f32 %v4682, %v4404
        %v4689 = vmul.f32 %v4683, %v4408
        %v4690 = vmul.f32 %v4684, %v4412
        %v4691 = vadd.f32 %v4685, %v4463
        %v4692 = vadd.f32 %v4686, %v4467
        %v4693 = vadd.f32 %v4687, %v4471
        %v4694 = vadd.f32 %v4688, %v4463
        %v4695 = vadd.f32 %v4689, %v4467
        %v4696 = vadd.f32 %v4690, %v4471
        %4697 = vst [vmem:[%s3188] sm:$0xff] %v4691
        %4698 = vst [vmem:[%s3188 + $0x8] sm:$0xff] %v4692
        %4699 = vst [vmem:[%s3188 + $0x10] sm:$0xff] %v4693
        %4700 = vst [vmem:[%s3188 + $0x18] sm:$0x3f] %v4694
        %4701 = vst [vmem:[%s3188 + $0x20] sm:$0x3f] %v4695
        %4702 = vst [vmem:[%s3188 + $0x28] sm:$0x3f] %v4696
        %v4703 = vld [vmem:[%s3460] sm:$0xff]
        %v4704 = vld [vmem:[%s3460 + $0x8] sm:$0xff]
        %v4705 = vld [vmem:[%s3460 + $0x10] sm:$0xff]
        %v4706 = vld [vmem:[%s3460 + $0x18] sm:$0x3f]
        %v4707 = vld [vmem:[%s3460 + $0x20] sm:$0x3f]
        %v4708 = vld [vmem:[%s3460 + $0x28] sm:$0x3f]
        %v4709 = vmul.f32 %v4703, %v4404
        %v4710 = vmul.f32 %v4704, %v4408
        %v4711 = vmul.f32 %v4705, %v4412
        %v4712 = vmul.f32 %v4706, %v4404
        %v4713 = vmul.f32 %v4707, %v4408
        %v4714 = vmul.f32 %v4708, %v4412
        %v4715 = vadd.f32 %v4709, %v4463
        %v4716 = vadd.f32 %v4710, %v4467
        %v4717 = vadd.f32 %v4711, %v4471
        %v4718 = vadd.f32 %v4712, %v4463
        %v4719 = vadd.f32 %v4713, %v4467
        %v4720 = vadd.f32 %v4714, %v4471
        %4721 = vst [vmem:[%s3460] sm:$0xff] %v4715
        %4722 = vst [vmem:[%s3460 + $0x8] sm:$0xff] %v4716
        %4723 = vst [vmem:[%s3460 + $0x10] sm:$0xff] %v4717
        %4724 = vst [vmem:[%s3460 + $0x18] sm:$0x3f] %v4718
        %4725 = vst [vmem:[%s3460 + $0x20] sm:$0x3f] %v4719
        %4726 = vst [vmem:[%s3460 + $0x28] sm:$0x3f] %v4720
        %v4727 = vld [vmem:[%s3732] sm:$0xff]
        %v4728 = vld [vmem:[%s3732 + $0x8] sm:$0xff]
        %v4729 = vld [vmem:[%s3732 + $0x10] sm:$0xff]
        %v4730 = vld [vmem:[%s3732 + $0x18] sm:$0x3f]
        %v4731 = vld [vmem:[%s3732 + $0x20] sm:$0x3f]
        %v4732 = vld [vmem:[%s3732 + $0x28] sm:$0x3f]
        %v4733 = vmul.f32 %v4727, %v4404
        %v4734 = vmul.f32 %v4728, %v4408
        %v4735 = vmul.f32 %v4729, %v4412
        %v4736 = vmul.f32 %v4730, %v4404
        %v4737 = vmul.f32 %v4731, %v4408
        %v4738 = vmul.f32 %v4732, %v4412
        %v4739 = vadd.f32 %v4733, %v4463
        %v4740 = vadd.f32 %v4734, %v4467
        %v4741 = vadd.f32 %v4735, %v4471
        %v4742 = vadd.f32 %v4736, %v4463
        %v4743 = vadd.f32 %v4737, %v4467
        %v4744 = vadd.f32 %v4738, %v4471
        %4745 = vst [vmem:[%s3732] sm:$0xff] %v4739
        %4746 = vst [vmem:[%s3732 + $0x8] sm:$0xff] %v4740
        %4747 = vst [vmem:[%s3732 + $0x10] sm:$0xff] %v4741
        %4748 = vst [vmem:[%s3732 + $0x18] sm:$0x3f] %v4742
        %4749 = vst [vmem:[%s3732 + $0x20] sm:$0x3f] %v4743
        %4750 = vst [vmem:[%s3732 + $0x28] sm:$0x3f] %v4744
        %v4751 = vld [vmem:[%s4004] sm:$0xff]
        %v4752 = vld [vmem:[%s4004 + $0x8] sm:$0xff]
        %v4753 = vld [vmem:[%s4004 + $0x10] sm:$0xff]
        %v4754 = vld [vmem:[%s4004 + $0x18] sm:$0x3f]
        %v4755 = vld [vmem:[%s4004 + $0x20] sm:$0x3f]
        %v4756 = vld [vmem:[%s4004 + $0x28] sm:$0x3f]
        %v4757 = vmul.f32 %v4751, %v4404
        %v4758 = vmul.f32 %v4752, %v4408
        %v4759 = vmul.f32 %v4753, %v4412
        %v4760 = vmul.f32 %v4754, %v4404
        %v4761 = vmul.f32 %v4755, %v4408
        %v4762 = vmul.f32 %v4756, %v4412
        %v4763 = vadd.f32 %v4757, %v4463
        %v4764 = vadd.f32 %v4758, %v4467
        %v4765 = vadd.f32 %v4759, %v4471
        %v4766 = vadd.f32 %v4760, %v4463
        %v4767 = vadd.f32 %v4761, %v4467
        %v4768 = vadd.f32 %v4762, %v4471
        %4769 = vst [vmem:[%s4004] sm:$0xff] %v4763
        %4770 = vst [vmem:[%s4004 + $0x8] sm:$0xff] %v4764
        %4771 = vst [vmem:[%s4004 + $0x10] sm:$0xff] %v4765
        %4772 = vst [vmem:[%s4004 + $0x18] sm:$0x3f] %v4766
        %4773 = vst [vmem:[%s4004 + $0x20] sm:$0x3f] %v4767
        %4774 = vst [vmem:[%s4004 + $0x28] sm:$0x3f] %v4768
        %v4775 = vld [vmem:[%s4276] sm:$0xff]
        %v4776 = vld [vmem:[%s4276 + $0x8] sm:$0xff]
        %v4777 = vld [vmem:[%s4276 + $0x10] sm:$0xff]
        %v4778 = vld [vmem:[%s4276 + $0x18] sm:$0x3f]
        %v4779 = vld [vmem:[%s4276 + $0x20] sm:$0x3f]
        %v4780 = vld [vmem:[%s4276 + $0x28] sm:$0x3f]
        %v4781 = vmul.f32 %v4775, %v4404
        %v4782 = vmul.f32 %v4776, %v4408
        %v4783 = vmul.f32 %v4777, %v4412
        %v4784 = vmul.f32 %v4778, %v4404
        %v4785 = vmul.f32 %v4779, %v4408
        %v4786 = vmul.f32 %v4780, %v4412
        %v4787 = vadd.f32 %v4781, %v4463
        %v4788 = vadd.f32 %v4782, %v4467
        %v4789 = vadd.f32 %v4783, %v4471
        %v4790 = vadd.f32 %v4784, %v4463
        %v4791 = vadd.f32 %v4785, %v4467
        %v4792 = vadd.f32 %v4786, %v4471
        %4793 = vst [vmem:[%s4276] sm:$0xff] %v4787
        %4794 = vst [vmem:[%s4276 + $0x8] sm:$0xff] %v4788
        %4795 = vst [vmem:[%s4276 + $0x10] sm:$0xff] %v4789
        %4796 = vst [vmem:[%s4276 + $0x18] sm:$0x3f] %v4790
        %4797 = vst [vmem:[%s4276 + $0x20] sm:$0x3f] %v4791
        %4798 = vst [vmem:[%s4276 + $0x28] sm:$0x3f] %v4792
        %s4799 = sand.u32 %s136, 1
        %s4800 = sand.u32 %s136, 1
        %s4801 = smul.addr %s4800, 672
        %s4802 = scalar_lea.vmem [#allocation9], %s4801
        // Predicated region
        $region53: #{tpu_custom_call.1} parent=35 // pred_check
          %p4803 = pneg %p146
        $region54: #{tpu_custom_call.1} parent=35 // pred_check_branch
          %4805 = sbr.rel (%p4803) target = $region56
        $region55: #{tpu_custom_call.1} parent=35 // pred_region
          %s4806 = smul.u32 3, %s24
          %s4807 = smul.addr %s4806, 8
          %s4808 = scalar_lea.vmem %s4, %s4807
          // Predicated region
          $region57: #{tpu_custom_call.1} parent=55 // pred_check
            _
          $region58: #{tpu_custom_call.1} parent=55 // pred_check_branch
            %4810 = sbr.rel (0) target = $region60
          $region59: #{tpu_custom_call.1} parent=55 // pred_region
            // Predicated region
            $region61: #{tpu_custom_call.1} parent=59 // pred_check
              _
            $region62: #{tpu_custom_call.1} parent=59 // pred_check_branch
              %4812 = sbr.rel (0) target = $region64
            $region63: #{tpu_custom_call.1} parent=59 // pred_region
              loop: start=0, step=1, limit=1
              $region65: #{tpu_custom_call.1} parent=63 // loop_pre_header
                _
              $region66: #{tpu_custom_call.1} parent=63 // loop_header
                %s4814 = sphi 0, %s4818
                %p4815 = scmp.ge.s32.totalorder %s4814, 1
                %s4819 = sphi %s4802, %s4802
                %s4820 = sphi %s4808, %s4808
              $region67: #{tpu_custom_call.1} parent=63 // loop_header_branch
                %4817 = sbr.rel (%p4815) target = $region71
              $region68: #{tpu_custom_call.1} parent=63 // loop_body
                %v4821 = vld [vmem:[%s4819] sm:$0xff]
                %4822 = vst [vmem:[%s4820] sm:$0xff] %v4821
                %v4823 = vld [vmem:[%s4819 + $0x8] sm:$0xff]
                %4824 = vst [vmem:[%s4820 + $0x8] sm:$0xff] %v4823
                %v4825 = vld [vmem:[%s4819 + $0x10] sm:$0xff]
                %4826 = vst [vmem:[%s4820 + $0x10] sm:$0xff] %v4825
                %v4827 = vld [vmem:[%s4819 + $0x18] sm:$0xff]
                %4828 = vst [vmem:[%s4820 + $0x48] sm:$0xff] %v4827
                %v4829 = vld [vmem:[%s4819 + $0x20] sm:$0xff]
                %4830 = vst [vmem:[%s4820 + $0x50] sm:$0xff] %v4829
                %v4831 = vld [vmem:[%s4819 + $0x28] sm:$0xff]
                %4832 = vst [vmem:[%s4820 + $0x58] sm:$0xff] %v4831
                %v4833 = vld [vmem:[%s4819 + $0x30] sm:$0xff]
                %4834 = vst [vmem:[%s4820 + $0x90] sm:$0xff] %v4833
                %v4835 = vld [vmem:[%s4819 + $0x38] sm:$0xff]
                %4836 = vst [vmem:[%s4820 + $0x98] sm:$0xff] %v4835
                %v4837 = vld [vmem:[%s4819 + $0x40] sm:$0xff]
                %4838 = vst [vmem:[%s4820 + $0xa0] sm:$0xff] %v4837
                %v4839 = vld [vmem:[%s4819 + $0x48] sm:$0xff]
                %4840 = vst [vmem:[%s4820 + $0xd8] sm:$0xff] %v4839
                %v4841 = vld [vmem:[%s4819 + $0x50] sm:$0xff]
                %4842 = vst [vmem:[%s4820 + $0xe0] sm:$0xff] %v4841
                %v4843 = vld [vmem:[%s4819 + $0x58] sm:$0xff]
                %4844 = vst [vmem:[%s4820 + $0xe8] sm:$0xff] %v4843
                %v4845 = vld [vmem:[%s4819 + $0x60] sm:$0xff]
                %4846 = vst [vmem:[%s4820 + $0x120] sm:$0xff] %v4845
                %v4847 = vld [vmem:[%s4819 + $0x68] sm:$0xff]
                %4848 = vst [vmem:[%s4820 + $0x128] sm:$0xff] %v4847
                %v4849 = vld [vmem:[%s4819 + $0x70] sm:$0xff]
                %4850 = vst [vmem:[%s4820 + $0x130] sm:$0xff] %v4849
                %v4851 = vld [vmem:[%s4819 + $0x78] sm:$0xff]
                %4852 = vst [vmem:[%s4820 + $0x168] sm:$0xff] %v4851
                %v4853 = vld [vmem:[%s4819 + $0x80] sm:$0xff]
                %4854 = vst [vmem:[%s4820 + $0x170] sm:$0xff] %v4853
                %v4855 = vld [vmem:[%s4819 + $0x88] sm:$0xff]
                %4856 = vst [vmem:[%s4820 + $0x178] sm:$0xff] %v4855
                %v4857 = vld [vmem:[%s4819 + $0x90] sm:$0xff]
                %4858 = vst [vmem:[%s4820 + $0x1b0] sm:$0xff] %v4857
                %v4859 = vld [vmem:[%s4819 + $0x98] sm:$0xff]
                %4860 = vst [vmem:[%s4820 + $0x1b8] sm:$0xff] %v4859
                %v4861 = vld [vmem:[%s4819 + $0xa0] sm:$0xff]
                %4862 = vst [vmem:[%s4820 + $0x1c0] sm:$0xff] %v4861
                %v4863 = vld [vmem:[%s4819 + $0xa8] sm:$0xff]
                %4864 = vst [vmem:[%s4820 + $0x1f8] sm:$0xff] %v4863
                %v4865 = vld [vmem:[%s4819 + $0xb0] sm:$0xff]
                %4866 = vst [vmem:[%s4820 + $0x200] sm:$0xff] %v4865
                %v4867 = vld [vmem:[%s4819 + $0xb8] sm:$0xff]
                %4868 = vst [vmem:[%s4820 + $0x208] sm:$0xff] %v4867
                %v4869 = vld [vmem:[%s4819 + $0xc0] sm:$0xff]
                %4870 = vst [vmem:[%s4820 + $0x240] sm:$0xff] %v4869
                %v4871 = vld [vmem:[%s4819 + $0xc8] sm:$0xff]
                %4872 = vst [vmem:[%s4820 + $0x248] sm:$0xff] %v4871
                %v4873 = vld [vmem:[%s4819 + $0xd0] sm:$0xff]
                %4874 = vst [vmem:[%s4820 + $0x250] sm:$0xff] %v4873
                %v4875 = vld [vmem:[%s4819 + $0xd8] sm:$0xff]
                %4876 = vst [vmem:[%s4820 + $0x288] sm:$0xff] %v4875
                %v4877 = vld [vmem:[%s4819 + $0xe0] sm:$0xff]
                %4878 = vst [vmem:[%s4820 + $0x290] sm:$0xff] %v4877
                %v4879 = vld [vmem:[%s4819 + $0xe8] sm:$0xff]
                %4880 = vst [vmem:[%s4820 + $0x298] sm:$0xff] %v4879
                %v4881 = vld [vmem:[%s4819 + $0xf0] sm:$0xff]
                %4882 = vst [vmem:[%s4820 + $0x2d0] sm:$0xff] %v4881
                %v4883 = vld [vmem:[%s4819 + $0xf8] sm:$0xff]
                %4884 = vst [vmem:[%s4820 + $0x2d8] sm:$0xff] %v4883
                %v4885 = vld [vmem:[%s4819 + $0x100] sm:$0xff]
                %4886 = vst [vmem:[%s4820 + $0x2e0] sm:$0xff] %v4885
                %v4887 = vld [vmem:[%s4819 + $0x108] sm:$0xff]
                %4888 = vst [vmem:[%s4820 + $0x318] sm:$0xff] %v4887
                %v4889 = vld [vmem:[%s4819 + $0x110] sm:$0xff]
                %4890 = vst [vmem:[%s4820 + $0x320] sm:$0xff] %v4889
                %v4891 = vld [vmem:[%s4819 + $0x118] sm:$0xff]
                %4892 = vst [vmem:[%s4820 + $0x328] sm:$0xff] %v4891
                %v4893 = vld [vmem:[%s4819 + $0x120] sm:$0xff]
                %4894 = vst [vmem:[%s4820 + $0x360] sm:$0xff] %v4893
                %v4895 = vld [vmem:[%s4819 + $0x128] sm:$0xff]
                %4896 = vst [vmem:[%s4820 + $0x368] sm:$0xff] %v4895
                %v4897 = vld [vmem:[%s4819 + $0x130] sm:$0xff]
                %4898 = vst [vmem:[%s4820 + $0x370] sm:$0xff] %v4897
                %v4899 = vld [vmem:[%s4819 + $0x138] sm:$0xff]
                %4900 = vst [vmem:[%s4820 + $0x3a8] sm:$0xff] %v4899
                %v4901 = vld [vmem:[%s4819 + $0x140] sm:$0xff]
                %4902 = vst [vmem:[%s4820 + $0x3b0] sm:$0xff] %v4901
                %v4903 = vld [vmem:[%s4819 + $0x148] sm:$0xff]
                %4904 = vst [vmem:[%s4820 + $0x3b8] sm:$0xff] %v4903
                %v4905 = vld [vmem:[%s4819 + $0x150] sm:$0xff]
                %4906 = vst [vmem:[%s4820 + $0x3f0] sm:$0xff] %v4905
                %v4907 = vld [vmem:[%s4819 + $0x158] sm:$0xff]
                %4908 = vst [vmem:[%s4820 + $0x3f8] sm:$0xff] %v4907
                %v4909 = vld [vmem:[%s4819 + $0x160] sm:$0xff]
                %4910 = vst [vmem:[%s4820 + $0x400] sm:$0xff] %v4909
                %v4911 = vld [vmem:[%s4819 + $0x168] sm:$0xff]
                %4912 = vst [vmem:[%s4820 + $0x438] sm:$0xff] %v4911
                %v4913 = vld [vmem:[%s4819 + $0x170] sm:$0xff]
                %4914 = vst [vmem:[%s4820 + $0x440] sm:$0xff] %v4913
                %v4915 = vld [vmem:[%s4819 + $0x178] sm:$0xff]
                %4916 = vst [vmem:[%s4820 + $0x448] sm:$0xff] %v4915
                %v4917 = vld [vmem:[%s4819 + $0x180] sm:$0xff]
                %4918 = vst [vmem:[%s4820 + $0x480] sm:$0xff] %v4917
                %v4919 = vld [vmem:[%s4819 + $0x188] sm:$0xff]
                %4920 = vst [vmem:[%s4820 + $0x488] sm:$0xff] %v4919
                %v4921 = vld [vmem:[%s4819 + $0x190] sm:$0xff]
                %4922 = vst [vmem:[%s4820 + $0x490] sm:$0xff] %v4921
                %v4923 = vld [vmem:[%s4819 + $0x198] sm:$0xff]
                %4924 = vst [vmem:[%s4820 + $0x4c8] sm:$0xff] %v4923
                %v4925 = vld [vmem:[%s4819 + $0x1a0] sm:$0xff]
                %4926 = vst [vmem:[%s4820 + $0x4d0] sm:$0xff] %v4925
                %v4927 = vld [vmem:[%s4819 + $0x1a8] sm:$0xff]
                %4928 = vst [vmem:[%s4820 + $0x4d8] sm:$0xff] %v4927
                %v4929 = vld [vmem:[%s4819 + $0x1b0] sm:$0xff]
                %4930 = vst [vmem:[%s4820 + $0x510] sm:$0xff] %v4929
                %v4931 = vld [vmem:[%s4819 + $0x1b8] sm:$0xff]
                %4932 = vst [vmem:[%s4820 + $0x518] sm:$0xff] %v4931
                %v4933 = vld [vmem:[%s4819 + $0x1c0] sm:$0xff]
                %4934 = vst [vmem:[%s4820 + $0x520] sm:$0xff] %v4933
                %v4935 = vld [vmem:[%s4819 + $0x1c8] sm:$0xff]
                %4936 = vst [vmem:[%s4820 + $0x558] sm:$0xff] %v4935
                %v4937 = vld [vmem:[%s4819 + $0x1d0] sm:$0xff]
                %4938 = vst [vmem:[%s4820 + $0x560] sm:$0xff] %v4937
                %v4939 = vld [vmem:[%s4819 + $0x1d8] sm:$0xff]
                %4940 = vst [vmem:[%s4820 + $0x568] sm:$0xff] %v4939
                %v4941 = vld [vmem:[%s4819 + $0x1e0] sm:$0xff]
                %4942 = vst [vmem:[%s4820 + $0x5a0] sm:$0xff] %v4941
                %v4943 = vld [vmem:[%s4819 + $0x1e8] sm:$0xff]
                %4944 = vst [vmem:[%s4820 + $0x5a8] sm:$0xff] %v4943
                %v4945 = vld [vmem:[%s4819 + $0x1f0] sm:$0xff]
                %4946 = vst [vmem:[%s4820 + $0x5b0] sm:$0xff] %v4945
                %v4947 = vld [vmem:[%s4819 + $0x1f8] sm:$0xff]
                %4948 = vst [vmem:[%s4820 + $0x5e8] sm:$0xff] %v4947
                %v4949 = vld [vmem:[%s4819 + $0x200] sm:$0xff]
                %4950 = vst [vmem:[%s4820 + $0x5f0] sm:$0xff] %v4949
                %v4951 = vld [vmem:[%s4819 + $0x208] sm:$0xff]
                %4952 = vst [vmem:[%s4820 + $0x5f8] sm:$0xff] %v4951
                %v4953 = vld [vmem:[%s4819 + $0x210] sm:$0xff]
                %4954 = vst [vmem:[%s4820 + $0x630] sm:$0xff] %v4953
                %v4955 = vld [vmem:[%s4819 + $0x218] sm:$0xff]
                %4956 = vst [vmem:[%s4820 + $0x638] sm:$0xff] %v4955
                %v4957 = vld [vmem:[%s4819 + $0x220] sm:$0xff]
                %4958 = vst [vmem:[%s4820 + $0x640] sm:$0xff] %v4957
                %v4959 = vld [vmem:[%s4819 + $0x228] sm:$0xff]
                %4960 = vst [vmem:[%s4820 + $0x678] sm:$0xff] %v4959
                %v4961 = vld [vmem:[%s4819 + $0x230] sm:$0xff]
                %4962 = vst [vmem:[%s4820 + $0x680] sm:$0xff] %v4961
                %v4963 = vld [vmem:[%s4819 + $0x238] sm:$0xff]
                %4964 = vst [vmem:[%s4820 + $0x688] sm:$0xff] %v4963
                %v4965 = vld [vmem:[%s4819 + $0x240] sm:$0xff]
                %4966 = vst [vmem:[%s4820 + $0x6c0] sm:$0xff] %v4965
                %v4967 = vld [vmem:[%s4819 + $0x248] sm:$0xff]
                %4968 = vst [vmem:[%s4820 + $0x6c8] sm:$0xff] %v4967
                %v4969 = vld [vmem:[%s4819 + $0x250] sm:$0xff]
                %4970 = vst [vmem:[%s4820 + $0x6d0] sm:$0xff] %v4969
                %v4971 = vld [vmem:[%s4819 + $0x258] sm:$0xff]
                %4972 = vst [vmem:[%s4820 + $0x708] sm:$0xff] %v4971
                %v4973 = vld [vmem:[%s4819 + $0x260] sm:$0xff]
                %4974 = vst [vmem:[%s4820 + $0x710] sm:$0xff] %v4973
                %v4975 = vld [vmem:[%s4819 + $0x268] sm:$0xff]
                %4976 = vst [vmem:[%s4820 + $0x718] sm:$0xff] %v4975
                %v4977 = vld [vmem:[%s4819 + $0x270] sm:$0xff]
                %4978 = vst [vmem:[%s4820 + $0x750] sm:$0xff] %v4977
                %v4979 = vld [vmem:[%s4819 + $0x278] sm:$0xff]
                %4980 = vst [vmem:[%s4820 + $0x758] sm:$0xff] %v4979
                %v4981 = vld [vmem:[%s4819 + $0x280] sm:$0xff]
                %4982 = vst [vmem:[%s4820 + $0x760] sm:$0xff] %v4981
                %v4983 = vld [vmem:[%s4819 + $0x288] sm:$0xff]
                %4984 = vst [vmem:[%s4820 + $0x798] sm:$0xff] %v4983
                %v4985 = vld [vmem:[%s4819 + $0x290] sm:$0xff]
                %4986 = vst [vmem:[%s4820 + $0x7a0] sm:$0xff] %v4985
                %v4987 = vld [vmem:[%s4819 + $0x298] sm:$0xff]
                %4988 = vst [vmem:[%s4820 + $0x7a8] sm:$0xff] %v4987
              $region69: #{tpu_custom_call.1} parent=63 // loop_footer
                %s4818 = sadd.s32 1, %s4814
              $region70: #{tpu_custom_call.1} parent=63 // loop_footer_branch
                %4813 = sbr.rel target = $region66
              $region71: #{tpu_custom_call.1} parent=63 // loop_exit
                _
            $region64: #{tpu_custom_call.1} parent=59 // pred_fallthru
              _
            // Predicated region
            $region72: #{tpu_custom_call.1} parent=59 // pred_check
              _
            $region73: #{tpu_custom_call.1} parent=59 // pred_check_branch
              %4990 = sbr.rel target = $region75
            $region74: #{tpu_custom_call.1} parent=59 // pred_region
              _
            $region75: #{tpu_custom_call.1} parent=59 // pred_fallthru
              _
          $region60: #{tpu_custom_call.1} parent=55 // pred_fallthru
            _
          %4991 = vnop
        $region56: #{tpu_custom_call.1} parent=35 // pred_fallthru
          _
      $region36: #{tpu_custom_call.1} parent=5 // pred_fallthru
        _
      %p4992 = scmp.le.s32.totalorder 2, %s19
      // Predicated region
      $region76: #{tpu_custom_call.1} parent=5 // pred_check
        %p4993 = pneg %p4992
      $region77: #{tpu_custom_call.1} parent=5 // pred_check_branch
        %4995 = sbr.rel (%p4993) target = $region79
      $region78: #{tpu_custom_call.1} parent=5 // pred_region
        %s4996 = ssub.s32 %s19, 2
        // Predicated region
        $region80: #{tpu_custom_call.1} parent=78 // pred_check
          %p4997 = pneg %p152
        $region81: #{tpu_custom_call.1} parent=78 // pred_check_branch
          %4999 = sbr.rel (%p4997) target = $region83
        $region82: #{tpu_custom_call.1} parent=78 // pred_region
          %s5000 = sand.u32 %s137, 1
          %s5001 = sand.u32 %s137, 1
          %s5002 = smul.addr %s5001, 672
          %s5003 = scalar_lea.vmem [#allocation9], %s5002
        $region83: #{tpu_custom_call.1} parent=78 // pred_fallthru
          _
      $region79: #{tpu_custom_call.1} parent=5 // pred_fallthru
        _
    $region6: #{tpu_custom_call.1} parent=1 // loop_footer
      %s23 = sadd.s32 1, %s19
    $region7: #{tpu_custom_call.1} parent=1 // loop_footer_branch
      %18 = sbr.rel target = $region3
    $region8: #{tpu_custom_call.1} parent=1 // loop_exit
      _
    %5004 = vsyncpa [#allocation3], 1
    %s5005 = scalar_lea.sflag [#allocation3], 1
    %5006 = vsyncpa %s5005, 1
    %5007 = vsyncpa [#allocation5], 1
    %s5008 = scalar_lea.sflag [#allocation5], 1
    %5009 = vsyncpa %s5008, 1
    %5010 = vsyncpa [#allocation8], 1
    %s5011 = scalar_lea.sflag [#allocation8], 1
    %5012 = vsyncpa %s5011, 1

</llo_original>
